<compile_context>
chip_gen: v5e
topology: v5e:2x2
jax: 0.10.0
libtpu: 0.0.40
codegen_flags: <defaults>
</compile_context>

<pallas_src>
import functools

import jax
import jax.numpy as jnp
from jax.experimental import pallas as pl
from jax.experimental.pallas import tpu as pltpu

NUM_HEADS = 8
LN_EPS = 1e-5


# ---------------------------------------------------------------------------
# Fused kernel: QKV projection (once per batch) + multi-head attention +
# output projection + residual + LayerNorm(over NCHW "w"), channel-major.
# Grid: (batch, query_tile); q axis is sequential ("arbitrary").
# ---------------------------------------------------------------------------
def _attn_ln_kernel(x_ref, wqkv_ref, bq_ref, wo_ref, aseg_ref, g_ref, bln_ref,
                    o_ref, qkv_ref, acc_ref, *, num_heads, eps):
    C = o_ref.shape[1]
    TQ = o_ref.shape[2]
    D = C // num_heads

    q_start = pl.multiple_of(pl.program_id(1) * TQ, TQ)

    # ---- fused QKV projection: once per batch element (first query tile) ----
    # Legal because the q grid axis is "arbitrary" (sequential on one core),
    # so the bf16 qkv scratch persists across this batch element's q steps.
    @pl.when(pl.program_id(1) == 0)
    def _():
        x_bf = x_ref[0].astype(jnp.bfloat16)                        # (C, S)
        qkv = jnp.dot(wqkv_ref[...], x_bf,
                      preferred_element_type=jnp.float32)           # (3C, S) f32
        # Only the (pre-scaled) query bias survives prep; k/v/out biases were
        # dropped there (exact -- see prepare_kernel_params).  Both stores are
        # 16-row aligned for the packed bf16 layout.
        qkv_ref[pl.ds(0, C), :] = (qkv[:C] + bq_ref[...]).astype(jnp.bfloat16)
        qkv_ref[pl.ds(C, 2 * C), :] = qkv[C:].astype(jnp.bfloat16)

    # ---- per-head attention for this query tile ------------------------------
    # Heads are processed in pairs: every bf16 scratch access is a 16-row
    # (one packed tile) aligned slice; the 8-row head split happens on f32
    # register values (packed-subtile ref slicing avoided on purpose).
    for hp in range(num_heads // 2):
        r = 2 * hp * D
        q2 = qkv_ref[pl.ds(r, 2 * D), pl.ds(q_start, TQ)].astype(jnp.float32)
        k2 = qkv_ref[pl.ds(C + r, 2 * D), :].astype(jnp.float32)
        v2 = qkv_ref[pl.ds(2 * C + r, 2 * D), :].astype(jnp.float32)
        pair_out = []
        for j in range(2):
            qh = q2[j * D:(j + 1) * D, :].astype(jnp.bfloat16)      # (D, TQ)
            kh = k2[j * D:(j + 1) * D, :].astype(jnp.bfloat16)      # (D, S)
            vh = v2[j * D:(j + 1) * D, :].astype(jnp.bfloat16)      # (D, S)
            # scores in (key, query) layout so v @ p is a native MXU matmul
            s_kq = jnp.einsum('dk,dq->kq', kh, qh,
                              preferred_element_type=jnp.float32)   # (S, TQ)
            m = jnp.max(s_kq, axis=0, keepdims=True)                # (1, TQ)
            e = jnp.exp(s_kq - m)
            l = jnp.sum(e, axis=0, keepdims=True)                   # (1, TQ)
            p = (e * pl.reciprocal(l, approx=True)).astype(jnp.bfloat16)
            pair_out.append(jnp.dot(vh, p,
                                    preferred_element_type=jnp.float32))
        # aligned 16-row bf16 store of both heads' outputs
        acc_ref[pl.ds(r, 2 * D), :] = (
            jnp.concatenate(pair_out, axis=0).astype(jnp.bfloat16))

    # ---- single output projection over all heads (bf16 acc feeds MXU) --------
    attn = jnp.dot(wo_ref[...], acc_ref[...],
                   preferred_element_type=jnp.float32)               # (C, TQ)

    # ---- fused residual + LayerNorm over the NCHW "w" axis -------------------
    # lane index s = h*W + w; TQ is a multiple of W so segments never straddle
    # the tile.  Segmented mean/var via the host-precomputed averaging matrix
    # (MXU is idle here; no in-kernel iota/reshape/relayout).
    y = x_ref[0, :, pl.ds(q_start, TQ)] + attn                       # (C, TQ) f32
    a = aseg_ref[...]               # (TQ, TQ); entries 0 or 1/W, exact in bf16
    # f32-safe statistics: split the f32 operand into an exactly-bf16 part
    # plus residual so default-precision MXU dots lose no accuracy.
    y_hi = y.astype(jnp.bfloat16).astype(jnp.float32)
    y_lo = y - y_hi
    mean = (jnp.dot(y_hi, a, preferred_element_type=jnp.float32)
            + jnp.dot(y_lo, a, preferred_element_type=jnp.float32))
    dev = y - mean
    sq = dev * dev
    sq_hi = sq.astype(jnp.bfloat16).astype(jnp.float32)
    sq_lo = sq - sq_hi
    var = (jnp.dot(sq_hi, a, preferred_element_type=jnp.float32)
           + jnp.dot(sq_lo, a, preferred_element_type=jnp.float32))
    o_ref[0] = dev * jax.lax.rsqrt(var + eps) * g_ref[...] + bln_ref[...]


def attention_block_pallas(x_seq, wqkv, bq, wo, gamma, beta, *, w_axis,
                           num_heads=NUM_HEADS):
    """x_seq: (B, C, S) f32, S = H*W.  Returns (B, C, S) f32."""
    B, C, S = x_seq.shape
    # query tile: lane-dense (>=128) and always a multiple of W so LayerNorm
    # segments never cross a tile.
    if S % 128 == 0 and 128 % w_axis == 0:
        tq = 128   # TODO(synk): sweep tq=256 on v6e/v7x once flash-style key
                   # tiling bounds the (S, TQ) score-tile vreg pressure.
    elif S % 256 == 0 and 256 % w_axis == 0:
        tq = 256
    else:
        tq = S     # TODO(synk): pad S to a 128-multiple instead for odd shapes.
    assert S % tq == 0 and tq % w_axis == 0
    nq = S // tq

    # Host-side constants (review item: never rebuilt in-kernel).
    gamma_t = jnp.tile(gamma, S // w_axis).reshape(1, S)
    beta_t = jnp.tile(beta, S // w_axis).reshape(1, S)
    seg = jnp.arange(tq, dtype=jnp.int32) // w_axis
    a_seg = (seg[:, None] == seg[None, :]).astype(jnp.float32) / w_axis

    kernel = functools.partial(_attn_ln_kernel, num_heads=num_heads, eps=LN_EPS)
    return pl.pallas_call(
        kernel,
        out_shape=jax.ShapeDtypeStruct((B, C, S), jnp.float32),
        # Grid order matters: b outer / q inner.  The full-sequence x block
        # (index (b,0,0)) is fetched once per batch element only because q is
        # the innermost axis, and the q==0 QKV recompute then always sees the
        # current batch's x.  Do not reorder to (nq, B).
        grid=(B, nq),
        in_specs=[
            pl.BlockSpec((1, C, S), lambda b, q: (b, 0, 0)),     # x (full seq)
            pl.BlockSpec((3 * C, C), lambda b, q: (0, 0)),       # fused qkv W (bf16)
            pl.BlockSpec((C, 1), lambda b, q: (0, 0)),           # scaled q bias
            pl.BlockSpec((C, C), lambda b, q: (0, 0)),           # out proj W (bf16)
            pl.BlockSpec((tq, tq), lambda b, q: (0, 0)),         # LN segment matrix
            pl.BlockSpec((1, tq), lambda b, q: (0, q)),          # LN gamma (tiled)
            pl.BlockSpec((1, tq), lambda b, q: (0, q)),          # LN beta  (tiled)
        ],
        out_specs=pl.BlockSpec((1, C, tq), lambda b, q: (b, 0, q)),
        scratch_shapes=[
            pltpu.VMEM((3 * C, S), jnp.bfloat16),   # qkv, persists across q steps
            pltpu.VMEM((C, tq), jnp.bfloat16),      # per-head output accumulator
        ],
        compiler_params=pltpu.CompilerParams(
            # q must be "arbitrary": the qkv scratch written at q==0 is reused
            # by later q steps of the same batch element (with "parallel" a
            # v7x core could start at q>0 and read uninitialized scratch).
            dimension_semantics=("parallel", "arbitrary"),
            vmem_limit_bytes=32 * 1024 * 1024,
        ),
    )(x_seq, wqkv, bq, wo, a_seg, gamma_t, beta_t)


# ---------------------------------------------------------------------------
# Parameters: raw PyTorch-layout init + kernel-layout prep.
# ---------------------------------------------------------------------------
def init_params(key, c):
    k0, k1, k2, k3 = jax.random.split(key, 4)
    s = 0.02
    return {
        "in_proj_w": jax.random.normal(k0, (3 * c, c), jnp.float32) * s,
        "in_proj_b": jax.random.normal(k1, (3 * c,), jnp.float32) * s,
        "out_w": jax.random.normal(k2, (c, c), jnp.float32) * s,
        "out_b": jax.random.normal(k3, (c,), jnp.float32) * s,
        "gamma": jnp.ones((c,), jnp.float32),    # LayerNorm default init
        "beta": jnp.zeros((c,), jnp.float32),
    }


def prepare_kernel_params(raw, num_heads=NUM_HEADS):
    c = raw["out_w"].shape[0]
    d = c // num_heads
    scale = 1.0 / (d ** 0.5)
    # channel-major compute uses the PyTorch (out, in) weights directly: y = W @ x
    # fold 1/sqrt(D) query scale into the q rows (exact up to rounding).
    w_qkv = raw["in_proj_w"].at[:c].multiply(scale)
    b_q = raw["in_proj_b"][:c] * scale
    # Dropped biases (all exact):
    #  * key bias: adds a per-query constant to the logits -> cancels in softmax.
    #  * value bias / output-projection bias: per-channel constants uniform over
    #    tokens -> cancel in the LayerNorm mean subtraction over the w axis.
    return {
        "w_qkv": w_qkv.astype(jnp.bfloat16),                     # (3C, C) bf16
        "b_q": b_q.reshape(c, 1).astype(jnp.float32),            # (C, 1) f32
        "w_o": raw["out_w"].astype(jnp.bfloat16),                # (C, C) bf16
        "gamma": raw["gamma"],
        "beta": raw["beta"],
    }


def attention_block_forward(x, kparams):
    b, c, h, w = x.shape
    assert c % NUM_HEADS == 0
    assert w == c, "reference LayerNorm(in_channels) on NCHW requires w == in_channels"
    x_seq = x.reshape(b, c, h * w)                  # contiguous flatten(2), free
    out = attention_block_pallas(x_seq, kparams["w_qkv"], kparams["b_q"],
                                 kparams["w_o"], kparams["gamma"],
                                 kparams["beta"], w_axis=w)
    return out.reshape(b, c, h, w)


# ---------------------------------------------------------------------------
# Pure-JAX f32 reference (PyTorch semantics, all biases) for correctness.
# ---------------------------------------------------------------------------
def reference_forward(x, raw, num_heads=NUM_HEADS):
    b, c, h, w = x.shape
    S, D = h * w, c // num_heads
    P = jax.lax.Precision.HIGHEST
    xf = jnp.transpose(x.reshape(b, c, S), (0, 2, 1))             # (B, S, C)
    wq, wk, wv = (raw["in_proj_w"][i * c:(i + 1) * c] for i in range(3))
    bq, bk, bv = (raw["in_proj_b"][i * c:(i + 1) * c] for i in range(3))
    q = jnp.einsum('bsc,dc->bsd', xf, wq, precision=P) + bq
    k = jnp.einsum('bsc,dc->bsd', xf, wk, precision=P) + bk
    v = jnp.einsum('bsc,dc->bsd', xf, wv, precision=P) + bv
    qh = q.reshape(b, S, num_heads, D)
    kh = k.reshape(b, S, num_heads, D)
    vh = v.reshape(b, S, num_heads, D)
    s = jnp.einsum('bqhd,bkhd->bhqk', qh, kh, precision=P) / jnp.sqrt(D)
    p = jax.nn.softmax(s, axis=-1)
    o = jnp.einsum('bhqk,bkhd->bqhd', p, vh, precision=P).reshape(b, S, c)
    attn = jnp.einsum('bsc,dc->bsd', o, raw["out_w"], precision=P) + raw["out_b"]
    attn_nchw = jnp.transpose(attn, (0, 2, 1)).reshape(b, c, h, w)
    y = x + attn_nchw
    mean = y.mean(-1, keepdims=True)
    var = ((y - mean) ** 2).mean(-1, keepdims=True)
    return (y - mean) / jnp.sqrt(var + LN_EPS) * raw["gamma"] + raw["beta"]


if __name__ == "__main__":
    key = jax.random.PRNGKey(0)
    kx, kp = jax.random.split(key)
    b, c, h, w = 2, 64, 4, 64            # w == c == in_channels (see note above)
    x = jax.random.normal(kx, (b, c, h, w), jnp.float32)
    raw = init_params(kp, c)
    kparams = prepare_kernel_params(raw)

    out = attention_block_forward(x, kparams)
    out = jax.block_until_ready(out)
    assert out.shape == (b, c, h, w)

    ref = reference_forward(x, raw)
    err = float(jnp.max(jnp.abs(out - ref)))
    if not (err == err) or err > 5e-3:   # NaN check + tolerance
        raise AssertionError(f"kernel/reference mismatch, max abs err = {err}")
    print("KERNEL_OK")
</pallas_src>

<mosaic_0001>
module attributes {stable_mosaic.version = 11 : i64} {
  func.func @_attn_ln_kernel(%arg0: i32, %arg1: i32, %arg2: memref<1x64x256xf32, #tpu.memory_space<vmem>>, %arg3: memref<192x64xbf16, #tpu.memory_space<vmem>>, %arg4: memref<64x1xf32, #tpu.memory_space<vmem>>, %arg5: memref<64x64xbf16, #tpu.memory_space<vmem>>, %arg6: memref<128x128xf32, #tpu.memory_space<vmem>>, %arg7: memref<1x128xf32, #tpu.memory_space<vmem>>, %arg8: memref<1x128xf32, #tpu.memory_space<vmem>>, %arg9: memref<1x64x128xf32, #tpu.memory_space<vmem>>, %arg10: memref<192x256xbf16, #tpu.memory_space<vmem>>, %arg11: memref<64x128xbf16, #tpu.memory_space<vmem>>) attributes {dimension_semantics = [#tpu.dimension_semantics<parallel>, #tpu.dimension_semantics<arbitrary>], iteration_bounds = array<i64: 2, 2>, scalar_prefetch = 0 : i64, scratch_operands = 2 : i64, tpu.core_type = #tpu.core_type<tc>, window_params = [{transform_indices = @transform_0, window_bounds = array<i64: 1, 64, 256>}, {pipeline_mode = #tpu.pipeline_mode<synchronous>, transform_indices = @transform_1, window_bounds = array<i64: 192, 64>}, {pipeline_mode = #tpu.pipeline_mode<synchronous>, transform_indices = @transform_2, window_bounds = array<i64: 64, 1>}, {pipeline_mode = #tpu.pipeline_mode<synchronous>, transform_indices = @transform_3, window_bounds = array<i64: 64, 64>}, {pipeline_mode = #tpu.pipeline_mode<synchronous>, transform_indices = @transform_4, window_bounds = array<i64: 128, 128>}, {transform_indices = @transform_5, window_bounds = array<i64: 1, 128>}, {transform_indices = @transform_6, window_bounds = array<i64: 1, 128>}, {transform_indices = @transform_7, window_bounds = array<i64: 1, 64, 128>}]} {
    %c128_i32 = arith.constant 128 : i32
    %0 = arith.muli %arg1, %c128_i32 : i32
    %1 = tpu.assume_multiple %0, 128 : i32
    %c0_i32 = arith.constant 0 : i32
    %2 = arith.cmpi eq, %arg1, %c0_i32 : i32
    %3 = arith.extui %2 : i1 to i32
    %c0_i32_0 = arith.constant 0 : i32
    %4 = arith.cmpi ne, %3, %c0_i32_0 : i32
    scf.if %4 {
      %c0_69 = arith.constant 0 : index
      %c0_70 = arith.constant 0 : index
      %c0_71 = arith.constant 0 : index
      %232 = vector.load %arg2[%c0_69, %c0_70, %c0_71] : memref<1x64x256xf32, #tpu.memory_space<vmem>>, vector<1x64x256xf32>
      %233 = vector.shape_cast %232 : vector<1x64x256xf32> to vector<64x256xf32>
      %234 = arith.truncf %233 : vector<64x256xf32> to vector<64x256xbf16>
      %c0_72 = arith.constant 0 : index
      %c0_73 = arith.constant 0 : index
      %235 = vector.load %arg3[%c0_72, %c0_73] : memref<192x64xbf16, #tpu.memory_space<vmem>>, vector<192x64xbf16>
      %cst_74 = arith.constant dense<0.000000e+00> : vector<192x256xf32>
      %236 = tpu.matmul %235, %234, %cst_74 {dimension_numbers = #tpu.dot_dimension_numbers<[1], [0], [0], [1], [0, 0, 1, 1], [], []>} : vector<192x64xbf16>, vector<64x256xbf16>, vector<192x256xf32> -> vector<192x256xf32>
      %237 = vector.extract_strided_slice %236 {offsets = [0, 0], sizes = [64, 256], strides = [1, 1]} : vector<192x256xf32> to vector<64x256xf32>
      %c0_75 = arith.constant 0 : index
      %c0_76 = arith.constant 0 : index
      %238 = vector.load %arg4[%c0_75, %c0_76] : memref<64x1xf32, #tpu.memory_space<vmem>>, vector<64x1xf32>
      %239 = vector.broadcast %238 : vector<64x1xf32> to vector<64x256xf32>
      %240 = arith.addf %237, %239 : vector<64x256xf32>
      %241 = arith.truncf %240 : vector<64x256xf32> to vector<64x256xbf16>
      %c0_77 = arith.constant 0 : index
      %c0_78 = arith.constant 0 : index
      %242 = vector.load %arg10[%c0_77, %c0_78] : memref<192x256xbf16, #tpu.memory_space<vmem>>, vector<64x256xbf16>
      tpu.vector_store %arg10[%c0_77, %c0_78], %241 {strides = array<i32>} : memref<192x256xbf16, #tpu.memory_space<vmem>>, vector<64x256xbf16>,
      %243 = vector.extract_strided_slice %236 {offsets = [64, 0], sizes = [128, 256], strides = [1, 1]} : vector<192x256xf32> to vector<128x256xf32>
      %244 = arith.truncf %243 : vector<128x256xf32> to vector<128x256xbf16>
      %c64_79 = arith.constant 64 : index
      %c0_80 = arith.constant 0 : index
      %245 = vector.load %arg10[%c64_79, %c0_80] : memref<192x256xbf16, #tpu.memory_space<vmem>>, vector<128x256xbf16>
      tpu.vector_store %arg10[%c64_79, %c0_80], %244 {strides = array<i32>} : memref<192x256xbf16, #tpu.memory_space<vmem>>, vector<128x256xbf16>,
    } else {
    }
    %c0 = arith.constant 0 : index
    %5 = arith.index_cast %1 : i32 to index
    %6 = vector.load %arg10[%c0, %5] : memref<192x256xbf16, #tpu.memory_space<vmem>>, vector<16x128xbf16>
    %7 = arith.extf %6 : vector<16x128xbf16> to vector<16x128xf32>
    %c64 = arith.constant 64 : index
    %c0_1 = arith.constant 0 : index
    %8 = vector.load %arg10[%c64, %c0_1] : memref<192x256xbf16, #tpu.memory_space<vmem>>, vector<16x256xbf16>
    %9 = arith.extf %8 : vector<16x256xbf16> to vector<16x256xf32>
    %c128 = arith.constant 128 : index
    %c0_2 = arith.constant 0 : index
    %10 = vector.load %arg10[%c128, %c0_2] : memref<192x256xbf16, #tpu.memory_space<vmem>>, vector<16x256xbf16>
    %11 = arith.extf %10 : vector<16x256xbf16> to vector<16x256xf32>
    %12 = vector.extract_strided_slice %7 {offsets = [0, 0], sizes = [8, 128], strides = [1, 1]} : vector<16x128xf32> to vector<8x128xf32>
    %13 = arith.truncf %12 : vector<8x128xf32> to vector<8x128xbf16>
    %14 = vector.extract_strided_slice %9 {offsets = [0, 0], sizes = [8, 256], strides = [1, 1]} : vector<16x256xf32> to vector<8x256xf32>
    %15 = arith.truncf %14 : vector<8x256xf32> to vector<8x256xbf16>
    %16 = vector.extract_strided_slice %11 {offsets = [0, 0], sizes = [8, 256], strides = [1, 1]} : vector<16x256xf32> to vector<8x256xf32>
    %17 = arith.truncf %16 : vector<8x256xf32> to vector<8x256xbf16>
    "tpu.trace_start"() <{level = 10 : i32, message = "dk,dq->kq"}> : () -> ()
    %cst = arith.constant dense<0.000000e+00> : vector<256x128xf32>
    %18 = tpu.matmul %15, %13, %cst {dimension_numbers = #tpu.dot_dimension_numbers<[0], [0], [1], [1], [0, 1, 1, 1], [], []>} : vector<8x256xbf16>, vector<8x128xbf16>, vector<256x128xf32> -> vector<256x128xf32>
    "tpu.trace_stop"() : () -> ()
    %cst_3 = arith.constant dense<0xFF800000> : vector<128xf32>
    %19 = vector.multi_reduction <maximumf>, %18, %cst_3 [0] : vector<256x128xf32> to vector<128xf32>
    %20 = vector.shape_cast %19 : vector<128xf32> to vector<1x128xf32>
    %21 = vector.broadcast %20 : vector<1x128xf32> to vector<256x128xf32>
    %22 = arith.subf %18, %21 : vector<256x128xf32>
    %23 = math.exp %22 : vector<256x128xf32>
    %cst_4 = arith.constant dense<0.000000e+00> : vector<128xf32>
    %24 = vector.multi_reduction <add>, %23, %cst_4 [0] : vector<256x128xf32> to vector<128xf32>
    %25 = vector.shape_cast %24 : vector<128xf32> to vector<1x128xf32>
    %26 = tpu.reciprocal %25 {approx = true} : vector<1x128xf32> -> vector<1x128xf32>
    %27 = vector.broadcast %26 : vector<1x128xf32> to vector<256x128xf32>
    %28 = arith.mulf %23, %27 : vector<256x128xf32>
    %29 = arith.truncf %28 : vector<256x128xf32> to vector<256x128xbf16>
    %cst_5 = arith.constant dense<0.000000e+00> : vector<8x128xf32>
    %30 = tpu.matmul %17, %29, %cst_5 {dimension_numbers = #tpu.dot_dimension_numbers<[1], [0], [0], [1], [0, 0, 1, 1], [], []>} : vector<8x256xbf16>, vector<256x128xbf16>, vector<8x128xf32> -> vector<8x128xf32>
    %31 = vector.extract_strided_slice %7 {offsets = [8, 0], sizes = [8, 128], strides = [1, 1]} : vector<16x128xf32> to vector<8x128xf32>
    %32 = arith.truncf %31 : vector<8x128xf32> to vector<8x128xbf16>
    %33 = vector.extract_strided_slice %9 {offsets = [8, 0], sizes = [8, 256], strides = [1, 1]} : vector<16x256xf32> to vector<8x256xf32>
    %34 = arith.truncf %33 : vector<8x256xf32> to vector<8x256xbf16>
    %35 = vector.extract_strided_slice %11 {offsets = [8, 0], sizes = [8, 256], strides = [1, 1]} : vector<16x256xf32> to vector<8x256xf32>
    %36 = arith.truncf %35 : vector<8x256xf32> to vector<8x256xbf16>
    "tpu.trace_start"() <{level = 10 : i32, message = "dk,dq->kq"}> : () -> ()
    %cst_6 = arith.constant dense<0.000000e+00> : vector<256x128xf32>
    %37 = tpu.matmul %34, %32, %cst_6 {dimension_numbers = #tpu.dot_dimension_numbers<[0], [0], [1], [1], [0, 1, 1, 1], [], []>} : vector<8x256xbf16>, vector<8x128xbf16>, vector<256x128xf32> -> vector<256x128xf32>
    "tpu.trace_stop"() : () -> ()
    %cst_7 = arith.constant dense<0xFF800000> : vector<128xf32>
    %38 = vector.multi_reduction <maximumf>, %37, %cst_7 [0] : vector<256x128xf32> to vector<128xf32>
    %39 = vector.shape_cast %38 : vector<128xf32> to vector<1x128xf32>
    %40 = vector.broadcast %39 : vector<1x128xf32> to vector<256x128xf32>
    %41 = arith.subf %37, %40 : vector<256x128xf32>
    %42 = math.exp %41 : vector<256x128xf32>
    %cst_8 = arith.constant dense<0.000000e+00> : vector<128xf32>
    %43 = vector.multi_reduction <add>, %42, %cst_8 [0] : vector<256x128xf32> to vector<128xf32>
    %44 = vector.shape_cast %43 : vector<128xf32> to vector<1x128xf32>
    %45 = tpu.reciprocal %44 {approx = true} : vector<1x128xf32> -> vector<1x128xf32>
    %46 = vector.broadcast %45 : vector<1x128xf32> to vector<256x128xf32>
    %47 = arith.mulf %42, %46 : vector<256x128xf32>
    %48 = arith.truncf %47 : vector<256x128xf32> to vector<256x128xbf16>
    %cst_9 = arith.constant dense<0.000000e+00> : vector<8x128xf32>
    %49 = tpu.matmul %36, %48, %cst_9 {dimension_numbers = #tpu.dot_dimension_numbers<[1], [0], [0], [1], [0, 0, 1, 1], [], []>} : vector<8x256xbf16>, vector<256x128xbf16>, vector<8x128xf32> -> vector<8x128xf32>
    %50 = tpu.concatenate %30, %49 in 0 : vector<8x128xf32>, vector<8x128xf32> -> vector<16x128xf32>
    %51 = arith.truncf %50 : vector<16x128xf32> to vector<16x128xbf16>
    %c0_10 = arith.constant 0 : index
    %c0_11 = arith.constant 0 : index
    %52 = vector.load %arg11[%c0_10, %c0_11] : memref<64x128xbf16, #tpu.memory_space<vmem>>, vector<16x128xbf16>
    tpu.vector_store %arg11[%c0_10, %c0_11], %51 {strides = array<i32>} : memref<64x128xbf16, #tpu.memory_space<vmem>>, vector<16x128xbf16>,
    %c16 = arith.constant 16 : index
    %53 = arith.index_cast %1 : i32 to index
    %54 = vector.load %arg10[%c16, %53] : memref<192x256xbf16, #tpu.memory_space<vmem>>, vector<16x128xbf16>
    %55 = arith.extf %54 : vector<16x128xbf16> to vector<16x128xf32>
    %c80 = arith.constant 80 : index
    %c0_12 = arith.constant 0 : index
    %56 = vector.load %arg10[%c80, %c0_12] : memref<192x256xbf16, #tpu.memory_space<vmem>>, vector<16x256xbf16>
    %57 = arith.extf %56 : vector<16x256xbf16> to vector<16x256xf32>
    %c144 = arith.constant 144 : index
    %c0_13 = arith.constant 0 : index
    %58 = vector.load %arg10[%c144, %c0_13] : memref<192x256xbf16, #tpu.memory_space<vmem>>, vector<16x256xbf16>
    %59 = arith.extf %58 : vector<16x256xbf16> to vector<16x256xf32>
    %60 = vector.extract_strided_slice %55 {offsets = [0, 0], sizes = [8, 128], strides = [1, 1]} : vector<16x128xf32> to vector<8x128xf32>
    %61 = arith.truncf %60 : vector<8x128xf32> to vector<8x128xbf16>
    %62 = vector.extract_strided_slice %57 {offsets = [0, 0], sizes = [8, 256], strides = [1, 1]} : vector<16x256xf32> to vector<8x256xf32>
    %63 = arith.truncf %62 : vector<8x256xf32> to vector<8x256xbf16>
    %64 = vector.extract_strided_slice %59 {offsets = [0, 0], sizes = [8, 256], strides = [1, 1]} : vector<16x256xf32> to vector<8x256xf32>
    %65 = arith.truncf %64 : vector<8x256xf32> to vector<8x256xbf16>
    "tpu.trace_start"() <{level = 10 : i32, message = "dk,dq->kq"}> : () -> ()
    %cst_14 = arith.constant dense<0.000000e+00> : vector<256x128xf32>
    %66 = tpu.matmul %63, %61, %cst_14 {dimension_numbers = #tpu.dot_dimension_numbers<[0], [0], [1], [1], [0, 1, 1, 1], [], []>} : vector<8x256xbf16>, vector<8x128xbf16>, vector<256x128xf32> -> vector<256x128xf32>
    "tpu.trace_stop"() : () -> ()
    %cst_15 = arith.constant dense<0xFF800000> : vector<128xf32>
    %67 = vector.multi_reduction <maximumf>, %66, %cst_15 [0] : vector<256x128xf32> to vector<128xf32>
    %68 = vector.shape_cast %67 : vector<128xf32> to vector<1x128xf32>
    %69 = vector.broadcast %68 : vector<1x128xf32> to vector<256x128xf32>
    %70 = arith.subf %66, %69 : vector<256x128xf32>
    %71 = math.exp %70 : vector<256x128xf32>
    %cst_16 = arith.constant dense<0.000000e+00> : vector<128xf32>
    %72 = vector.multi_reduction <add>, %71, %cst_16 [0] : vector<256x128xf32> to vector<128xf32>
    %73 = vector.shape_cast %72 : vector<128xf32> to vector<1x128xf32>
    %74 = tpu.reciprocal %73 {approx = true} : vector<1x128xf32> -> vector<1x128xf32>
    %75 = vector.broadcast %74 : vector<1x128xf32> to vector<256x128xf32>
    %76 = arith.mulf %71, %75 : vector<256x128xf32>
    %77 = arith.truncf %76 : vector<256x128xf32> to vector<256x128xbf16>
    %cst_17 = arith.constant dense<0.000000e+00> : vector<8x128xf32>
    %78 = tpu.matmul %65, %77, %cst_17 {dimension_numbers = #tpu.dot_dimension_numbers<[1], [0], [0], [1], [0, 0, 1, 1], [], []>} : vector<8x256xbf16>, vector<256x128xbf16>, vector<8x128xf32> -> vector<8x128xf32>
    %79 = vector.extract_strided_slice %55 {offsets = [8, 0], sizes = [8, 128], strides = [1, 1]} : vector<16x128xf32> to vector<8x128xf32>
    %80 = arith.truncf %79 : vector<8x128xf32> to vector<8x128xbf16>
    %81 = vector.extract_strided_slice %57 {offsets = [8, 0], sizes = [8, 256], strides = [1, 1]} : vector<16x256xf32> to vector<8x256xf32>
    %82 = arith.truncf %81 : vector<8x256xf32> to vector<8x256xbf16>
    %83 = vector.extract_strided_slice %59 {offsets = [8, 0], sizes = [8, 256], strides = [1, 1]} : vector<16x256xf32> to vector<8x256xf32>
    %84 = arith.truncf %83 : vector<8x256xf32> to vector<8x256xbf16>
    "tpu.trace_start"() <{level = 10 : i32, message = "dk,dq->kq"}> : () -> ()
    %cst_18 = arith.constant dense<0.000000e+00> : vector<256x128xf32>
    %85 = tpu.matmul %82, %80, %cst_18 {dimension_numbers = #tpu.dot_dimension_numbers<[0], [0], [1], [1], [0, 1, 1, 1], [], []>} : vector<8x256xbf16>, vector<8x128xbf16>, vector<256x128xf32> -> vector<256x128xf32>
    "tpu.trace_stop"() : () -> ()
    %cst_19 = arith.constant dense<0xFF800000> : vector<128xf32>
    %86 = vector.multi_reduction <maximumf>, %85, %cst_19 [0] : vector<256x128xf32> to vector<128xf32>
    %87 = vector.shape_cast %86 : vector<128xf32> to vector<1x128xf32>
    %88 = vector.broadcast %87 : vector<1x128xf32> to vector<256x128xf32>
    %89 = arith.subf %85, %88 : vector<256x128xf32>
    %90 = math.exp %89 : vector<256x128xf32>
    %cst_20 = arith.constant dense<0.000000e+00> : vector<128xf32>
    %91 = vector.multi_reduction <add>, %90, %cst_20 [0] : vector<256x128xf32> to vector<128xf32>
    %92 = vector.shape_cast %91 : vector<128xf32> to vector<1x128xf32>
    %93 = tpu.reciprocal %92 {approx = true} : vector<1x128xf32> -> vector<1x128xf32>
    %94 = vector.broadcast %93 : vector<1x128xf32> to vector<256x128xf32>
    %95 = arith.mulf %90, %94 : vector<256x128xf32>
    %96 = arith.truncf %95 : vector<256x128xf32> to vector<256x128xbf16>
    %cst_21 = arith.constant dense<0.000000e+00> : vector<8x128xf32>
    %97 = tpu.matmul %84, %96, %cst_21 {dimension_numbers = #tpu.dot_dimension_numbers<[1], [0], [0], [1], [0, 0, 1, 1], [], []>} : vector<8x256xbf16>, vector<256x128xbf16>, vector<8x128xf32> -> vector<8x128xf32>
    %98 = tpu.concatenate %78, %97 in 0 : vector<8x128xf32>, vector<8x128xf32> -> vector<16x128xf32>
    %99 = arith.truncf %98 : vector<16x128xf32> to vector<16x128xbf16>
    %c16_22 = arith.constant 16 : index
    %c0_23 = arith.constant 0 : index
    %100 = vector.load %arg11[%c16_22, %c0_23] : memref<64x128xbf16, #tpu.memory_space<vmem>>, vector<16x128xbf16>
    tpu.vector_store %arg11[%c16_22, %c0_23], %99 {strides = array<i32>} : memref<64x128xbf16, #tpu.memory_space<vmem>>, vector<16x128xbf16>,
    %c32 = arith.constant 32 : index
    %101 = arith.index_cast %1 : i32 to index
    %102 = vector.load %arg10[%c32, %101] : memref<192x256xbf16, #tpu.memory_space<vmem>>, vector<16x128xbf16>
    %103 = arith.extf %102 : vector<16x128xbf16> to vector<16x128xf32>
    %c96 = arith.constant 96 : index
    %c0_24 = arith.constant 0 : index
    %104 = vector.load %arg10[%c96, %c0_24] : memref<192x256xbf16, #tpu.memory_space<vmem>>, vector<16x256xbf16>
    %105 = arith.extf %104 : vector<16x256xbf16> to vector<16x256xf32>
    %c160 = arith.constant 160 : index
    %c0_25 = arith.constant 0 : index
    %106 = vector.load %arg10[%c160, %c0_25] : memref<192x256xbf16, #tpu.memory_space<vmem>>, vector<16x256xbf16>
    %107 = arith.extf %106 : vector<16x256xbf16> to vector<16x256xf32>
    %108 = vector.extract_strided_slice %103 {offsets = [0, 0], sizes = [8, 128], strides = [1, 1]} : vector<16x128xf32> to vector<8x128xf32>
    %109 = arith.truncf %108 : vector<8x128xf32> to vector<8x128xbf16>
    %110 = vector.extract_strided_slice %105 {offsets = [0, 0], sizes = [8, 256], strides = [1, 1]} : vector<16x256xf32> to vector<8x256xf32>
    %111 = arith.truncf %110 : vector<8x256xf32> to vector<8x256xbf16>
    %112 = vector.extract_strided_slice %107 {offsets = [0, 0], sizes = [8, 256], strides = [1, 1]} : vector<16x256xf32> to vector<8x256xf32>
    %113 = arith.truncf %112 : vector<8x256xf32> to vector<8x256xbf16>
    "tpu.trace_start"() <{level = 10 : i32, message = "dk,dq->kq"}> : () -> ()
    %cst_26 = arith.constant dense<0.000000e+00> : vector<256x128xf32>
    %114 = tpu.matmul %111, %109, %cst_26 {dimension_numbers = #tpu.dot_dimension_numbers<[0], [0], [1], [1], [0, 1, 1, 1], [], []>} : vector<8x256xbf16>, vector<8x128xbf16>, vector<256x128xf32> -> vector<256x128xf32>
    "tpu.trace_stop"() : () -> ()
    %cst_27 = arith.constant dense<0xFF800000> : vector<128xf32>
    %115 = vector.multi_reduction <maximumf>, %114, %cst_27 [0] : vector<256x128xf32> to vector<128xf32>
    %116 = vector.shape_cast %115 : vector<128xf32> to vector<1x128xf32>
    %117 = vector.broadcast %116 : vector<1x128xf32> to vector<256x128xf32>
    %118 = arith.subf %114, %117 : vector<256x128xf32>
    %119 = math.exp %118 : vector<256x128xf32>
    %cst_28 = arith.constant dense<0.000000e+00> : vector<128xf32>
    %120 = vector.multi_reduction <add>, %119, %cst_28 [0] : vector<256x128xf32> to vector<128xf32>
    %121 = vector.shape_cast %120 : vector<128xf32> to vector<1x128xf32>
    %122 = tpu.reciprocal %121 {approx = true} : vector<1x128xf32> -> vector<1x128xf32>
    %123 = vector.broadcast %122 : vector<1x128xf32> to vector<256x128xf32>
    %124 = arith.mulf %119, %123 : vector<256x128xf32>
    %125 = arith.truncf %124 : vector<256x128xf32> to vector<256x128xbf16>
    %cst_29 = arith.constant dense<0.000000e+00> : vector<8x128xf32>
    %126 = tpu.matmul %113, %125, %cst_29 {dimension_numbers = #tpu.dot_dimension_numbers<[1], [0], [0], [1], [0, 0, 1, 1], [], []>} : vector<8x256xbf16>, vector<256x128xbf16>, vector<8x128xf32> -> vector<8x128xf32>
    %127 = vector.extract_strided_slice %103 {offsets = [8, 0], sizes = [8, 128], strides = [1, 1]} : vector<16x128xf32> to vector<8x128xf32>
    %128 = arith.truncf %127 : vector<8x128xf32> to vector<8x128xbf16>
    %129 = vector.extract_strided_slice %105 {offsets = [8, 0], sizes = [8, 256], strides = [1, 1]} : vector<16x256xf32> to vector<8x256xf32>
    %130 = arith.truncf %129 : vector<8x256xf32> to vector<8x256xbf16>
    %131 = vector.extract_strided_slice %107 {offsets = [8, 0], sizes = [8, 256], strides = [1, 1]} : vector<16x256xf32> to vector<8x256xf32>
    %132 = arith.truncf %131 : vector<8x256xf32> to vector<8x256xbf16>
    "tpu.trace_start"() <{level = 10 : i32, message = "dk,dq->kq"}> : () -> ()
    %cst_30 = arith.constant dense<0.000000e+00> : vector<256x128xf32>
    %133 = tpu.matmul %130, %128, %cst_30 {dimension_numbers = #tpu.dot_dimension_numbers<[0], [0], [1], [1], [0, 1, 1, 1], [], []>} : vector<8x256xbf16>, vector<8x128xbf16>, vector<256x128xf32> -> vector<256x128xf32>
    "tpu.trace_stop"() : () -> ()
    %cst_31 = arith.constant dense<0xFF800000> : vector<128xf32>
    %134 = vector.multi_reduction <maximumf>, %133, %cst_31 [0] : vector<256x128xf32> to vector<128xf32>
    %135 = vector.shape_cast %134 : vector<128xf32> to vector<1x128xf32>
    %136 = vector.broadcast %135 : vector<1x128xf32> to vector<256x128xf32>
    %137 = arith.subf %133, %136 : vector<256x128xf32>
    %138 = math.exp %137 : vector<256x128xf32>
    %cst_32 = arith.constant dense<0.000000e+00> : vector<128xf32>
    %139 = vector.multi_reduction <add>, %138, %cst_32 [0] : vector<256x128xf32> to vector<128xf32>
    %140 = vector.shape_cast %139 : vector<128xf32> to vector<1x128xf32>
    %141 = tpu.reciprocal %140 {approx = true} : vector<1x128xf32> -> vector<1x128xf32>
    %142 = vector.broadcast %141 : vector<1x128xf32> to vector<256x128xf32>
    %143 = arith.mulf %138, %142 : vector<256x128xf32>
    %144 = arith.truncf %143 : vector<256x128xf32> to vector<256x128xbf16>
    %cst_33 = arith.constant dense<0.000000e+00> : vector<8x128xf32>
    %145 = tpu.matmul %132, %144, %cst_33 {dimension_numbers = #tpu.dot_dimension_numbers<[1], [0], [0], [1], [0, 0, 1, 1], [], []>} : vector<8x256xbf16>, vector<256x128xbf16>, vector<8x128xf32> -> vector<8x128xf32>
    %146 = tpu.concatenate %126, %145 in 0 : vector<8x128xf32>, vector<8x128xf32> -> vector<16x128xf32>
    %147 = arith.truncf %146 : vector<16x128xf32> to vector<16x128xbf16>
    %c32_34 = arith.constant 32 : index
    %c0_35 = arith.constant 0 : index
    %148 = vector.load %arg11[%c32_34, %c0_35] : memref<64x128xbf16, #tpu.memory_space<vmem>>, vector<16x128xbf16>
    tpu.vector_store %arg11[%c32_34, %c0_35], %147 {strides = array<i32>} : memref<64x128xbf16, #tpu.memory_space<vmem>>, vector<16x128xbf16>,
    %c48 = arith.constant 48 : index
    %149 = arith.index_cast %1 : i32 to index
    %150 = vector.load %arg10[%c48, %149] : memref<192x256xbf16, #tpu.memory_space<vmem>>, vector<16x128xbf16>
    %151 = arith.extf %150 : vector<16x128xbf16> to vector<16x128xf32>
    %c112 = arith.constant 112 : index
    %c0_36 = arith.constant 0 : index
    %152 = vector.load %arg10[%c112, %c0_36] : memref<192x256xbf16, #tpu.memory_space<vmem>>, vector<16x256xbf16>
    %153 = arith.extf %152 : vector<16x256xbf16> to vector<16x256xf32>
    %c176 = arith.constant 176 : index
    %c0_37 = arith.constant 0 : index
    %154 = vector.load %arg10[%c176, %c0_37] : memref<192x256xbf16, #tpu.memory_space<vmem>>, vector<16x256xbf16>
    %155 = arith.extf %154 : vector<16x256xbf16> to vector<16x256xf32>
    %156 = vector.extract_strided_slice %151 {offsets = [0, 0], sizes = [8, 128], strides = [1, 1]} : vector<16x128xf32> to vector<8x128xf32>
    %157 = arith.truncf %156 : vector<8x128xf32> to vector<8x128xbf16>
    %158 = vector.extract_strided_slice %153 {offsets = [0, 0], sizes = [8, 256], strides = [1, 1]} : vector<16x256xf32> to vector<8x256xf32>
    %159 = arith.truncf %158 : vector<8x256xf32> to vector<8x256xbf16>
    %160 = vector.extract_strided_slice %155 {offsets = [0, 0], sizes = [8, 256], strides = [1, 1]} : vector<16x256xf32> to vector<8x256xf32>
    %161 = arith.truncf %160 : vector<8x256xf32> to vector<8x256xbf16>
    "tpu.trace_start"() <{level = 10 : i32, message = "dk,dq->kq"}> : () -> ()
    %cst_38 = arith.constant dense<0.000000e+00> : vector<256x128xf32>
    %162 = tpu.matmul %159, %157, %cst_38 {dimension_numbers = #tpu.dot_dimension_numbers<[0], [0], [1], [1], [0, 1, 1, 1], [], []>} : vector<8x256xbf16>, vector<8x128xbf16>, vector<256x128xf32> -> vector<256x128xf32>
    "tpu.trace_stop"() : () -> ()
    %cst_39 = arith.constant dense<0xFF800000> : vector<128xf32>
    %163 = vector.multi_reduction <maximumf>, %162, %cst_39 [0] : vector<256x128xf32> to vector<128xf32>
    %164 = vector.shape_cast %163 : vector<128xf32> to vector<1x128xf32>
    %165 = vector.broadcast %164 : vector<1x128xf32> to vector<256x128xf32>
    %166 = arith.subf %162, %165 : vector<256x128xf32>
    %167 = math.exp %166 : vector<256x128xf32>
    %cst_40 = arith.constant dense<0.000000e+00> : vector<128xf32>
    %168 = vector.multi_reduction <add>, %167, %cst_40 [0] : vector<256x128xf32> to vector<128xf32>
    %169 = vector.shape_cast %168 : vector<128xf32> to vector<1x128xf32>
    %170 = tpu.reciprocal %169 {approx = true} : vector<1x128xf32> -> vector<1x128xf32>
    %171 = vector.broadcast %170 : vector<1x128xf32> to vector<256x128xf32>
    %172 = arith.mulf %167, %171 : vector<256x128xf32>
    %173 = arith.truncf %172 : vector<256x128xf32> to vector<256x128xbf16>
    %cst_41 = arith.constant dense<0.000000e+00> : vector<8x128xf32>
    %174 = tpu.matmul %161, %173, %cst_41 {dimension_numbers = #tpu.dot_dimension_numbers<[1], [0], [0], [1], [0, 0, 1, 1], [], []>} : vector<8x256xbf16>, vector<256x128xbf16>, vector<8x128xf32> -> vector<8x128xf32>
    %175 = vector.extract_strided_slice %151 {offsets = [8, 0], sizes = [8, 128], strides = [1, 1]} : vector<16x128xf32> to vector<8x128xf32>
    %176 = arith.truncf %175 : vector<8x128xf32> to vector<8x128xbf16>
    %177 = vector.extract_strided_slice %153 {offsets = [8, 0], sizes = [8, 256], strides = [1, 1]} : vector<16x256xf32> to vector<8x256xf32>
    %178 = arith.truncf %177 : vector<8x256xf32> to vector<8x256xbf16>
    %179 = vector.extract_strided_slice %155 {offsets = [8, 0], sizes = [8, 256], strides = [1, 1]} : vector<16x256xf32> to vector<8x256xf32>
    %180 = arith.truncf %179 : vector<8x256xf32> to vector<8x256xbf16>
    "tpu.trace_start"() <{level = 10 : i32, message = "dk,dq->kq"}> : () -> ()
    %cst_42 = arith.constant dense<0.000000e+00> : vector<256x128xf32>
    %181 = tpu.matmul %178, %176, %cst_42 {dimension_numbers = #tpu.dot_dimension_numbers<[0], [0], [1], [1], [0, 1, 1, 1], [], []>} : vector<8x256xbf16>, vector<8x128xbf16>, vector<256x128xf32> -> vector<256x128xf32>
    "tpu.trace_stop"() : () -> ()
    %cst_43 = arith.constant dense<0xFF800000> : vector<128xf32>
    %182 = vector.multi_reduction <maximumf>, %181, %cst_43 [0] : vector<256x128xf32> to vector<128xf32>
    %183 = vector.shape_cast %182 : vector<128xf32> to vector<1x128xf32>
    %184 = vector.broadcast %183 : vector<1x128xf32> to vector<256x128xf32>
    %185 = arith.subf %181, %184 : vector<256x128xf32>
    %186 = math.exp %185 : vector<256x128xf32>
    %cst_44 = arith.constant dense<0.000000e+00> : vector<128xf32>
    %187 = vector.multi_reduction <add>, %186, %cst_44 [0] : vector<256x128xf32> to vector<128xf32>
    %188 = vector.shape_cast %187 : vector<128xf32> to vector<1x128xf32>
    %189 = tpu.reciprocal %188 {approx = true} : vector<1x128xf32> -> vector<1x128xf32>
    %190 = vector.broadcast %189 : vector<1x128xf32> to vector<256x128xf32>
    %191 = arith.mulf %186, %190 : vector<256x128xf32>
    %192 = arith.truncf %191 : vector<256x128xf32> to vector<256x128xbf16>
    %cst_45 = arith.constant dense<0.000000e+00> : vector<8x128xf32>
    %193 = tpu.matmul %180, %192, %cst_45 {dimension_numbers = #tpu.dot_dimension_numbers<[1], [0], [0], [1], [0, 0, 1, 1], [], []>} : vector<8x256xbf16>, vector<256x128xbf16>, vector<8x128xf32> -> vector<8x128xf32>
    %194 = tpu.concatenate %174, %193 in 0 : vector<8x128xf32>, vector<8x128xf32> -> vector<16x128xf32>
    %195 = arith.truncf %194 : vector<16x128xf32> to vector<16x128xbf16>
    %c48_46 = arith.constant 48 : index
    %c0_47 = arith.constant 0 : index
    %196 = vector.load %arg11[%c48_46, %c0_47] : memref<64x128xbf16, #tpu.memory_space<vmem>>, vector<16x128xbf16>
    tpu.vector_store %arg11[%c48_46, %c0_47], %195 {strides = array<i32>} : memref<64x128xbf16, #tpu.memory_space<vmem>>, vector<16x128xbf16>,
    %c0_48 = arith.constant 0 : index
    %c0_49 = arith.constant 0 : index
    %197 = vector.load %arg5[%c0_48, %c0_49] : memref<64x64xbf16, #tpu.memory_space<vmem>>, vector<64x64xbf16>
    %c0_50 = arith.constant 0 : index
    %c0_51 = arith.constant 0 : index
    %198 = vector.load %arg11[%c0_50, %c0_51] : memref<64x128xbf16, #tpu.memory_space<vmem>>, vector<64x128xbf16>
    %cst_52 = arith.constant dense<0.000000e+00> : vector<64x128xf32>
    %199 = tpu.matmul %197, %198, %cst_52 {dimension_numbers = #tpu.dot_dimension_numbers<[1], [0], [0], [1], [0, 0, 1, 1], [], []>} : vector<64x64xbf16>, vector<64x128xbf16>, vector<64x128xf32> -> vector<64x128xf32>
    %c0_53 = arith.constant 0 : index
    %c0_54 = arith.constant 0 : index
    %200 = arith.index_cast %1 : i32 to index
    %201 = vector.load %arg2[%c0_53, %c0_54, %200] : memref<1x64x256xf32, #tpu.memory_space<vmem>>, vector<1x64x128xf32>
    %202 = vector.shape_cast %201 : vector<1x64x128xf32> to vector<64x128xf32>
    %203 = arith.addf %202, %199 : vector<64x128xf32>
    %c0_55 = arith.constant 0 : index
    %c0_56 = arith.constant 0 : index
    %204 = vector.load %arg6[%c0_55, %c0_56] : memref<128x128xf32, #tpu.memory_space<vmem>>, vector<128x128xf32>
    %205 = arith.truncf %203 : vector<64x128xf32> to vector<64x128xbf16>
    %206 = arith.extf %205 : vector<64x128xbf16> to vector<64x128xf32>
    %207 = arith.subf %203, %206 : vector<64x128xf32>
    %cst_57 = arith.constant dense<0.000000e+00> : vector<64x128xf32>
    %208 = tpu.matmul %206, %204, %cst_57 {dimension_numbers = #tpu.dot_dimension_numbers<[1], [0], [0], [1], [0, 0, 1, 1], [], []>} : vector<64x128xf32>, vector<128x128xf32>, vector<64x128xf32> -> vector<64x128xf32>
    %cst_58 = arith.constant dense<0.000000e+00> : vector<64x128xf32>
    %209 = tpu.matmul %207, %204, %cst_58 {dimension_numbers = #tpu.dot_dimension_numbers<[1], [0], [0], [1], [0, 0, 1, 1], [], []>} : vector<64x128xf32>, vector<128x128xf32>, vector<64x128xf32> -> vector<64x128xf32>
    %210 = arith.addf %208, %209 : vector<64x128xf32>
    %211 = arith.subf %203, %210 : vector<64x128xf32>
    %212 = arith.mulf %211, %211 : vector<64x128xf32>
    %213 = arith.truncf %212 : vector<64x128xf32> to vector<64x128xbf16>
    %214 = arith.extf %213 : vector<64x128xbf16> to vector<64x128xf32>
    %215 = arith.subf %212, %214 : vector<64x128xf32>
    %cst_59 = arith.constant dense<0.000000e+00> : vector<64x128xf32>
    %216 = tpu.matmul %214, %204, %cst_59 {dimension_numbers = #tpu.dot_dimension_numbers<[1], [0], [0], [1], [0, 0, 1, 1], [], []>} : vector<64x128xf32>, vector<128x128xf32>, vector<64x128xf32> -> vector<64x128xf32>
    %cst_60 = arith.constant dense<0.000000e+00> : vector<64x128xf32>
    %217 = tpu.matmul %215, %204, %cst_60 {dimension_numbers = #tpu.dot_dimension_numbers<[1], [0], [0], [1], [0, 0, 1, 1], [], []>} : vector<64x128xf32>, vector<128x128xf32>, vector<64x128xf32> -> vector<64x128xf32>
    %218 = arith.addf %216, %217 : vector<64x128xf32>
    %cst_61 = arith.constant 9.99999974E-6 : f32
    %219 = vector.broadcast %cst_61 : f32 to vector<64x128xf32>
    %220 = arith.addf %218, %219 : vector<64x128xf32>
    %221 = math.rsqrt %220 : vector<64x128xf32>
    %222 = arith.mulf %211, %221 : vector<64x128xf32>
    %c0_62 = arith.constant 0 : index
    %c0_63 = arith.constant 0 : index
    %223 = vector.load %arg7[%c0_62, %c0_63] : memref<1x128xf32, #tpu.memory_space<vmem>>, vector<1x128xf32>
    %224 = vector.broadcast %223 : vector<1x128xf32> to vector<64x128xf32>
    %225 = arith.mulf %222, %224 : vector<64x128xf32>
    %c0_64 = arith.constant 0 : index
    %c0_65 = arith.constant 0 : index
    %226 = vector.load %arg8[%c0_64, %c0_65] : memref<1x128xf32, #tpu.memory_space<vmem>>, vector<1x128xf32>
    %227 = vector.broadcast %226 : vector<1x128xf32> to vector<64x128xf32>
    %228 = arith.addf %225, %227 : vector<64x128xf32>
    %c0_66 = arith.constant 0 : index
    %c0_67 = arith.constant 0 : index
    %c0_68 = arith.constant 0 : index
    %229 = vector.load %arg9[%c0_66, %c0_67, %c0_68] : memref<1x64x128xf32, #tpu.memory_space<vmem>>, vector<1x64x128xf32>
    %230 = vector.shape_cast %229 : vector<1x64x128xf32> to vector<64x128xf32>
    %231 = vector.shape_cast %228 : vector<64x128xf32> to vector<1x64x128xf32>
    tpu.vector_store %arg9[%c0_66, %c0_67, %c0_68], %231 {strides = array<i32>} : memref<1x64x128xf32, #tpu.memory_space<vmem>>, vector<1x64x128xf32>,
    return
  }
  func.func @transform_0(%arg0: i32, %arg1: i32) -> (i32, i32, i32) {
    %c0_i32 = arith.constant 0 : i32
    %c0_i32_0 = arith.constant 0 : i32
    %c0_i32_1 = arith.constant 0 : i32
    return %arg0, %c0_i32, %c0_i32_0 : i32, i32, i32
  }
  func.func @transform_1(%arg0: i32, %arg1: i32) -> (i32, i32) {
    %c0_i32 = arith.constant 0 : i32
    %c0_i32_0 = arith.constant 0 : i32
    %c0_i32_1 = arith.constant 0 : i32
    return %c0_i32, %c0_i32_0 : i32, i32
  }
  func.func @transform_2(%arg0: i32, %arg1: i32) -> (i32, i32) {
    %c0_i32 = arith.constant 0 : i32
    %c0_i32_0 = arith.constant 0 : i32
    %c0_i32_1 = arith.constant 0 : i32
    return %c0_i32, %c0_i32_0 : i32, i32
  }
  func.func @transform_3(%arg0: i32, %arg1: i32) -> (i32, i32) {
    %c0_i32 = arith.constant 0 : i32
    %c0_i32_0 = arith.constant 0 : i32
    %c0_i32_1 = arith.constant 0 : i32
    return %c0_i32, %c0_i32_0 : i32, i32
  }
  func.func @transform_4(%arg0: i32, %arg1: i32) -> (i32, i32) {
    %c0_i32 = arith.constant 0 : i32
    %c0_i32_0 = arith.constant 0 : i32
    %c0_i32_1 = arith.constant 0 : i32
    return %c0_i32, %c0_i32_0 : i32, i32
  }
  func.func @transform_5(%arg0: i32, %arg1: i32) -> (i32, i32) {
    %c0_i32 = arith.constant 0 : i32
    %c0_i32_0 = arith.constant 0 : i32
    return %c0_i32, %arg1 : i32, i32
  }
  func.func @transform_6(%arg0: i32, %arg1: i32) -> (i32, i32) {
    %c0_i32 = arith.constant 0 : i32
    %c0_i32_0 = arith.constant 0 : i32
    return %c0_i32, %arg1 : i32, i32
  }
  func.func @transform_7(%arg0: i32, %arg1: i32) -> (i32, i32, i32) {
    %c0_i32 = arith.constant 0 : i32
    %c0_i32_0 = arith.constant 0 : i32
    return %arg0, %c0_i32, %arg1 : i32, i32, i32
  }
}

</mosaic_0001>

<llo_original>
// kernel: tpu_custom_call.1
$region0: #{tpu_custom_call.1}
  #allocation0 [shape = 'u32[]', space=smem, size = 0x4, offset = 0x4, fixed_abs, tag = 'smem constant byte address 0x4 - core index']
  #allocation1 [shape = 'u32[72,128]{1,0:T(1,128)}', space=vmem, size = 0x9000, scoped, tag = 'internal scratch']
  #allocation2 [shape = 'bf16[192,256]{1,0:T(8,128)(2,1)}', space=vmem, size = 0x18000, scoped, tag = 'scratch operand']
  #allocation3 [shape = 'bf16[64,128]{1,0:T(8,128)(2,1)}', space=vmem, size = 0x4000, scoped, tag = 'scratch operand']
  %s0 = inlined_call_operand.hbm [shape: f32[2,64,256], index: 0, kind: input, shape index: {}]
  %s1 = inlined_call_operand.vmem [shape: bf16[192,64], index: 1, kind: input, shape index: {}]
  %s2 = inlined_call_operand.vmem [shape: f32[64,1], index: 2, kind: input, shape index: {}]
  %s3 = inlined_call_operand.vmem [shape: bf16[64,64], index: 3, kind: input, shape index: {}]
  %s4 = inlined_call_operand.vmem [shape: f32[128,128], index: 4, kind: input, shape index: {}]
  %s5 = inlined_call_operand.hbm [shape: f32[1,256], index: 5, kind: input, shape index: {}]
  %s6 = inlined_call_operand.vmem [shape: f32[1,256], index: 6, kind: input, shape index: {}]
  %s7 = inlined_call_operand.hbm [shape: f32[2,64,256], index: 7, kind: output, shape index: {}]
  %s8 = sld [smem:[#allocation0]]
  $region73: #{tpu_custom_call.1} parent=0
    _
  %s10 = ssub.s32 1, %s8
  %s11 = scalar_select 0, %s10, %s8
  $region1: #{tpu_custom_call.1} parent=0
    #allocation4 [shape = 'u8[131072]{0}', space=vmem, size = 0x20000, scoped, tag = 'input window, operand 0']
    #allocation5 [shape = 's32[2]{0}', space=sflag, size = 0x8, scoped, tag = 'scoped memory for tpu_custom_call.1']
    #allocation6 [shape = 's32[2]{0}', space=sflag, size = 0x8, scoped, tag = 'scoped memory for tpu_custom_call.1']
    #allocation7 [shape = 'u8[1024]{0}', space=vmem, size = 0x400, scoped, tag = 'input window, operand 5']
    #allocation8 [shape = 's32[2]{0}', space=sflag, size = 0x8, scoped, tag = 'scoped memory for tpu_custom_call.1']
    #allocation9 [shape = 'u8[65536]{0}', space=vmem, size = 0x10000, scoped, tag = 'output window, operand 0']
    %12 = vsyncpa [#allocation5], 0
    %s13 = scalar_lea.sflag [#allocation5], 1
    %14 = vsyncpa %s13, 0
    %15 = vsyncpa [#allocation8], 0
    %s16 = scalar_lea.sflag [#allocation8], 1
    %17 = vsyncpa %s16, 0
    %18 = vsyncpa [#allocation6], 0
    %s19 = scalar_lea.sflag [#allocation6], 1
    %20 = vsyncpa %s19, 0
    loop: start=0, step=1, limit=6
    $region2: #{tpu_custom_call.1} parent=1 // loop_pre_header
      _
    $region3: #{tpu_custom_call.1} parent=1 // loop_header
      %s22 = sphi 0, %s26
      %p23 = scmp.ge.s32.totalorder %s22, 6
      %s29 = sphi 0, %s41
      %s30 = sphi 0, %s37
      %s31 = sphi 0, %s29
      %s32 = sphi 0, %s30
      %s33 = sphi 0, %s31
      %s34 = sphi 0, %s32
      %s44 = sphi 0, %s46
      %s47 = sphi 0, %s44
      %s48 = sphi 0, %s47
      %s64 = sphi 0, %s48
      %s68 = sphi 0, %s68
      %s70 = sphi 0, %s68
      %s71 = sphi 0, %s70
      %s85 = sphi 0, %s71
      %s89 = sphi 0, %s89
      %s91 = sphi 0, %s89
      %s92 = sphi 0, %s91
      %s106 = sphi 0, %s92
      %s110 = sphi 0, %s110
      %s112 = sphi 0, %s110
      %s113 = sphi 0, %s112
      %s127 = sphi 0, %s113
      %s131 = sphi 0, %s131
      %s133 = sphi 0, %s131
      %s134 = sphi 0, %s133
      %s148 = sphi 0, %s134
      %s154 = sphi 0, %s156
      %s157 = sphi 0, %s154
      %s158 = sphi 0, %s157
      %s174 = sphi 0, %s158
      %s180 = sphi 0, %s182
      %s183 = sphi 0, %s180
      %s184 = sphi 0, %s183
      %s200 = sphi 0, %s184
      %s208 = sphi 0, %s210
      %s211 = sphi 0, %s208
      %s212 = sphi 0, %s211
      %s228 = sphi 0, %s212
    $region4: #{tpu_custom_call.1} parent=1 // loop_header_branch
      %25 = sbr.rel (%p23) target = $region8
    $region5: #{tpu_custom_call.1} parent=1 // loop_body
      %s27 = ssub.s32 %s22, 1
      %s28 = ssub.s32 %s22, 2
      %s35 = sadd.s32 1, %s30
      %p36 = scmp.ge.s32.totalorder %s35, 2
      %s37 = scalar_select %p36, 0, %s35
      %s38 = sadd.s32 1, %s29
      %s39 = scalar_select %p36, %s38, %s29
      %p40 = scmp.ge.s32.totalorder %s39, 2
      %s41 = scalar_select %p40, 0, %s39
      %s42 = ssub.s32 %s29, %s41
      %p43 = scmp.eq.s32.totalorder %s42, 0
      %s45 = sadd.s32 %s44, 1
      %s46 = scalar_select %p43, %s44, %s45
      %p49 = pneg %p43
      %p50 = scmp.eq.s32.totalorder %s22, 3
      %p51 = por %p49, %p50
      %p52 = scmp.ne.s32.totalorder %s44, %s47
      %p53 = scmp.eq.s32.totalorder %s22, 0
      %p54 = por %p52, %p53
      %p55 = scmp.ne.s32.totalorder %s44, %s47
      %p56 = scmp.eq.s32.totalorder %s27, 3
      %p57 = por %p55, %p56
      %p58 = scmp.ne.s32.totalorder %s47, %s48
      %p59 = scmp.eq.s32.totalorder %s27, 0
      %p60 = por %p58, %p59
      %p61 = scmp.ne.s32.totalorder %s47, %s48
      %p62 = scmp.eq.s32.totalorder %s28, 3
      %p63 = por %p61, %p62
      %p65 = scmp.ne.s32.totalorder %s48, %s64
      %p66 = scmp.eq.s32.totalorder %s28, 0
      %p67 = por %p65, %p66
      %s69 = sadd.s32 %s68, 1
      %p72 = scmp.eq.s32.totalorder %s22, 3
      %p73 = scmp.ne.s32.totalorder %s68, %s70
      %p74 = scmp.eq.s32.totalorder %s22, 0
      %p75 = por %p73, %p74
      %p76 = scmp.ne.s32.totalorder %s68, %s70
      %p77 = scmp.eq.s32.totalorder %s27, 3
      %p78 = por %p76, %p77
      %p79 = scmp.ne.s32.totalorder %s70, %s71
      %p80 = scmp.eq.s32.totalorder %s27, 0
      %p81 = por %p79, %p80
      %p82 = scmp.ne.s32.totalorder %s70, %s71
      %p83 = scmp.eq.s32.totalorder %s28, 3
      %p84 = por %p82, %p83
      %p86 = scmp.ne.s32.totalorder %s71, %s85
      %p87 = scmp.eq.s32.totalorder %s28, 0
      %p88 = por %p86, %p87
      %s90 = sadd.s32 %s89, 1
      %p93 = scmp.eq.s32.totalorder %s22, 3
      %p94 = scmp.ne.s32.totalorder %s89, %s91
      %p95 = scmp.eq.s32.totalorder %s22, 0
      %p96 = por %p94, %p95
      %p97 = scmp.ne.s32.totalorder %s89, %s91
      %p98 = scmp.eq.s32.totalorder %s27, 3
      %p99 = por %p97, %p98
      %p100 = scmp.ne.s32.totalorder %s91, %s92
      %p101 = scmp.eq.s32.totalorder %s27, 0
      %p102 = por %p100, %p101
      %p103 = scmp.ne.s32.totalorder %s91, %s92
      %p104 = scmp.eq.s32.totalorder %s28, 3
      %p105 = por %p103, %p104
      %p107 = scmp.ne.s32.totalorder %s92, %s106
      %p108 = scmp.eq.s32.totalorder %s28, 0
      %p109 = por %p107, %p108
      %s111 = sadd.s32 %s110, 1
      %p114 = scmp.eq.s32.totalorder %s22, 3
      %p115 = scmp.ne.s32.totalorder %s110, %s112
      %p116 = scmp.eq.s32.totalorder %s22, 0
      %p117 = por %p115, %p116
      %p118 = scmp.ne.s32.totalorder %s110, %s112
      %p119 = scmp.eq.s32.totalorder %s27, 3
      %p120 = por %p118, %p119
      %p121 = scmp.ne.s32.totalorder %s112, %s113
      %p122 = scmp.eq.s32.totalorder %s27, 0
      %p123 = por %p121, %p122
      %p124 = scmp.ne.s32.totalorder %s112, %s113
      %p125 = scmp.eq.s32.totalorder %s28, 3
      %p126 = por %p124, %p125
      %p128 = scmp.ne.s32.totalorder %s113, %s127
      %p129 = scmp.eq.s32.totalorder %s28, 0
      %p130 = por %p128, %p129
      %s132 = sadd.s32 %s131, 1
      %p135 = scmp.eq.s32.totalorder %s22, 3
      %p136 = scmp.ne.s32.totalorder %s131, %s133
      %p137 = scmp.eq.s32.totalorder %s22, 0
      %p138 = por %p136, %p137
      %p139 = scmp.ne.s32.totalorder %s131, %s133
      %p140 = scmp.eq.s32.totalorder %s27, 3
      %p141 = por %p139, %p140
      %p142 = scmp.ne.s32.totalorder %s133, %s134
      %p143 = scmp.eq.s32.totalorder %s27, 0
      %p144 = por %p142, %p143
      %p145 = scmp.ne.s32.totalorder %s133, %s134
      %p146 = scmp.eq.s32.totalorder %s28, 3
      %p147 = por %p145, %p146
      %p149 = scmp.ne.s32.totalorder %s134, %s148
      %p150 = scmp.eq.s32.totalorder %s28, 0
      %p151 = por %p149, %p150
      %s152 = ssub.s32 %s30, %s37
      %p153 = scmp.eq.s32.totalorder %s152, 0
      %s155 = sadd.s32 %s154, 1
      %s156 = scalar_select %p153, %s154, %s155
      %p159 = pneg %p153
      %p160 = scmp.eq.s32.totalorder %s22, 3
      %p161 = por %p159, %p160
      %p162 = scmp.ne.s32.totalorder %s154, %s157
      %p163 = scmp.eq.s32.totalorder %s22, 0
      %p164 = por %p162, %p163
      %p165 = scmp.ne.s32.totalorder %s154, %s157
      %p166 = scmp.eq.s32.totalorder %s27, 3
      %p167 = por %p165, %p166
      %p168 = scmp.ne.s32.totalorder %s157, %s158
      %p169 = scmp.eq.s32.totalorder %s27, 0
      %p170 = por %p168, %p169
      %p171 = scmp.ne.s32.totalorder %s157, %s158
      %p172 = scmp.eq.s32.totalorder %s28, 3
      %p173 = por %p171, %p172
      %p175 = scmp.ne.s32.totalorder %s158, %s174
      %p176 = scmp.eq.s32.totalorder %s28, 0
      %p177 = por %p175, %p176
      %s178 = ssub.s32 %s30, %s37
      %p179 = scmp.eq.s32.totalorder %s178, 0
      %s181 = sadd.s32 %s180, 1
      %s182 = scalar_select %p179, %s180, %s181
      %p185 = pneg %p179
      %p186 = scmp.eq.s32.totalorder %s22, 3
      %p187 = por %p185, %p186
      %p188 = scmp.ne.s32.totalorder %s180, %s183
      %p189 = scmp.eq.s32.totalorder %s22, 0
      %p190 = por %p188, %p189
      %p191 = scmp.ne.s32.totalorder %s180, %s183
      %p192 = scmp.eq.s32.totalorder %s27, 3
      %p193 = por %p191, %p192
      %p194 = scmp.ne.s32.totalorder %s183, %s184
      %p195 = scmp.eq.s32.totalorder %s27, 0
      %p196 = por %p194, %p195
      %p197 = scmp.ne.s32.totalorder %s183, %s184
      %p198 = scmp.eq.s32.totalorder %s28, 3
      %p199 = por %p197, %p198
      %p201 = scmp.ne.s32.totalorder %s184, %s200
      %p202 = scmp.eq.s32.totalorder %s28, 0
      %p203 = por %p201, %p202
      %s204 = ssub.s32 %s29, %s41
      %s205 = ssub.s32 %s30, %s37
      %s206 = sor.u32 %s204, %s205
      %p207 = scmp.eq.s32.totalorder %s206, 0
      %s209 = sadd.s32 %s208, 1
      %s210 = scalar_select %p207, %s208, %s209
      %p213 = pneg %p207
      %p214 = scmp.eq.s32.totalorder %s22, 3
      %p215 = por %p213, %p214
      %p216 = scmp.ne.s32.totalorder %s208, %s211
      %p217 = scmp.eq.s32.totalorder %s22, 0
      %p218 = por %p216, %p217
      %p219 = scmp.ne.s32.totalorder %s208, %s211
      %p220 = scmp.eq.s32.totalorder %s27, 3
      %p221 = por %p219, %p220
      %p222 = scmp.ne.s32.totalorder %s211, %s212
      %p223 = scmp.eq.s32.totalorder %s27, 0
      %p224 = por %p222, %p223
      %p225 = scmp.ne.s32.totalorder %s211, %s212
      %p226 = scmp.eq.s32.totalorder %s28, 3
      %p227 = por %p225, %p226
      %p229 = scmp.ne.s32.totalorder %s212, %s228
      %p230 = scmp.eq.s32.totalorder %s28, 0
      %p231 = por %p229, %p230
      %p232 = scmp.le.s32.totalorder 1, %s22
      %p233 = scmp.lt.s32.totalorder %s22, 5
      %p234 = pnand %p232, %p233
      %p235 = pneg %p234
      // Predicated region
      $region9: #{tpu_custom_call.1} parent=5 // pred_check
        _
      $region10: #{tpu_custom_call.1} parent=5 // pred_check_branch
        %237 = sbr.rel (%p234) target = $region12
      $region11: #{tpu_custom_call.1} parent=5 // pred_region
        %s238 = ssub.s32 %s22, 1
        // Predicated region
        $region13: #{tpu_custom_call.1} parent=11 // pred_check
          %p239 = pneg %p81
        $region14: #{tpu_custom_call.1} parent=11 // pred_check_branch
          %241 = sbr.rel (%p239) target = $region16
        $region15: #{tpu_custom_call.1} parent=11 // pred_region
          _
        $region16: #{tpu_custom_call.1} parent=11 // pred_fallthru
          _
        // Predicated region
        $region17: #{tpu_custom_call.1} parent=11 // pred_check
          %p242 = pneg %p102
        $region18: #{tpu_custom_call.1} parent=11 // pred_check_branch
          %244 = sbr.rel (%p242) target = $region20
        $region19: #{tpu_custom_call.1} parent=11 // pred_region
          _
        $region20: #{tpu_custom_call.1} parent=11 // pred_fallthru
          _
        // Predicated region
        $region21: #{tpu_custom_call.1} parent=11 // pred_check
          %p245 = pneg %p123
        $region22: #{tpu_custom_call.1} parent=11 // pred_check_branch
          %247 = sbr.rel (%p245) target = $region24
        $region23: #{tpu_custom_call.1} parent=11 // pred_region
          _
        $region24: #{tpu_custom_call.1} parent=11 // pred_fallthru
          _
        // Predicated region
        $region25: #{tpu_custom_call.1} parent=11 // pred_check
          %p248 = pneg %p144
        $region26: #{tpu_custom_call.1} parent=11 // pred_check_branch
          %250 = sbr.rel (%p248) target = $region28
        $region27: #{tpu_custom_call.1} parent=11 // pred_region
          _
        $region28: #{tpu_custom_call.1} parent=11 // pred_fallthru
          _
      $region12: #{tpu_custom_call.1} parent=5 // pred_fallthru
        _
      %p251 = scmp.lt.s32.totalorder %s22, 4
      // Predicated region
      $region29: #{tpu_custom_call.1} parent=5 // pred_check
        %p252 = pneg %p251
      $region30: #{tpu_custom_call.1} parent=5 // pred_check_branch
        %254 = sbr.rel (%p252) target = $region32
      $region31: #{tpu_custom_call.1} parent=5 // pred_region
        // Predicated region
        $region33: #{tpu_custom_call.1} parent=31 // pred_check
          %p255 = pneg %p54
        $region34: #{tpu_custom_call.1} parent=31 // pred_check_branch
          %257 = sbr.rel (%p255) target = $region36
        $region35: #{tpu_custom_call.1} parent=31 // pred_region
          %s258 = sand.u32 %s44, 1
          %s259 = scalar_lea.sflag [#allocation5], %s258
          %s260 = sand.u32 %s44, 1
          %s261 = smul.addr %s260, 128
          %s262 = scalar_lea.vmem [#allocation4], %s261
          %264 = vsyncadd %s259, 0
          %s265 = smul.addr %s29, 16
          %s266 = smul.addr %s265, 8
          %s267 = scalar_lea.hbm %s0, %s266
          %s268 = sshll.u32 %s267, 4
          %s269 = int_to_ptr.hbm [resolvable:$true] %s268
          %s270 = sshll.u32 %s262, 4
          %s271 = int_to_ptr.vmem [resolvable:$true] %s270
          %276 = dma.hbm_to_vmem [thread:$0]  %s269, 2048, %s271, %s259, 256, 256, 16
        $region36: #{tpu_custom_call.1} parent=31 // pred_fallthru
          _
        // Predicated region
        $region37: #{tpu_custom_call.1} parent=31 // pred_check
          %p277 = pneg %p164
        $region38: #{tpu_custom_call.1} parent=31 // pred_check_branch
          %279 = sbr.rel (%p277) target = $region40
        $region39: #{tpu_custom_call.1} parent=31 // pred_region
          %s280 = sand.u32 %s154, 1
          %s281 = scalar_lea.sflag [#allocation8], %s280
          %s282 = sand.u32 %s154, 1
          %s283 = scalar_lea.vmem [#allocation7], %s282
          %285 = vsyncadd %s281, 0
          %s286 = scalar_lea.hbm %s5, %s30
          %s288 = sshll.u32 %s286, 4
          %s289 = int_to_ptr.hbm [resolvable:$true] %s288
          %s290 = sshll.u32 %s283, 4
          %s291 = int_to_ptr.vmem [resolvable:$true] %s290
          %293 = dma.hbm_to_vmem [thread:$0]  %s289, 16, %s291, %s281
        $region40: #{tpu_custom_call.1} parent=31 // pred_fallthru
          _
        // Predicated region
        $region41: #{tpu_custom_call.1} parent=31 // pred_check
          %p294 = pneg %p190
        $region42: #{tpu_custom_call.1} parent=31 // pred_check_branch
          %296 = sbr.rel (%p294) target = $region44
        $region43: #{tpu_custom_call.1} parent=31 // pred_region
          %p297 = scmp.lt.s32.totalorder %s30, 1
          %s298 = scalar_select %p297, %s30, 1
          %s299 = scalar_lea.vmem %s6, %s298
        $region44: #{tpu_custom_call.1} parent=31 // pred_fallthru
          _
      $region32: #{tpu_custom_call.1} parent=5 // pred_fallthru
        _
      %p300 = scmp.le.s32.totalorder 1, %s22
      %p301 = scmp.lt.s32.totalorder %s22, 5
      %p302 = pnand %p300, %p301
      %p303 = pneg %p302
      // Predicated region
      $region45: #{tpu_custom_call.1} parent=5 // pred_check
        _
      $region46: #{tpu_custom_call.1} parent=5 // pred_check_branch
        %305 = sbr.rel (%p302) target = $region48
      $region47: #{tpu_custom_call.1} parent=5 // pred_region
        %s306 = ssub.s32 %s22, 1
        %s307 = sand.u32 %s47, 1
        %s308 = scalar_lea.sflag [#allocation5], %s307
        %s309 = sand.u32 %s47, 1
        %s310 = smul.addr %s309, 128
        %s311 = scalar_lea.vmem [#allocation4], %s310
        // Predicated region
        $region49: #{tpu_custom_call.1} parent=47 // pred_check
          %p312 = pneg %p60
        $region50: #{tpu_custom_call.1} parent=47 // pred_check_branch
          %314 = sbr.rel (%p312) target = $region52
        $region51: #{tpu_custom_call.1} parent=47 // pred_region
          %316 = dma.done %s308, 2048
        $region52: #{tpu_custom_call.1} parent=47 // pred_fallthru
          _
        %s317 = sand.u32 %s157, 1
        %s318 = scalar_lea.sflag [#allocation8], %s317
        %s319 = sand.u32 %s157, 1
        %s320 = scalar_lea.vmem [#allocation7], %s319
        // Predicated region
        $region53: #{tpu_custom_call.1} parent=47 // pred_check
          %p321 = pneg %p170
        $region54: #{tpu_custom_call.1} parent=47 // pred_check_branch
          %323 = sbr.rel (%p321) target = $region56
        $region55: #{tpu_custom_call.1} parent=47 // pred_region
          %325 = dma.done %s318, 16
        $region56: #{tpu_custom_call.1} parent=47 // pred_fallthru
          _
        %s326 = sand.u32 %s47, 1
        %s327 = scalar_lea.sflag [#allocation5], %s326
        %s328 = sand.u32 %s47, 1
        %s329 = smul.addr %s328, 128
        %s330 = scalar_lea.vmem [#allocation4], %s329
        %p331 = pneg %p60
        %p332 = pneg %p57
        %p333 = pneg %p81
        %p334 = pneg %p78
        %p335 = pneg %p102
        %p336 = pneg %p99
        %p337 = pneg %p123
        %p338 = pneg %p120
        %p339 = pneg %p144
        %p340 = pneg %p141
        %s341 = sand.u32 %s157, 1
        %s342 = scalar_lea.sflag [#allocation8], %s341
        %s343 = sand.u32 %s157, 1
        %s344 = scalar_lea.vmem [#allocation7], %s343
        %p345 = pneg %p170
        %p346 = pneg %p167
        %p347 = scmp.lt.s32.totalorder %s32, 1
        %s348 = scalar_select %p347, %s32, 1
        %s349 = scalar_lea.vmem %s6, %s348
        %p350 = pneg %p196
        %p351 = pneg %p193
        %p352 = pneg %p224
        %p353 = pneg %p221
        %s354 = sand.u32 %s211, 1
        %s355 = scalar_lea.sflag [#allocation6], %s354
        %s356 = sand.u32 %s211, 1
        %s357 = smul.addr %s356, 64
        %s358 = scalar_lea.vmem [#allocation9], %s357
        %p359 = scmp.lt.s32.totalorder %s32, 1
        %s360 = scalar_select %p359, %s32, 1
        %s361 = scalar_lea.vmem %s6, %s360
        %s363 = smul.u32 %s32, 128
        %p364 = scmp.eq.s32.totalorder %s32, 0
        // Predicated region
        $region57: #{tpu_custom_call.1} parent=47 // pred_check
          %p365 = pneg %p364
        $region58: #{tpu_custom_call.1} parent=47 // pred_check_branch
          %367 = sbr.rel (%p365) target = $region60
        $region59: #{tpu_custom_call.1} parent=47 // pred_region
          %v368 = vld [vmem:[%s311] sm:$0xff]
          %v369 = vld [vmem:[%s311 + $0x8] sm:$0xff]
          %v370 = vld [vmem:[%s311 + $0x10] sm:$0xff]
          %v371 = vld [vmem:[%s311 + $0x18] sm:$0xff]
          %v372 = vld [vmem:[%s311 + $0x20] sm:$0xff]
          %v373 = vld [vmem:[%s311 + $0x28] sm:$0xff]
          %v374 = vld [vmem:[%s311 + $0x30] sm:$0xff]
          %v375 = vld [vmem:[%s311 + $0x38] sm:$0xff]
          %v376 = vld [vmem:[%s311 + $0x40] sm:$0xff]
          %v377 = vld [vmem:[%s311 + $0x48] sm:$0xff]
          %v378 = vld [vmem:[%s311 + $0x50] sm:$0xff]
          %v379 = vld [vmem:[%s311 + $0x58] sm:$0xff]
          %v380 = vld [vmem:[%s311 + $0x60] sm:$0xff]
          %v381 = vld [vmem:[%s311 + $0x68] sm:$0xff]
          %v382 = vld [vmem:[%s311 + $0x70] sm:$0xff]
          %v383 = vld [vmem:[%s311 + $0x78] sm:$0xff]
          %v384 = vpack.c.bf16 %v370, %v368
          %v385 = vpack.c.bf16 %v371, %v369
          %v386 = vpack.c.bf16 %v374, %v372
          %v387 = vpack.c.bf16 %v375, %v373
          %v388 = vpack.c.bf16 %v378, %v376
          %v389 = vpack.c.bf16 %v379, %v377
          %v390 = vpack.c.bf16 %v382, %v380
          %v391 = vpack.c.bf16 %v383, %v381
          %v392 = vld [vmem:[%s1] sm:$0xf]
          %v393 = vld [vmem:[%s1 + $0x4] sm:$0xf]
          %v394 = vld [vmem:[%s1 + $0x8] sm:$0xf]
          %v395 = vld [vmem:[%s1 + $0xc] sm:$0xf]
          %v396 = vld [vmem:[%s1 + $0x10] sm:$0xf]
          %v397 = vld [vmem:[%s1 + $0x14] sm:$0xf]
          %v398 = vld [vmem:[%s1 + $0x18] sm:$0xf]
          %v399 = vld [vmem:[%s1 + $0x1c] sm:$0xf]
          %v400 = vld [vmem:[%s1 + $0x20] sm:$0xf]
          %v401 = vld [vmem:[%s1 + $0x24] sm:$0xf]
          %v402 = vld [vmem:[%s1 + $0x28] sm:$0xf]
          %v403 = vld [vmem:[%s1 + $0x2c] sm:$0xf]
          %v404 = vld [vmem:[%s1 + $0x30] sm:$0xf]
          %v405 = vld [vmem:[%s1 + $0x34] sm:$0xf]
          %v406 = vld [vmem:[%s1 + $0x38] sm:$0xf]
          %v407 = vld [vmem:[%s1 + $0x3c] sm:$0xf]
          %v408 = vld [vmem:[%s1 + $0x40] sm:$0xf]
          %v409 = vld [vmem:[%s1 + $0x44] sm:$0xf]
          %v410 = vld [vmem:[%s1 + $0x48] sm:$0xf]
          %v411 = vld [vmem:[%s1 + $0x4c] sm:$0xf]
          %v412 = vld [vmem:[%s1 + $0x50] sm:$0xf]
          %v413 = vld [vmem:[%s1 + $0x54] sm:$0xf]
          %v414 = vld [vmem:[%s1 + $0x58] sm:$0xf]
          %v415 = vld [vmem:[%s1 + $0x5c] sm:$0xf]
          %v440 = vunpack.c.l.b16 %v392
          %v441 = vunpack.c.l.b16 %v393
          %v442 = vunpack.c.l.b16 %v394
          %v443 = vunpack.c.l.b16 %v395
          %v444 = vunpack.c.l.b16 %v396
          %v445 = vunpack.c.l.b16 %v397
          %v446 = vunpack.c.l.b16 %v398
          %v447 = vunpack.c.l.b16 %v399
          %v448 = vunpack.c.l.b16 %v400
          %v449 = vunpack.c.l.b16 %v401
          %v450 = vunpack.c.l.b16 %v402
          %v451 = vunpack.c.l.b16 %v403
          %v452 = vunpack.c.l.b16 %v404
          %v453 = vunpack.c.l.b16 %v405
          %v454 = vunpack.c.l.b16 %v406
          %v455 = vunpack.c.l.b16 %v407
          %v456 = vunpack.c.l.b16 %v408
          %v457 = vunpack.c.l.b16 %v409
          %v458 = vunpack.c.l.b16 %v410
          %v459 = vunpack.c.l.b16 %v411
          %v460 = vunpack.c.l.b16 %v412
          %v461 = vunpack.c.l.b16 %v413
          %v462 = vunpack.c.l.b16 %v414
          %v463 = vunpack.c.l.b16 %v415
          %v464 = vpack.c.b16 %v441, %v440
          %v465 = vpack.c.b16 %v443, %v442
          %v466 = vpack.c.b16 %v445, %v444
          %v467 = vpack.c.b16 %v447, %v446
          %v468 = vpack.c.b16 %v449, %v448
          %v469 = vpack.c.b16 %v451, %v450
          %v470 = vpack.c.b16 %v453, %v452
          %v471 = vpack.c.b16 %v455, %v454
          %v472 = vpack.c.b16 %v457, %v456
          %v473 = vpack.c.b16 %v459, %v458
          %v474 = vpack.c.b16 %v461, %v460
          %v475 = vpack.c.b16 %v463, %v462
          %vm476 = vcmask 523264
          %v478 = vsel %vm476, %v464, 0
          %v481 = vsel %vm476, %v465, 0
          %v484 = vsel %vm476, %v466, 0
          %v487 = vsel %vm476, %v467, 0
          %v490 = vsel %vm476, %v468, 0
          %v493 = vsel %vm476, %v469, 0
          %v496 = vsel %vm476, %v470, 0
          %v499 = vsel %vm476, %v471, 0
          %v502 = vsel %vm476, %v472, 0
          %v505 = vsel %vm476, %v473, 0
          %v508 = vsel %vm476, %v474, 0
          %v511 = vsel %vm476, %v475, 0
          %513 = vmatpush.bf16.msra.mxu0 0
          %514 = vmatpush.bf16.msra.mxu0 0
          %515 = vmatpush.bf16.msra.mxu0 0
          %516 = vmatpush.bf16.msra.mxu0 0
          %517 = vmatpush.bf16.msra.mxu0 %v390
          %518 = vmatpush.bf16.msra.mxu0 %v388
          %519 = vmatpush.bf16.msra.mxu0 %v386
          %520 = vmatpush.bf16.msra.mxu0 %v384
          %521 = vmatmul.bf16.gmra.mxu0 %v478
          %v522 = vpop.f32.mrf.mxu0
          %v523 = vadd.f32 0.0, %v522
          %v524 = vpop.f32.mrf.mxu0
          %v525 = vadd.f32 0.0, %v524
          %526 = vmatmul.bf16.gmra.mxu0 %v481
          %v527 = vpop.f32.mrf.mxu0
          %v528 = vadd.f32 0.0, %v527
          %v529 = vpop.f32.mrf.mxu0
          %v530 = vadd.f32 0.0, %v529
          %531 = vmatmul.bf16.gmra.mxu0 %v484
          %v532 = vpop.f32.mrf.mxu0
          %v533 = vadd.f32 0.0, %v532
          %v534 = vpop.f32.mrf.mxu0
          %v535 = vadd.f32 0.0, %v534
          %536 = vmatmul.bf16.gmra.mxu0 %v487
          %v537 = vpop.f32.mrf.mxu0
          %v538 = vadd.f32 0.0, %v537
          %v539 = vpop.f32.mrf.mxu0
          %v540 = vadd.f32 0.0, %v539
          %541 = vmatmul.bf16.gmra.mxu0 %v490
          %v542 = vpop.f32.mrf.mxu0
          %v543 = vadd.f32 0.0, %v542
          %v544 = vpop.f32.mrf.mxu0
          %v545 = vadd.f32 0.0, %v544
          %546 = vmatmul.bf16.gmra.mxu0 %v493
          %v547 = vpop.f32.mrf.mxu0
          %v548 = vadd.f32 0.0, %v547
          %v549 = vpop.f32.mrf.mxu0
          %v550 = vadd.f32 0.0, %v549
          %551 = vmatmul.bf16.gmra.mxu0 %v496
          %v552 = vpop.f32.mrf.mxu0
          %v553 = vadd.f32 0.0, %v552
          %v554 = vpop.f32.mrf.mxu0
          %v555 = vadd.f32 0.0, %v554
          %556 = vmatmul.bf16.gmra.mxu0 %v499
          %v557 = vpop.f32.mrf.mxu0
          %v558 = vadd.f32 0.0, %v557
          %v559 = vpop.f32.mrf.mxu0
          %v560 = vadd.f32 0.0, %v559
          %561 = vmatmul.bf16.gmra.mxu0 %v502
          %v562 = vpop.f32.mrf.mxu0
          %v563 = vadd.f32 0.0, %v562
          %v564 = vpop.f32.mrf.mxu0
          %v565 = vadd.f32 0.0, %v564
          %566 = vmatmul.bf16.gmra.mxu0 %v505
          %v567 = vpop.f32.mrf.mxu0
          %v568 = vadd.f32 0.0, %v567
          %v569 = vpop.f32.mrf.mxu0
          %v570 = vadd.f32 0.0, %v569
          %571 = vmatmul.bf16.gmra.mxu0 %v508
          %v572 = vpop.f32.mrf.mxu0
          %v573 = vadd.f32 0.0, %v572
          %v574 = vpop.f32.mrf.mxu0
          %v575 = vadd.f32 0.0, %v574
          %576 = vmatmul.bf16.gmra.mxu0 %v511
          %v577 = vpop.f32.mrf.mxu0
          %v578 = vadd.f32 0.0, %v577
          %v579 = vpop.f32.mrf.mxu0
          %v580 = vadd.f32 0.0, %v579
          %581 = vdwg.mxu0
          %582 = vmatpush.bf16.msra.mxu0 0
          %583 = vmatpush.bf16.msra.mxu0 0
          %584 = vmatpush.bf16.msra.mxu0 0
          %585 = vmatpush.bf16.msra.mxu0 0
          %586 = vmatpush.bf16.msra.mxu0 %v391
          %587 = vmatpush.bf16.msra.mxu0 %v389
          %588 = vmatpush.bf16.msra.mxu0 %v387
          %589 = vmatpush.bf16.msra.mxu0 %v385
          %590 = vmatmul.bf16.gmra.mxu0 %v478
          %v591 = vpop.f32.mrf.mxu0
          %v592 = vadd.f32 0.0, %v591
          %v593 = vpop.f32.mrf.mxu0
          %v594 = vadd.f32 0.0, %v593
          %595 = vmatmul.bf16.gmra.mxu0 %v481
          %v596 = vpop.f32.mrf.mxu0
          %v597 = vadd.f32 0.0, %v596
          %v598 = vpop.f32.mrf.mxu0
          %v599 = vadd.f32 0.0, %v598
          %600 = vmatmul.bf16.gmra.mxu0 %v484
          %v601 = vpop.f32.mrf.mxu0
          %v602 = vadd.f32 0.0, %v601
          %v603 = vpop.f32.mrf.mxu0
          %v604 = vadd.f32 0.0, %v603
          %605 = vmatmul.bf16.gmra.mxu0 %v487
          %v606 = vpop.f32.mrf.mxu0
          %v607 = vadd.f32 0.0, %v606
          %v608 = vpop.f32.mrf.mxu0
          %v609 = vadd.f32 0.0, %v608
          %610 = vmatmul.bf16.gmra.mxu0 %v490
          %v611 = vpop.f32.mrf.mxu0
          %v612 = vadd.f32 0.0, %v611
          %v613 = vpop.f32.mrf.mxu0
          %v614 = vadd.f32 0.0, %v613
          %615 = vmatmul.bf16.gmra.mxu0 %v493
          %v616 = vpop.f32.mrf.mxu0
          %v617 = vadd.f32 0.0, %v616
          %v618 = vpop.f32.mrf.mxu0
          %v619 = vadd.f32 0.0, %v618
          %620 = vmatmul.bf16.gmra.mxu0 %v496
          %v621 = vpop.f32.mrf.mxu0
          %v622 = vadd.f32 0.0, %v621
          %v623 = vpop.f32.mrf.mxu0
          %v624 = vadd.f32 0.0, %v623
          %625 = vmatmul.bf16.gmra.mxu0 %v499
          %v626 = vpop.f32.mrf.mxu0
          %v627 = vadd.f32 0.0, %v626
          %v628 = vpop.f32.mrf.mxu0
          %v629 = vadd.f32 0.0, %v628
          %630 = vmatmul.bf16.gmra.mxu0 %v502
          %v631 = vpop.f32.mrf.mxu0
          %v632 = vadd.f32 0.0, %v631
          %v633 = vpop.f32.mrf.mxu0
          %v634 = vadd.f32 0.0, %v633
          %635 = vmatmul.bf16.gmra.mxu0 %v505
          %v636 = vpop.f32.mrf.mxu0
          %v637 = vadd.f32 0.0, %v636
          %v638 = vpop.f32.mrf.mxu0
          %v639 = vadd.f32 0.0, %v638
          %640 = vmatmul.bf16.gmra.mxu0 %v508
          %v641 = vpop.f32.mrf.mxu0
          %v642 = vadd.f32 0.0, %v641
          %v643 = vpop.f32.mrf.mxu0
          %v644 = vadd.f32 0.0, %v643
          %645 = vmatmul.bf16.gmra.mxu0 %v511
          %v646 = vpop.f32.mrf.mxu0
          %v647 = vadd.f32 0.0, %v646
          %v648 = vpop.f32.mrf.mxu0
          %v649 = vadd.f32 0.0, %v648
          %650 = vdwg.mxu0
          %v651 = vld [vmem:[%s2] sm:$0xff]
          %v652 = vld [vmem:[%s2 + $0x8] sm:$0xff]
          %v653 = vld [vmem:[%s2 + $0x10] sm:$0xff]
          %v654 = vld [vmem:[%s2 + $0x18] sm:$0xff]
          %v655 = vld [vmem:[%s2 + $0x20] sm:$0xff]
          %v656 = vld [vmem:[%s2 + $0x28] sm:$0xff]
          %v657 = vld [vmem:[%s2 + $0x30] sm:$0xff]
          %v658 = vld [vmem:[%s2 + $0x38] sm:$0xff]
          %660 = vset.pattern.permute.xlu0 0
          %661 = vperm.xlu0 %660, %v651
          %v662 = vpop.permute.xlu0 %661
          %665 = vset.pattern.permute.xlu0 0
          %666 = vperm.xlu0 %665, %v652
          %v667 = vpop.permute.xlu0 %666
          %670 = vset.pattern.permute.xlu0 0
          %671 = vperm.xlu0 %670, %v653
          %v672 = vpop.permute.xlu0 %671
          %675 = vset.pattern.permute.xlu0 0
          %676 = vperm.xlu0 %675, %v654
          %v677 = vpop.permute.xlu0 %676
          %680 = vset.pattern.permute.xlu0 0
          %681 = vperm.xlu0 %680, %v655
          %v682 = vpop.permute.xlu0 %681
          %685 = vset.pattern.permute.xlu0 0
          %686 = vperm.xlu0 %685, %v656
          %v687 = vpop.permute.xlu0 %686
          %690 = vset.pattern.permute.xlu0 0
          %691 = vperm.xlu0 %690, %v657
          %v692 = vpop.permute.xlu0 %691
          %695 = vset.pattern.permute.xlu0 0
          %696 = vperm.xlu0 %695, %v658
          %v697 = vpop.permute.xlu0 %696
          %v699 = vadd.f32 %v523, %v662
          %v700 = vadd.f32 %v592, %v662
          %v701 = vadd.f32 %v525, %v667
          %v702 = vadd.f32 %v594, %v667
          %v703 = vadd.f32 %v528, %v672
          %v704 = vadd.f32 %v597, %v672
          %v705 = vadd.f32 %v530, %v677
          %v706 = vadd.f32 %v599, %v677
          %v707 = vadd.f32 %v533, %v682
          %v708 = vadd.f32 %v602, %v682
          %v709 = vadd.f32 %v535, %v687
          %v710 = vadd.f32 %v604, %v687
          %v711 = vadd.f32 %v538, %v692
          %v712 = vadd.f32 %v607, %v692
          %v713 = vadd.f32 %v540, %v697
          %v714 = vadd.f32 %v609, %v697
          %v715 = vpack.c.bf16 %v700, %v699
          %v716 = vpack.c.bf16 %v702, %v701
          %v717 = vpack.c.bf16 %v704, %v703
          %v718 = vpack.c.bf16 %v706, %v705
          %v719 = vpack.c.bf16 %v708, %v707
          %v720 = vpack.c.bf16 %v710, %v709
          %v721 = vpack.c.bf16 %v712, %v711
          %v722 = vpack.c.bf16 %v714, %v713
          %723 = vst [vmem:[#allocation2] sm:$0xff] %v715
          %724 = vst [vmem:[#allocation2 + $0x8] sm:$0xff] %v716
          %725 = vst [vmem:[#allocation2 + $0x10] sm:$0xff] %v717
          %726 = vst [vmem:[#allocation2 + $0x18] sm:$0xff] %v718
          %727 = vst [vmem:[#allocation2 + $0x20] sm:$0xff] %v719
          %728 = vst [vmem:[#allocation2 + $0x28] sm:$0xff] %v720
          %729 = vst [vmem:[#allocation2 + $0x30] sm:$0xff] %v721
          %730 = vst [vmem:[#allocation2 + $0x38] sm:$0xff] %v722
          %v731 = vpack.c.bf16 %v612, %v543
          %v732 = vpack.c.bf16 %v614, %v545
          %v733 = vpack.c.bf16 %v617, %v548
          %v734 = vpack.c.bf16 %v619, %v550
          %v735 = vpack.c.bf16 %v622, %v553
          %v736 = vpack.c.bf16 %v624, %v555
          %v737 = vpack.c.bf16 %v627, %v558
          %v738 = vpack.c.bf16 %v629, %v560
          %v739 = vpack.c.bf16 %v632, %v563
          %v740 = vpack.c.bf16 %v634, %v565
          %v741 = vpack.c.bf16 %v637, %v568
          %v742 = vpack.c.bf16 %v639, %v570
          %v743 = vpack.c.bf16 %v642, %v573
          %v744 = vpack.c.bf16 %v644, %v575
          %v745 = vpack.c.bf16 %v647, %v578
          %v746 = vpack.c.bf16 %v649, %v580
          %747 = vst [vmem:[#allocation2 + $0x40] sm:$0xff] %v731
          %748 = vst [vmem:[#allocation2 + $0x48] sm:$0xff] %v732
          %749 = vst [vmem:[#allocation2 + $0x50] sm:$0xff] %v733
          %750 = vst [vmem:[#allocation2 + $0x58] sm:$0xff] %v734
          %751 = vst [vmem:[#allocation2 + $0x60] sm:$0xff] %v735
          %752 = vst [vmem:[#allocation2 + $0x68] sm:$0xff] %v736
          %753 = vst [vmem:[#allocation2 + $0x70] sm:$0xff] %v737
          %754 = vst [vmem:[#allocation2 + $0x78] sm:$0xff] %v738
          %755 = vst [vmem:[#allocation2 + $0x80] sm:$0xff] %v739
          %756 = vst [vmem:[#allocation2 + $0x88] sm:$0xff] %v740
          %757 = vst [vmem:[#allocation2 + $0x90] sm:$0xff] %v741
          %758 = vst [vmem:[#allocation2 + $0x98] sm:$0xff] %v742
          %759 = vst [vmem:[#allocation2 + $0xa0] sm:$0xff] %v743
          %760 = vst [vmem:[#allocation2 + $0xa8] sm:$0xff] %v744
          %761 = vst [vmem:[#allocation2 + $0xb0] sm:$0xff] %v745
          %762 = vst [vmem:[#allocation2 + $0xb8] sm:$0xff] %v746
        $region60: #{tpu_custom_call.1} parent=47 // pred_fallthru
          _
        %s763 = sshra.s32 %s363, 7
        %s764 = sand.u32 %s363, 127
        %s765 = smul.addr %s763, 4
        %s766 = scalar_lea.vmem [#allocation2], %s765
        %v767 = vld [vmem:[%s766] sm:$0xf]
        %v768 = vld [vmem:[%s766 + $0x8] sm:$0xf]
        %v769 = vunpack.c.l.bf16 %v767
        %v770 = vunpack.c.l.bf16 %v768
        %v771 = vld [vmem:[#allocation2 + $0x40] sm:$0xff]
        %v772 = vld [vmem:[#allocation2 + $0x48] sm:$0xff]
        %v773 = vunpack.c.l.bf16 %v771
        %v774 = vunpack.c.h.bf16 %v771
        %v775 = vunpack.c.l.bf16 %v772
        %v776 = vunpack.c.h.bf16 %v772
        %v777 = vld [vmem:[#allocation2 + $0x80] sm:$0xff]
        %v778 = vld [vmem:[#allocation2 + $0x88] sm:$0xff]
        %v779 = vunpack.c.l.bf16 %v777
        %v780 = vunpack.c.h.bf16 %v777
        %v781 = vunpack.c.l.bf16 %v778
        %v782 = vunpack.c.h.bf16 %v778
        %v783 = vpack.c.bf16 %v769, %v769
        %v784 = vpack.c.bf16 %v773, %v773
        %v785 = vpack.c.bf16 %v774, %v774
        %v786 = vpack.c.bf16 %v779, %v779
        %v787 = vpack.c.bf16 %v780, %v780
        %788 = vxpose.binary.xlu0.c.b16.start [1/16] %v785, %v784, 128
        %789 = vxpose.binary.xlu0.c.b16.cont [2/16] 0, 0, 128
        %790 = vxpose.binary.xlu0.c.b16.cont [3/16] 0, 0, 128
        %791 = vxpose.binary.xlu0.c.b16.cont [4/16] 0, 0, 128
        %792 = vxpose.binary.xlu0.c.b16.cont [5/16] 0, 0, 128
        %793 = vxpose.binary.xlu0.c.b16.cont [6/16] 0, 0, 128
        %794 = vxpose.binary.xlu0.c.b16.cont [7/16] 0, 0, 128
        %795 = vxpose.binary.xlu0.c.b16.end [8/16] 0, 0, 128
        %v796 = vpop.trf.xlu0
        %v797 = vpop.trf.xlu0
        %v798 = vpop.trf.xlu0
        %v799 = vpop.trf.xlu0
        %v800 = vpop.trf.xlu0
        %v801 = vpop.trf.xlu0
        %v802 = vpop.trf.xlu0
        %v803 = vpop.trf.xlu0
        %v804 = vpop.trf.xlu0
        %v805 = vpop.trf.xlu0
        %v806 = vpop.trf.xlu0
        %v807 = vpop.trf.xlu0
        %v808 = vpop.trf.xlu0
        %v809 = vpop.trf.xlu0
        %v810 = vpop.trf.xlu0
        %v811 = vpop.trf.xlu0
        %vm812 = vcmask 64512
        %v814 = vsel %vm812, %v796, 0
        %v817 = vsel %vm812, %v798, 0
        %v820 = vsel %vm812, %v800, 0
        %v823 = vsel %vm812, %v802, 0
        %v826 = vsel %vm812, %v804, 0
        %v829 = vsel %vm812, %v806, 0
        %v832 = vsel %vm812, %v808, 0
        %v835 = vsel %vm812, %v810, 0
        %v838 = vsel %vm812, %v797, 0
        %v841 = vsel %vm812, %v799, 0
        %v844 = vsel %vm812, %v801, 0
        %v847 = vsel %vm812, %v803, 0
        %v850 = vsel %vm812, %v805, 0
        %v853 = vsel %vm812, %v807, 0
        %v856 = vsel %vm812, %v809, 0
        %v859 = vsel %vm812, %v811, 0
        %vm861 = vcmask 1043456
        %v863 = vsel %vm861, %v783, 0
        %865 = vmatpush.bf16.msra.mxu0 0
        %866 = vmatpush.bf16.msra.mxu0 0
        %867 = vmatpush.bf16.msra.mxu0 0
        %868 = vmatpush.bf16.msra.mxu0 0
        %869 = vmatpush.bf16.msra.mxu0 0
        %870 = vmatpush.bf16.msra.mxu0 0
        %871 = vmatpush.bf16.msra.mxu0 0
        %872 = vmatpush.bf16.msra.mxu0 %v863
        %873 = vmatmul.bf16.gmra.mxu0 %v814
        %v874 = vpop.f32.mrf.mxu0
        %v875 = vadd.f32 0.0, %v874
        %v876 = vpop.f32.mrf.mxu0
        %v877 = vadd.f32 0.0, %v876
        %878 = vmatmul.bf16.gmra.mxu0 %v817
        %v879 = vpop.f32.mrf.mxu0
        %v880 = vadd.f32 0.0, %v879
        %v881 = vpop.f32.mrf.mxu0
        %v882 = vadd.f32 0.0, %v881
        %883 = vmatmul.bf16.gmra.mxu0 %v820
        %v884 = vpop.f32.mrf.mxu0
        %v885 = vadd.f32 0.0, %v884
        %v886 = vpop.f32.mrf.mxu0
        %v887 = vadd.f32 0.0, %v886
        %888 = vmatmul.bf16.gmra.mxu0 %v823
        %v889 = vpop.f32.mrf.mxu0
        %v890 = vadd.f32 0.0, %v889
        %v891 = vpop.f32.mrf.mxu0
        %v892 = vadd.f32 0.0, %v891
        %893 = vmatmul.bf16.gmra.mxu0 %v826
        %v894 = vpop.f32.mrf.mxu0
        %v895 = vadd.f32 0.0, %v894
        %v896 = vpop.f32.mrf.mxu0
        %v897 = vadd.f32 0.0, %v896
        %898 = vmatmul.bf16.gmra.mxu0 %v829
        %v899 = vpop.f32.mrf.mxu0
        %v900 = vadd.f32 0.0, %v899
        %v901 = vpop.f32.mrf.mxu0
        %v902 = vadd.f32 0.0, %v901
        %903 = vmatmul.bf16.gmra.mxu0 %v832
        %v904 = vpop.f32.mrf.mxu0
        %v905 = vadd.f32 0.0, %v904
        %v906 = vpop.f32.mrf.mxu0
        %v907 = vadd.f32 0.0, %v906
        %908 = vmatmul.bf16.gmra.mxu0 %v835
        %v909 = vpop.f32.mrf.mxu0
        %v910 = vadd.f32 0.0, %v909
        %v911 = vpop.f32.mrf.mxu0
        %v912 = vadd.f32 0.0, %v911
        %913 = vmatmul.bf16.gmra.mxu0 %v838
        %v914 = vpop.f32.mrf.mxu0
        %v915 = vadd.f32 0.0, %v914
        %v916 = vpop.f32.mrf.mxu0
        %v917 = vadd.f32 0.0, %v916
        %918 = vmatmul.bf16.gmra.mxu0 %v841
        %v919 = vpop.f32.mrf.mxu0
        %v920 = vadd.f32 0.0, %v919
        %v921 = vpop.f32.mrf.mxu0
        %v922 = vadd.f32 0.0, %v921
        %923 = vmatmul.bf16.gmra.mxu0 %v844
        %v924 = vpop.f32.mrf.mxu0
        %v925 = vadd.f32 0.0, %v924
        %v926 = vpop.f32.mrf.mxu0
        %v927 = vadd.f32 0.0, %v926
        %928 = vmatmul.bf16.gmra.mxu0 %v847
        %v929 = vpop.f32.mrf.mxu0
        %v930 = vadd.f32 0.0, %v929
        %v931 = vpop.f32.mrf.mxu0
        %v932 = vadd.f32 0.0, %v931
        %933 = vmatmul.bf16.gmra.mxu0 %v850
        %v934 = vpop.f32.mrf.mxu0
        %v935 = vadd.f32 0.0, %v934
        %v936 = vpop.f32.mrf.mxu0
        %v937 = vadd.f32 0.0, %v936
        %938 = vmatmul.bf16.gmra.mxu0 %v853
        %v939 = vpop.f32.mrf.mxu0
        %v940 = vadd.f32 0.0, %v939
        %v941 = vpop.f32.mrf.mxu0
        %v942 = vadd.f32 0.0, %v941
        %943 = vmatmul.bf16.gmra.mxu0 %v856
        %v944 = vpop.f32.mrf.mxu0
        %v945 = vadd.f32 0.0, %v944
        %v946 = vpop.f32.mrf.mxu0
        %v947 = vadd.f32 0.0, %v946
        %948 = vmatmul.bf16.gmra.mxu0 %v859
        %v949 = vpop.f32.mrf.mxu0
        %v950 = vadd.f32 0.0, %v949
        %v951 = vpop.f32.mrf.mxu0
        %v952 = vadd.f32 0.0, %v951
        %953 = vdwg.mxu0
        %v954 = vmax.f32 %v875, %v885
        %v955 = vmax.f32 %v877, %v887
        %v956 = vmax.f32 %v880, %v890
        %v957 = vmax.f32 %v882, %v892
        %v958 = vmax.f32 %v954, %v895
        %v959 = vmax.f32 %v955, %v897
        %v960 = vmax.f32 %v956, %v900
        %v961 = vmax.f32 %v957, %v902
        %v962 = vmax.f32 %v958, %v905
        %v963 = vmax.f32 %v959, %v907
        %v964 = vmax.f32 %v960, %v910
        %v965 = vmax.f32 %v961, %v912
        %v966 = vmax.f32 %v962, %v915
        %v967 = vmax.f32 %v963, %v917
        %v968 = vmax.f32 %v964, %v920
        %v969 = vmax.f32 %v965, %v922
        %v970 = vmax.f32 %v966, %v925
        %v971 = vmax.f32 %v967, %v927
        %v972 = vmax.f32 %v968, %v930
        %v973 = vmax.f32 %v969, %v932
        %v974 = vmax.f32 %v970, %v935
        %v975 = vmax.f32 %v971, %v937
        %v976 = vmax.f32 %v972, %v940
        %v977 = vmax.f32 %v973, %v942
        %v978 = vmax.f32 %v974, %v945
        %v979 = vmax.f32 %v975, %v947
        %v980 = vmax.f32 %v976, %v950
        %v981 = vmax.f32 %v977, %v952
        %v982 = vmax.f32 %v978, %v979
        %v983 = vmax.f32 %v980, %v981
        %v984 = vmax.f32 %v982, %v983
        %v985 = vrot.slane %v984, 4
        %v986 = vmax.f32 %v984, %v985
        %v987 = vrot.slane %v986, 2
        %v988 = vmax.f32 %v986, %v987
        %v989 = vrot.slane %v988, 1
        %v990 = vmax.f32 %v988, %v989
        %v991 = vsub.f32 %v875, %v990
        %v992 = vsub.f32 %v877, %v990
        %v993 = vsub.f32 %v880, %v990
        %v994 = vsub.f32 %v882, %v990
        %v995 = vsub.f32 %v885, %v990
        %v996 = vsub.f32 %v887, %v990
        %v997 = vsub.f32 %v890, %v990
        %v998 = vsub.f32 %v892, %v990
        %v999 = vsub.f32 %v895, %v990
        %v1000 = vsub.f32 %v897, %v990
        %v1001 = vsub.f32 %v900, %v990
        %v1002 = vsub.f32 %v902, %v990
        %v1003 = vsub.f32 %v905, %v990
        %v1004 = vsub.f32 %v907, %v990
        %v1005 = vsub.f32 %v910, %v990
        %v1006 = vsub.f32 %v912, %v990
        %v1007 = vsub.f32 %v915, %v990
        %v1008 = vsub.f32 %v917, %v990
        %v1009 = vsub.f32 %v920, %v990
        %v1010 = vsub.f32 %v922, %v990
        %v1011 = vsub.f32 %v925, %v990
        %v1012 = vsub.f32 %v927, %v990
        %v1013 = vsub.f32 %v930, %v990
        %v1014 = vsub.f32 %v932, %v990
        %v1015 = vsub.f32 %v935, %v990
        %v1016 = vsub.f32 %v937, %v990
        %v1017 = vsub.f32 %v940, %v990
        %v1018 = vsub.f32 %v942, %v990
        %v1019 = vsub.f32 %v945, %v990
        %v1020 = vsub.f32 %v947, %v990
        %v1021 = vsub.f32 %v950, %v990
        %v1022 = vsub.f32 %v952, %v990
        %v1023 = vmul.f32 %v991, 1.442695
        %v1024 = vpow.pop %v1023
        %v1025 = vmul.f32 %v992, 1.442695
        %v1026 = vpow.pop %v1025
        %v1027 = vmul.f32 %v993, 1.442695
        %v1028 = vpow.pop %v1027
        %v1029 = vmul.f32 %v994, 1.442695
        %v1030 = vpow.pop %v1029
        %v1031 = vmul.f32 %v995, 1.442695
        %v1032 = vpow.pop %v1031
        %v1033 = vmul.f32 %v996, 1.442695
        %v1034 = vpow.pop %v1033
        %v1035 = vmul.f32 %v997, 1.442695
        %v1036 = vpow.pop %v1035
        %v1037 = vmul.f32 %v998, 1.442695
        %v1038 = vpow.pop %v1037
        %v1039 = vmul.f32 %v999, 1.442695
        %v1040 = vpow.pop %v1039
        %v1041 = vmul.f32 %v1000, 1.442695
        %v1042 = vpow.pop %v1041
        %v1043 = vmul.f32 %v1001, 1.442695
        %v1044 = vpow.pop %v1043
        %v1045 = vmul.f32 %v1002, 1.442695
        %v1046 = vpow.pop %v1045
        %v1047 = vmul.f32 %v1003, 1.442695
        %v1048 = vpow.pop %v1047
        %v1049 = vmul.f32 %v1004, 1.442695
        %v1050 = vpow.pop %v1049
        %v1051 = vmul.f32 %v1005, 1.442695
        %v1052 = vpow.pop %v1051
        %v1053 = vmul.f32 %v1006, 1.442695
        %v1054 = vpow.pop %v1053
        %v1055 = vmul.f32 %v1007, 1.442695
        %v1056 = vpow.pop %v1055
        %v1057 = vmul.f32 %v1008, 1.442695
        %v1058 = vpow.pop %v1057
        %v1059 = vmul.f32 %v1009, 1.442695
        %v1060 = vpow.pop %v1059
        %v1061 = vmul.f32 %v1010, 1.442695
        %v1062 = vpow.pop %v1061
        %v1063 = vmul.f32 %v1011, 1.442695
        %v1064 = vpow.pop %v1063
        %v1065 = vmul.f32 %v1012, 1.442695
        %v1066 = vpow.pop %v1065
        %v1067 = vmul.f32 %v1013, 1.442695
        %v1068 = vpow.pop %v1067
        %v1069 = vmul.f32 %v1014, 1.442695
        %v1070 = vpow.pop %v1069
        %v1071 = vmul.f32 %v1015, 1.442695
        %v1072 = vpow.pop %v1071
        %v1073 = vmul.f32 %v1016, 1.442695
        %v1074 = vpow.pop %v1073
        %v1075 = vmul.f32 %v1017, 1.442695
        %v1076 = vpow.pop %v1075
        %v1077 = vmul.f32 %v1018, 1.442695
        %v1078 = vpow.pop %v1077
        %v1079 = vmul.f32 %v1019, 1.442695
        %v1080 = vpow.pop %v1079
        %v1081 = vmul.f32 %v1020, 1.442695
        %v1082 = vpow.pop %v1081
        %v1083 = vmul.f32 %v1021, 1.442695
        %v1084 = vpow.pop %v1083
        %v1085 = vmul.f32 %v1022, 1.442695
        %v1086 = vpow.pop %v1085
        %v1087 = vadd.f32 %v1024, %v1026
        %v1088 = vadd.f32 %v1087, %v1028
        %v1089 = vadd.f32 %v1088, %v1030
        %v1090 = vadd.f32 %v1089, %v1032
        %v1091 = vadd.f32 %v1090, %v1034
        %v1092 = vadd.f32 %v1091, %v1036
        %v1093 = vadd.f32 %v1092, %v1038
        %v1094 = vadd.f32 %v1093, %v1040
        %v1095 = vadd.f32 %v1094, %v1042
        %v1096 = vadd.f32 %v1095, %v1044
        %v1097 = vadd.f32 %v1096, %v1046
        %v1098 = vadd.f32 %v1097, %v1048
        %v1099 = vadd.f32 %v1098, %v1050
        %v1100 = vadd.f32 %v1099, %v1052
        %v1101 = vadd.f32 %v1100, %v1054
        %v1102 = vadd.f32 %v1101, %v1056
        %v1103 = vadd.f32 %v1102, %v1058
        %v1104 = vadd.f32 %v1103, %v1060
        %v1105 = vadd.f32 %v1104, %v1062
        %v1106 = vadd.f32 %v1105, %v1064
        %v1107 = vadd.f32 %v1106, %v1066
        %v1108 = vadd.f32 %v1107, %v1068
        %v1109 = vadd.f32 %v1108, %v1070
        %v1110 = vadd.f32 %v1109, %v1072
        %v1111 = vadd.f32 %v1110, %v1074
        %v1112 = vadd.f32 %v1111, %v1076
        %v1113 = vadd.f32 %v1112, %v1078
        %v1114 = vadd.f32 %v1113, %v1080
        %v1115 = vadd.f32 %v1114, %v1082
        %v1116 = vadd.f32 %v1115, %v1084
        %v1117 = vadd.f32 %v1116, %v1086
        %v1118 = vrot.slane %v1117, 4
        %v1119 = vadd.f32 %v1117, %v1118
        %v1120 = vrot.slane %v1119, 2
        %v1121 = vadd.f32 %v1119, %v1120
        %v1122 = vrot.slane %v1121, 1
        %v1123 = vadd.f32 %v1121, %v1122
        %v1124 = vrcp.pop %v1123
        %v1125 = vmul.f32 %v1024, %v1124
        %v1126 = vmul.f32 %v1026, %v1124
        %v1127 = vmul.f32 %v1028, %v1124
        %v1128 = vmul.f32 %v1030, %v1124
        %v1129 = vmul.f32 %v1032, %v1124
        %v1130 = vmul.f32 %v1034, %v1124
        %v1131 = vmul.f32 %v1036, %v1124
        %v1132 = vmul.f32 %v1038, %v1124
        %v1133 = vmul.f32 %v1040, %v1124
        %v1134 = vmul.f32 %v1042, %v1124
        %v1135 = vmul.f32 %v1044, %v1124
        %v1136 = vmul.f32 %v1046, %v1124
        %v1137 = vmul.f32 %v1048, %v1124
        %v1138 = vmul.f32 %v1050, %v1124
        %v1139 = vmul.f32 %v1052, %v1124
        %v1140 = vmul.f32 %v1054, %v1124
        %v1141 = vmul.f32 %v1056, %v1124
        %v1142 = vmul.f32 %v1058, %v1124
        %v1143 = vmul.f32 %v1060, %v1124
        %v1144 = vmul.f32 %v1062, %v1124
        %v1145 = vmul.f32 %v1064, %v1124
        %v1146 = vmul.f32 %v1066, %v1124
        %v1147 = vmul.f32 %v1068, %v1124
        %v1148 = vmul.f32 %v1070, %v1124
        %v1149 = vmul.f32 %v1072, %v1124
        %v1150 = vmul.f32 %v1074, %v1124
        %v1151 = vmul.f32 %v1076, %v1124
        %v1152 = vmul.f32 %v1078, %v1124
        %v1153 = vmul.f32 %v1080, %v1124
        %v1154 = vmul.f32 %v1082, %v1124
        %v1155 = vmul.f32 %v1084, %v1124
        %v1156 = vmul.f32 %v1086, %v1124
        %v1157 = vpack.c.bf16 %v1126, %v1125
        %v1158 = vpack.c.bf16 %v1128, %v1127
        %v1159 = vpack.c.bf16 %v1130, %v1129
        %v1160 = vpack.c.bf16 %v1132, %v1131
        %v1161 = vpack.c.bf16 %v1134, %v1133
        %v1162 = vpack.c.bf16 %v1136, %v1135
        %v1163 = vpack.c.bf16 %v1138, %v1137
        %v1164 = vpack.c.bf16 %v1140, %v1139
        %v1165 = vpack.c.bf16 %v1142, %v1141
        %v1166 = vpack.c.bf16 %v1144, %v1143
        %v1167 = vpack.c.bf16 %v1146, %v1145
        %v1168 = vpack.c.bf16 %v1148, %v1147
        %v1169 = vpack.c.bf16 %v1150, %v1149
        %v1170 = vpack.c.bf16 %v1152, %v1151
        %v1171 = vpack.c.bf16 %v1154, %v1153
        %v1172 = vpack.c.bf16 %v1156, %v1155
        %1173 = vmatpush.bf16.msra.mxu0 %v1164
        %1174 = vmatpush.bf16.msra.mxu0 %v1163
        %1175 = vmatpush.bf16.msra.mxu0 %v1162
        %1176 = vmatpush.bf16.msra.mxu0 %v1161
        %1177 = vmatpush.bf16.msra.mxu0 %v1160
        %1178 = vmatpush.bf16.msra.mxu0 %v1159
        %1179 = vmatpush.bf16.msra.mxu0 %v1158
        %1180 = vmatpush.bf16.msra.mxu0 %v1157
        %1181 = vmatmul.bf16.gmra.mxu0 %v786
        %v1182 = vpop.f32.mrf.mxu0
        %v1183 = vadd.f32 0.0, %v1182
        %v1184 = vpop.f32.mrf.mxu0
        %1185 = vdwg.mxu0
        %1186 = vmatpush.bf16.msra.mxu0 %v1172
        %1187 = vmatpush.bf16.msra.mxu0 %v1171
        %1188 = vmatpush.bf16.msra.mxu0 %v1170
        %1189 = vmatpush.bf16.msra.mxu0 %v1169
        %1190 = vmatpush.bf16.msra.mxu0 %v1168
        %1191 = vmatpush.bf16.msra.mxu0 %v1167
        %1192 = vmatpush.bf16.msra.mxu0 %v1166
        %1193 = vmatpush.bf16.msra.mxu0 %v1165
        %1194 = vmatmul.bf16.gmra.mxu0 %v787
        %v1195 = vpop.f32.mrf.mxu0
        %v1196 = vadd.f32 %v1183, %v1195
        %v1197 = vpop.f32.mrf.mxu0
        %1198 = vdwg.mxu0
        %v1199 = vpack.c.bf16 %v770, %v770
        %v1200 = vpack.c.bf16 %v775, %v775
        %v1201 = vpack.c.bf16 %v776, %v776
        %v1202 = vpack.c.bf16 %v781, %v781
        %v1203 = vpack.c.bf16 %v782, %v782
        %1204 = vxpose.binary.xlu0.c.b16.start [1/16] %v1201, %v1200, 128
        %1205 = vxpose.binary.xlu0.c.b16.cont [2/16] 0, 0, 128
        %1206 = vxpose.binary.xlu0.c.b16.cont [3/16] 0, 0, 128
        %1207 = vxpose.binary.xlu0.c.b16.cont [4/16] 0, 0, 128
        %1208 = vxpose.binary.xlu0.c.b16.cont [5/16] 0, 0, 128
        %1209 = vxpose.binary.xlu0.c.b16.cont [6/16] 0, 0, 128
        %1210 = vxpose.binary.xlu0.c.b16.cont [7/16] 0, 0, 128
        %1211 = vxpose.binary.xlu0.c.b16.end [8/16] 0, 0, 128
        %v1212 = vpop.trf.xlu0
        %v1213 = vpop.trf.xlu0
        %v1214 = vpop.trf.xlu0
        %v1215 = vpop.trf.xlu0
        %v1216 = vpop.trf.xlu0
        %v1217 = vpop.trf.xlu0
        %v1218 = vpop.trf.xlu0
        %v1219 = vpop.trf.xlu0
        %v1220 = vpop.trf.xlu0
        %v1221 = vpop.trf.xlu0
        %v1222 = vpop.trf.xlu0
        %v1223 = vpop.trf.xlu0
        %v1224 = vpop.trf.xlu0
        %v1225 = vpop.trf.xlu0
        %v1226 = vpop.trf.xlu0
        %v1227 = vpop.trf.xlu0
        %v1229 = vsel %vm812, %v1212, 0
        %v1232 = vsel %vm812, %v1214, 0
        %v1235 = vsel %vm812, %v1216, 0
        %v1238 = vsel %vm812, %v1218, 0
        %v1241 = vsel %vm812, %v1220, 0
        %v1244 = vsel %vm812, %v1222, 0
        %v1247 = vsel %vm812, %v1224, 0
        %v1250 = vsel %vm812, %v1226, 0
        %v1253 = vsel %vm812, %v1213, 0
        %v1256 = vsel %vm812, %v1215, 0
        %v1259 = vsel %vm812, %v1217, 0
        %v1262 = vsel %vm812, %v1219, 0
        %v1265 = vsel %vm812, %v1221, 0
        %v1268 = vsel %vm812, %v1223, 0
        %v1271 = vsel %vm812, %v1225, 0
        %v1274 = vsel %vm812, %v1227, 0
        %v1277 = vsel %vm861, %v1199, 0
        %1279 = vmatpush.bf16.msra.mxu0 0
        %1280 = vmatpush.bf16.msra.mxu0 0
        %1281 = vmatpush.bf16.msra.mxu0 0
        %1282 = vmatpush.bf16.msra.mxu0 0
        %1283 = vmatpush.bf16.msra.mxu0 0
        %1284 = vmatpush.bf16.msra.mxu0 0
        %1285 = vmatpush.bf16.msra.mxu0 0
        %1286 = vmatpush.bf16.msra.mxu0 %v1277
        %1287 = vmatmul.bf16.gmra.mxu0 %v1229
        %v1288 = vpop.f32.mrf.mxu0
        %v1289 = vadd.f32 0.0, %v1288
        %v1290 = vpop.f32.mrf.mxu0
        %v1291 = vadd.f32 0.0, %v1290
        %1292 = vmatmul.bf16.gmra.mxu0 %v1232
        %v1293 = vpop.f32.mrf.mxu0
        %v1294 = vadd.f32 0.0, %v1293
        %v1295 = vpop.f32.mrf.mxu0
        %v1296 = vadd.f32 0.0, %v1295
        %1297 = vmatmul.bf16.gmra.mxu0 %v1235
        %v1298 = vpop.f32.mrf.mxu0
        %v1299 = vadd.f32 0.0, %v1298
        %v1300 = vpop.f32.mrf.mxu0
        %v1301 = vadd.f32 0.0, %v1300
        %1302 = vmatmul.bf16.gmra.mxu0 %v1238
        %v1303 = vpop.f32.mrf.mxu0
        %v1304 = vadd.f32 0.0, %v1303
        %v1305 = vpop.f32.mrf.mxu0
        %v1306 = vadd.f32 0.0, %v1305
        %1307 = vmatmul.bf16.gmra.mxu0 %v1241
        %v1308 = vpop.f32.mrf.mxu0
        %v1309 = vadd.f32 0.0, %v1308
        %v1310 = vpop.f32.mrf.mxu0
        %v1311 = vadd.f32 0.0, %v1310
        %1312 = vmatmul.bf16.gmra.mxu0 %v1244
        %v1313 = vpop.f32.mrf.mxu0
        %v1314 = vadd.f32 0.0, %v1313
        %v1315 = vpop.f32.mrf.mxu0
        %v1316 = vadd.f32 0.0, %v1315
        %1317 = vmatmul.bf16.gmra.mxu0 %v1247
        %v1318 = vpop.f32.mrf.mxu0
        %v1319 = vadd.f32 0.0, %v1318
        %v1320 = vpop.f32.mrf.mxu0
        %v1321 = vadd.f32 0.0, %v1320
        %1322 = vmatmul.bf16.gmra.mxu0 %v1250
        %v1323 = vpop.f32.mrf.mxu0
        %v1324 = vadd.f32 0.0, %v1323
        %v1325 = vpop.f32.mrf.mxu0
        %v1326 = vadd.f32 0.0, %v1325
        %1327 = vmatmul.bf16.gmra.mxu0 %v1253
        %v1328 = vpop.f32.mrf.mxu0
        %v1329 = vadd.f32 0.0, %v1328
        %v1330 = vpop.f32.mrf.mxu0
        %v1331 = vadd.f32 0.0, %v1330
        %1332 = vmatmul.bf16.gmra.mxu0 %v1256
        %v1333 = vpop.f32.mrf.mxu0
        %v1334 = vadd.f32 0.0, %v1333
        %v1335 = vpop.f32.mrf.mxu0
        %v1336 = vadd.f32 0.0, %v1335
        %1337 = vmatmul.bf16.gmra.mxu0 %v1259
        %v1338 = vpop.f32.mrf.mxu0
        %v1339 = vadd.f32 0.0, %v1338
        %v1340 = vpop.f32.mrf.mxu0
        %v1341 = vadd.f32 0.0, %v1340
        %1342 = vmatmul.bf16.gmra.mxu0 %v1262
        %v1343 = vpop.f32.mrf.mxu0
        %v1344 = vadd.f32 0.0, %v1343
        %v1345 = vpop.f32.mrf.mxu0
        %v1346 = vadd.f32 0.0, %v1345
        %1347 = vmatmul.bf16.gmra.mxu0 %v1265
        %v1348 = vpop.f32.mrf.mxu0
        %v1349 = vadd.f32 0.0, %v1348
        %v1350 = vpop.f32.mrf.mxu0
        %v1351 = vadd.f32 0.0, %v1350
        %1352 = vmatmul.bf16.gmra.mxu0 %v1268
        %v1353 = vpop.f32.mrf.mxu0
        %v1354 = vadd.f32 0.0, %v1353
        %v1355 = vpop.f32.mrf.mxu0
        %v1356 = vadd.f32 0.0, %v1355
        %1357 = vmatmul.bf16.gmra.mxu0 %v1271
        %v1358 = vpop.f32.mrf.mxu0
        %v1359 = vadd.f32 0.0, %v1358
        %v1360 = vpop.f32.mrf.mxu0
        %v1361 = vadd.f32 0.0, %v1360
        %1362 = vmatmul.bf16.gmra.mxu0 %v1274
        %v1363 = vpop.f32.mrf.mxu0
        %v1364 = vadd.f32 0.0, %v1363
        %v1365 = vpop.f32.mrf.mxu0
        %v1366 = vadd.f32 0.0, %v1365
        %1367 = vdwg.mxu0
        %v1368 = vmax.f32 %v1289, %v1299
        %v1369 = vmax.f32 %v1291, %v1301
        %v1370 = vmax.f32 %v1294, %v1304
        %v1371 = vmax.f32 %v1296, %v1306
        %v1372 = vmax.f32 %v1368, %v1309
        %v1373 = vmax.f32 %v1369, %v1311
        %v1374 = vmax.f32 %v1370, %v1314
        %v1375 = vmax.f32 %v1371, %v1316
        %v1376 = vmax.f32 %v1372, %v1319
        %v1377 = vmax.f32 %v1373, %v1321
        %v1378 = vmax.f32 %v1374, %v1324
        %v1379 = vmax.f32 %v1375, %v1326
        %v1380 = vmax.f32 %v1376, %v1329
        %v1381 = vmax.f32 %v1377, %v1331
        %v1382 = vmax.f32 %v1378, %v1334
        %v1383 = vmax.f32 %v1379, %v1336
        %v1384 = vmax.f32 %v1380, %v1339
        %v1385 = vmax.f32 %v1381, %v1341
        %v1386 = vmax.f32 %v1382, %v1344
        %v1387 = vmax.f32 %v1383, %v1346
        %v1388 = vmax.f32 %v1384, %v1349
        %v1389 = vmax.f32 %v1385, %v1351
        %v1390 = vmax.f32 %v1386, %v1354
        %v1391 = vmax.f32 %v1387, %v1356
        %v1392 = vmax.f32 %v1388, %v1359
        %v1393 = vmax.f32 %v1389, %v1361
        %v1394 = vmax.f32 %v1390, %v1364
        %v1395 = vmax.f32 %v1391, %v1366
        %v1396 = vmax.f32 %v1392, %v1393
        %v1397 = vmax.f32 %v1394, %v1395
        %v1398 = vmax.f32 %v1396, %v1397
        %v1399 = vrot.slane %v1398, 4
        %v1400 = vmax.f32 %v1398, %v1399
        %v1401 = vrot.slane %v1400, 2
        %v1402 = vmax.f32 %v1400, %v1401
        %v1403 = vrot.slane %v1402, 1
        %v1404 = vmax.f32 %v1402, %v1403
        %v1405 = vsub.f32 %v1289, %v1404
        %v1406 = vsub.f32 %v1291, %v1404
        %v1407 = vsub.f32 %v1294, %v1404
        %v1408 = vsub.f32 %v1296, %v1404
        %v1409 = vsub.f32 %v1299, %v1404
        %v1410 = vsub.f32 %v1301, %v1404
        %v1411 = vsub.f32 %v1304, %v1404
        %v1412 = vsub.f32 %v1306, %v1404
        %v1413 = vsub.f32 %v1309, %v1404
        %v1414 = vsub.f32 %v1311, %v1404
        %v1415 = vsub.f32 %v1314, %v1404
        %v1416 = vsub.f32 %v1316, %v1404
        %v1417 = vsub.f32 %v1319, %v1404
        %v1418 = vsub.f32 %v1321, %v1404
        %v1419 = vsub.f32 %v1324, %v1404
        %v1420 = vsub.f32 %v1326, %v1404
        %v1421 = vsub.f32 %v1329, %v1404
        %v1422 = vsub.f32 %v1331, %v1404
        %v1423 = vsub.f32 %v1334, %v1404
        %v1424 = vsub.f32 %v1336, %v1404
        %v1425 = vsub.f32 %v1339, %v1404
        %v1426 = vsub.f32 %v1341, %v1404
        %v1427 = vsub.f32 %v1344, %v1404
        %v1428 = vsub.f32 %v1346, %v1404
        %v1429 = vsub.f32 %v1349, %v1404
        %v1430 = vsub.f32 %v1351, %v1404
        %v1431 = vsub.f32 %v1354, %v1404
        %v1432 = vsub.f32 %v1356, %v1404
        %v1433 = vsub.f32 %v1359, %v1404
        %v1434 = vsub.f32 %v1361, %v1404
        %v1435 = vsub.f32 %v1364, %v1404
        %v1436 = vsub.f32 %v1366, %v1404
        %v1437 = vmul.f32 %v1405, 1.442695
        %v1438 = vpow.pop %v1437
        %v1439 = vmul.f32 %v1406, 1.442695
        %v1440 = vpow.pop %v1439
        %v1441 = vmul.f32 %v1407, 1.442695
        %v1442 = vpow.pop %v1441
        %v1443 = vmul.f32 %v1408, 1.442695
        %v1444 = vpow.pop %v1443
        %v1445 = vmul.f32 %v1409, 1.442695
        %v1446 = vpow.pop %v1445
        %v1447 = vmul.f32 %v1410, 1.442695
        %v1448 = vpow.pop %v1447
        %v1449 = vmul.f32 %v1411, 1.442695
        %v1450 = vpow.pop %v1449
        %v1451 = vmul.f32 %v1412, 1.442695
        %v1452 = vpow.pop %v1451
        %v1453 = vmul.f32 %v1413, 1.442695
        %v1454 = vpow.pop %v1453
        %v1455 = vmul.f32 %v1414, 1.442695
        %v1456 = vpow.pop %v1455
        %v1457 = vmul.f32 %v1415, 1.442695
        %v1458 = vpow.pop %v1457
        %v1459 = vmul.f32 %v1416, 1.442695
        %v1460 = vpow.pop %v1459
        %v1461 = vmul.f32 %v1417, 1.442695
        %v1462 = vpow.pop %v1461
        %v1463 = vmul.f32 %v1418, 1.442695
        %v1464 = vpow.pop %v1463
        %v1465 = vmul.f32 %v1419, 1.442695
        %v1466 = vpow.pop %v1465
        %v1467 = vmul.f32 %v1420, 1.442695
        %v1468 = vpow.pop %v1467
        %v1469 = vmul.f32 %v1421, 1.442695
        %v1470 = vpow.pop %v1469
        %v1471 = vmul.f32 %v1422, 1.442695
        %v1472 = vpow.pop %v1471
        %v1473 = vmul.f32 %v1423, 1.442695
        %v1474 = vpow.pop %v1473
        %v1475 = vmul.f32 %v1424, 1.442695
        %v1476 = vpow.pop %v1475
        %v1477 = vmul.f32 %v1425, 1.442695
        %v1478 = vpow.pop %v1477
        %v1479 = vmul.f32 %v1426, 1.442695
        %v1480 = vpow.pop %v1479
        %v1481 = vmul.f32 %v1427, 1.442695
        %v1482 = vpow.pop %v1481
        %v1483 = vmul.f32 %v1428, 1.442695
        %v1484 = vpow.pop %v1483
        %v1485 = vmul.f32 %v1429, 1.442695
        %v1486 = vpow.pop %v1485
        %v1487 = vmul.f32 %v1430, 1.442695
        %v1488 = vpow.pop %v1487
        %v1489 = vmul.f32 %v1431, 1.442695
        %v1490 = vpow.pop %v1489
        %v1491 = vmul.f32 %v1432, 1.442695
        %v1492 = vpow.pop %v1491
        %v1493 = vmul.f32 %v1433, 1.442695
        %v1494 = vpow.pop %v1493
        %v1495 = vmul.f32 %v1434, 1.442695
        %v1496 = vpow.pop %v1495
        %v1497 = vmul.f32 %v1435, 1.442695
        %v1498 = vpow.pop %v1497
        %v1499 = vmul.f32 %v1436, 1.442695
        %v1500 = vpow.pop %v1499
        %v1501 = vadd.f32 %v1438, %v1440
        %v1502 = vadd.f32 %v1501, %v1442
        %v1503 = vadd.f32 %v1502, %v1444
        %v1504 = vadd.f32 %v1503, %v1446
        %v1505 = vadd.f32 %v1504, %v1448
        %v1506 = vadd.f32 %v1505, %v1450
        %v1507 = vadd.f32 %v1506, %v1452
        %v1508 = vadd.f32 %v1507, %v1454
        %v1509 = vadd.f32 %v1508, %v1456
        %v1510 = vadd.f32 %v1509, %v1458
        %v1511 = vadd.f32 %v1510, %v1460
        %v1512 = vadd.f32 %v1511, %v1462
        %v1513 = vadd.f32 %v1512, %v1464
        %v1514 = vadd.f32 %v1513, %v1466
        %v1515 = vadd.f32 %v1514, %v1468
        %v1516 = vadd.f32 %v1515, %v1470
        %v1517 = vadd.f32 %v1516, %v1472
        %v1518 = vadd.f32 %v1517, %v1474
        %v1519 = vadd.f32 %v1518, %v1476
        %v1520 = vadd.f32 %v1519, %v1478
        %v1521 = vadd.f32 %v1520, %v1480
        %v1522 = vadd.f32 %v1521, %v1482
        %v1523 = vadd.f32 %v1522, %v1484
        %v1524 = vadd.f32 %v1523, %v1486
        %v1525 = vadd.f32 %v1524, %v1488
        %v1526 = vadd.f32 %v1525, %v1490
        %v1527 = vadd.f32 %v1526, %v1492
        %v1528 = vadd.f32 %v1527, %v1494
        %v1529 = vadd.f32 %v1528, %v1496
        %v1530 = vadd.f32 %v1529, %v1498
        %v1531 = vadd.f32 %v1530, %v1500
        %v1532 = vrot.slane %v1531, 4
        %v1533 = vadd.f32 %v1531, %v1532
        %v1534 = vrot.slane %v1533, 2
        %v1535 = vadd.f32 %v1533, %v1534
        %v1536 = vrot.slane %v1535, 1
        %v1537 = vadd.f32 %v1535, %v1536
        %v1538 = vrcp.pop %v1537
        %v1539 = vmul.f32 %v1438, %v1538
        %v1540 = vmul.f32 %v1440, %v1538
        %v1541 = vmul.f32 %v1442, %v1538
        %v1542 = vmul.f32 %v1444, %v1538
        %v1543 = vmul.f32 %v1446, %v1538
        %v1544 = vmul.f32 %v1448, %v1538
        %v1545 = vmul.f32 %v1450, %v1538
        %v1546 = vmul.f32 %v1452, %v1538
        %v1547 = vmul.f32 %v1454, %v1538
        %v1548 = vmul.f32 %v1456, %v1538
        %v1549 = vmul.f32 %v1458, %v1538
        %v1550 = vmul.f32 %v1460, %v1538
        %v1551 = vmul.f32 %v1462, %v1538
        %v1552 = vmul.f32 %v1464, %v1538
        %v1553 = vmul.f32 %v1466, %v1538
        %v1554 = vmul.f32 %v1468, %v1538
        %v1555 = vmul.f32 %v1470, %v1538
        %v1556 = vmul.f32 %v1472, %v1538
        %v1557 = vmul.f32 %v1474, %v1538
        %v1558 = vmul.f32 %v1476, %v1538
        %v1559 = vmul.f32 %v1478, %v1538
        %v1560 = vmul.f32 %v1480, %v1538
        %v1561 = vmul.f32 %v1482, %v1538
        %v1562 = vmul.f32 %v1484, %v1538
        %v1563 = vmul.f32 %v1486, %v1538
        %v1564 = vmul.f32 %v1488, %v1538
        %v1565 = vmul.f32 %v1490, %v1538
        %v1566 = vmul.f32 %v1492, %v1538
        %v1567 = vmul.f32 %v1494, %v1538
        %v1568 = vmul.f32 %v1496, %v1538
        %v1569 = vmul.f32 %v1498, %v1538
        %v1570 = vmul.f32 %v1500, %v1538
        %v1571 = vpack.c.bf16 %v1540, %v1539
        %v1572 = vpack.c.bf16 %v1542, %v1541
        %v1573 = vpack.c.bf16 %v1544, %v1543
        %v1574 = vpack.c.bf16 %v1546, %v1545
        %v1575 = vpack.c.bf16 %v1548, %v1547
        %v1576 = vpack.c.bf16 %v1550, %v1549
        %v1577 = vpack.c.bf16 %v1552, %v1551
        %v1578 = vpack.c.bf16 %v1554, %v1553
        %v1579 = vpack.c.bf16 %v1556, %v1555
        %v1580 = vpack.c.bf16 %v1558, %v1557
        %v1581 = vpack.c.bf16 %v1560, %v1559
        %v1582 = vpack.c.bf16 %v1562, %v1561
        %v1583 = vpack.c.bf16 %v1564, %v1563
        %v1584 = vpack.c.bf16 %v1566, %v1565
        %v1585 = vpack.c.bf16 %v1568, %v1567
        %v1586 = vpack.c.bf16 %v1570, %v1569
        %1587 = vmatpush.bf16.msra.mxu0 %v1578
        %1588 = vmatpush.bf16.msra.mxu0 %v1577
        %1589 = vmatpush.bf16.msra.mxu0 %v1576
        %1590 = vmatpush.bf16.msra.mxu0 %v1575
        %1591 = vmatpush.bf16.msra.mxu0 %v1574
        %1592 = vmatpush.bf16.msra.mxu0 %v1573
        %1593 = vmatpush.bf16.msra.mxu0 %v1572
        %1594 = vmatpush.bf16.msra.mxu0 %v1571
        %1595 = vmatmul.bf16.gmra.mxu0 %v1202
        %v1596 = vpop.f32.mrf.mxu0
        %v1597 = vadd.f32 0.0, %v1596
        %v1598 = vpop.f32.mrf.mxu0
        %1599 = vdwg.mxu0
        %1600 = vmatpush.bf16.msra.mxu0 %v1586
        %1601 = vmatpush.bf16.msra.mxu0 %v1585
        %1602 = vmatpush.bf16.msra.mxu0 %v1584
        %1603 = vmatpush.bf16.msra.mxu0 %v1583
        %1604 = vmatpush.bf16.msra.mxu0 %v1582
        %1605 = vmatpush.bf16.msra.mxu0 %v1581
        %1606 = vmatpush.bf16.msra.mxu0 %v1580
        %1607 = vmatpush.bf16.msra.mxu0 %v1579
        %1608 = vmatmul.bf16.gmra.mxu0 %v1203
        %v1609 = vpop.f32.mrf.mxu0
        %v1610 = vadd.f32 %v1597, %v1609
        %v1611 = vpop.f32.mrf.mxu0
        %1612 = vdwg.mxu0
        %v1613 = vpack.c.bf16 %v1196, %v1196
        %v1614 = vpack.c.bf16 %v1610, %v1610
        %1615 = vst [vmem:[#allocation3] sm:$0xf] %v1613
        %1616 = vst [vmem:[#allocation3 + $0x4] sm:$0xf] %v1614
        %v1617 = vld [vmem:[%s766 + $0x10] sm:$0xf]
        %v1618 = vld [vmem:[%s766 + $0x18] sm:$0xf]
        %v1619 = vunpack.c.l.bf16 %v1617
        %v1620 = vunpack.c.l.bf16 %v1618
        %v1621 = vld [vmem:[#allocation2 + $0x50] sm:$0xff]
        %v1622 = vld [vmem:[#allocation2 + $0x58] sm:$0xff]
        %v1623 = vunpack.c.l.bf16 %v1621
        %v1624 = vunpack.c.h.bf16 %v1621
        %v1625 = vunpack.c.l.bf16 %v1622
        %v1626 = vunpack.c.h.bf16 %v1622
        %v1627 = vld [vmem:[#allocation2 + $0x90] sm:$0xff]
        %v1628 = vld [vmem:[#allocation2 + $0x98] sm:$0xff]
        %v1629 = vunpack.c.l.bf16 %v1627
        %v1630 = vunpack.c.h.bf16 %v1627
        %v1631 = vunpack.c.l.bf16 %v1628
        %v1632 = vunpack.c.h.bf16 %v1628
        %v1633 = vpack.c.bf16 %v1619, %v1619
        %v1634 = vpack.c.bf16 %v1623, %v1623
        %v1635 = vpack.c.bf16 %v1624, %v1624
        %v1636 = vpack.c.bf16 %v1629, %v1629
        %v1637 = vpack.c.bf16 %v1630, %v1630
        %1638 = vxpose.binary.xlu0.c.b16.start [1/16] %v1635, %v1634, 128
        %1639 = vxpose.binary.xlu0.c.b16.cont [2/16] 0, 0, 128
        %1640 = vxpose.binary.xlu0.c.b16.cont [3/16] 0, 0, 128
        %1641 = vxpose.binary.xlu0.c.b16.cont [4/16] 0, 0, 128
        %1642 = vxpose.binary.xlu0.c.b16.cont [5/16] 0, 0, 128
        %1643 = vxpose.binary.xlu0.c.b16.cont [6/16] 0, 0, 128
        %1644 = vxpose.binary.xlu0.c.b16.cont [7/16] 0, 0, 128
        %1645 = vxpose.binary.xlu0.c.b16.end [8/16] 0, 0, 128
        %v1646 = vpop.trf.xlu0
        %v1647 = vpop.trf.xlu0
        %v1648 = vpop.trf.xlu0
        %v1649 = vpop.trf.xlu0
        %v1650 = vpop.trf.xlu0
        %v1651 = vpop.trf.xlu0
        %v1652 = vpop.trf.xlu0
        %v1653 = vpop.trf.xlu0
        %v1654 = vpop.trf.xlu0
        %v1655 = vpop.trf.xlu0
        %v1656 = vpop.trf.xlu0
        %v1657 = vpop.trf.xlu0
        %v1658 = vpop.trf.xlu0
        %v1659 = vpop.trf.xlu0
        %v1660 = vpop.trf.xlu0
        %v1661 = vpop.trf.xlu0
        %v1663 = vsel %vm812, %v1646, 0
        %v1666 = vsel %vm812, %v1648, 0
        %v1669 = vsel %vm812, %v1650, 0
        %v1672 = vsel %vm812, %v1652, 0
        %v1675 = vsel %vm812, %v1654, 0
        %v1678 = vsel %vm812, %v1656, 0
        %v1681 = vsel %vm812, %v1658, 0
        %v1684 = vsel %vm812, %v1660, 0
        %v1687 = vsel %vm812, %v1647, 0
        %v1690 = vsel %vm812, %v1649, 0
        %v1693 = vsel %vm812, %v1651, 0
        %v1696 = vsel %vm812, %v1653, 0
        %v1699 = vsel %vm812, %v1655, 0
        %v1702 = vsel %vm812, %v1657, 0
        %v1705 = vsel %vm812, %v1659, 0
        %v1708 = vsel %vm812, %v1661, 0
        %v1711 = vsel %vm861, %v1633, 0
        %1713 = vmatpush.bf16.msra.mxu0 0
        %1714 = vmatpush.bf16.msra.mxu0 0
        %1715 = vmatpush.bf16.msra.mxu0 0
        %1716 = vmatpush.bf16.msra.mxu0 0
        %1717 = vmatpush.bf16.msra.mxu0 0
        %1718 = vmatpush.bf16.msra.mxu0 0
        %1719 = vmatpush.bf16.msra.mxu0 0
        %1720 = vmatpush.bf16.msra.mxu0 %v1711
        %1721 = vmatmul.bf16.gmra.mxu0 %v1663
        %v1722 = vpop.f32.mrf.mxu0
        %v1723 = vadd.f32 0.0, %v1722
        %v1724 = vpop.f32.mrf.mxu0
        %v1725 = vadd.f32 0.0, %v1724
        %1726 = vmatmul.bf16.gmra.mxu0 %v1666
        %v1727 = vpop.f32.mrf.mxu0
        %v1728 = vadd.f32 0.0, %v1727
        %v1729 = vpop.f32.mrf.mxu0
        %v1730 = vadd.f32 0.0, %v1729
        %1731 = vmatmul.bf16.gmra.mxu0 %v1669
        %v1732 = vpop.f32.mrf.mxu0
        %v1733 = vadd.f32 0.0, %v1732
        %v1734 = vpop.f32.mrf.mxu0
        %v1735 = vadd.f32 0.0, %v1734
        %1736 = vmatmul.bf16.gmra.mxu0 %v1672
        %v1737 = vpop.f32.mrf.mxu0
        %v1738 = vadd.f32 0.0, %v1737
        %v1739 = vpop.f32.mrf.mxu0
        %v1740 = vadd.f32 0.0, %v1739
        %1741 = vmatmul.bf16.gmra.mxu0 %v1675
        %v1742 = vpop.f32.mrf.mxu0
        %v1743 = vadd.f32 0.0, %v1742
        %v1744 = vpop.f32.mrf.mxu0
        %v1745 = vadd.f32 0.0, %v1744
        %1746 = vmatmul.bf16.gmra.mxu0 %v1678
        %v1747 = vpop.f32.mrf.mxu0
        %v1748 = vadd.f32 0.0, %v1747
        %v1749 = vpop.f32.mrf.mxu0
        %v1750 = vadd.f32 0.0, %v1749
        %1751 = vmatmul.bf16.gmra.mxu0 %v1681
        %v1752 = vpop.f32.mrf.mxu0
        %v1753 = vadd.f32 0.0, %v1752
        %v1754 = vpop.f32.mrf.mxu0
        %v1755 = vadd.f32 0.0, %v1754
        %1756 = vmatmul.bf16.gmra.mxu0 %v1684
        %v1757 = vpop.f32.mrf.mxu0
        %v1758 = vadd.f32 0.0, %v1757
        %v1759 = vpop.f32.mrf.mxu0
        %v1760 = vadd.f32 0.0, %v1759
        %1761 = vmatmul.bf16.gmra.mxu0 %v1687
        %v1762 = vpop.f32.mrf.mxu0
        %v1763 = vadd.f32 0.0, %v1762
        %v1764 = vpop.f32.mrf.mxu0
        %v1765 = vadd.f32 0.0, %v1764
        %1766 = vmatmul.bf16.gmra.mxu0 %v1690
        %v1767 = vpop.f32.mrf.mxu0
        %v1768 = vadd.f32 0.0, %v1767
        %v1769 = vpop.f32.mrf.mxu0
        %v1770 = vadd.f32 0.0, %v1769
        %1771 = vmatmul.bf16.gmra.mxu0 %v1693
        %v1772 = vpop.f32.mrf.mxu0
        %v1773 = vadd.f32 0.0, %v1772
        %v1774 = vpop.f32.mrf.mxu0
        %v1775 = vadd.f32 0.0, %v1774
        %1776 = vmatmul.bf16.gmra.mxu0 %v1696
        %v1777 = vpop.f32.mrf.mxu0
        %v1778 = vadd.f32 0.0, %v1777
        %v1779 = vpop.f32.mrf.mxu0
        %v1780 = vadd.f32 0.0, %v1779
        %1781 = vmatmul.bf16.gmra.mxu0 %v1699
        %v1782 = vpop.f32.mrf.mxu0
        %v1783 = vadd.f32 0.0, %v1782
        %v1784 = vpop.f32.mrf.mxu0
        %v1785 = vadd.f32 0.0, %v1784
        %1786 = vmatmul.bf16.gmra.mxu0 %v1702
        %v1787 = vpop.f32.mrf.mxu0
        %v1788 = vadd.f32 0.0, %v1787
        %v1789 = vpop.f32.mrf.mxu0
        %v1790 = vadd.f32 0.0, %v1789
        %1791 = vmatmul.bf16.gmra.mxu0 %v1705
        %v1792 = vpop.f32.mrf.mxu0
        %v1793 = vadd.f32 0.0, %v1792
        %v1794 = vpop.f32.mrf.mxu0
        %v1795 = vadd.f32 0.0, %v1794
        %1796 = vmatmul.bf16.gmra.mxu0 %v1708
        %v1797 = vpop.f32.mrf.mxu0
        %v1798 = vadd.f32 0.0, %v1797
        %v1799 = vpop.f32.mrf.mxu0
        %v1800 = vadd.f32 0.0, %v1799
        %1801 = vdwg.mxu0
        %v1802 = vmax.f32 %v1723, %v1733
        %v1803 = vmax.f32 %v1725, %v1735
        %v1804 = vmax.f32 %v1728, %v1738
        %v1805 = vmax.f32 %v1730, %v1740
        %v1806 = vmax.f32 %v1802, %v1743
        %v1807 = vmax.f32 %v1803, %v1745
        %v1808 = vmax.f32 %v1804, %v1748
        %v1809 = vmax.f32 %v1805, %v1750
        %v1810 = vmax.f32 %v1806, %v1753
        %v1811 = vmax.f32 %v1807, %v1755
        %v1812 = vmax.f32 %v1808, %v1758
        %v1813 = vmax.f32 %v1809, %v1760
        %v1814 = vmax.f32 %v1810, %v1763
        %v1815 = vmax.f32 %v1811, %v1765
        %v1816 = vmax.f32 %v1812, %v1768
        %v1817 = vmax.f32 %v1813, %v1770
        %v1818 = vmax.f32 %v1814, %v1773
        %v1819 = vmax.f32 %v1815, %v1775
        %v1820 = vmax.f32 %v1816, %v1778
        %v1821 = vmax.f32 %v1817, %v1780
        %v1822 = vmax.f32 %v1818, %v1783
        %v1823 = vmax.f32 %v1819, %v1785
        %v1824 = vmax.f32 %v1820, %v1788
        %v1825 = vmax.f32 %v1821, %v1790
        %v1826 = vmax.f32 %v1822, %v1793
        %v1827 = vmax.f32 %v1823, %v1795
        %v1828 = vmax.f32 %v1824, %v1798
        %v1829 = vmax.f32 %v1825, %v1800
        %v1830 = vmax.f32 %v1826, %v1827
        %v1831 = vmax.f32 %v1828, %v1829
        %v1832 = vmax.f32 %v1830, %v1831
        %v1833 = vrot.slane %v1832, 4
        %v1834 = vmax.f32 %v1832, %v1833
        %v1835 = vrot.slane %v1834, 2
        %v1836 = vmax.f32 %v1834, %v1835
        %v1837 = vrot.slane %v1836, 1
        %v1838 = vmax.f32 %v1836, %v1837
        %v1839 = vsub.f32 %v1723, %v1838
        %v1840 = vsub.f32 %v1725, %v1838
        %v1841 = vsub.f32 %v1728, %v1838
        %v1842 = vsub.f32 %v1730, %v1838
        %v1843 = vsub.f32 %v1733, %v1838
        %v1844 = vsub.f32 %v1735, %v1838
        %v1845 = vsub.f32 %v1738, %v1838
        %v1846 = vsub.f32 %v1740, %v1838
        %v1847 = vsub.f32 %v1743, %v1838
        %v1848 = vsub.f32 %v1745, %v1838
        %v1849 = vsub.f32 %v1748, %v1838
        %v1850 = vsub.f32 %v1750, %v1838
        %v1851 = vsub.f32 %v1753, %v1838
        %v1852 = vsub.f32 %v1755, %v1838
        %v1853 = vsub.f32 %v1758, %v1838
        %v1854 = vsub.f32 %v1760, %v1838
        %v1855 = vsub.f32 %v1763, %v1838
        %v1856 = vsub.f32 %v1765, %v1838
        %v1857 = vsub.f32 %v1768, %v1838
        %v1858 = vsub.f32 %v1770, %v1838
        %v1859 = vsub.f32 %v1773, %v1838
        %v1860 = vsub.f32 %v1775, %v1838
        %v1861 = vsub.f32 %v1778, %v1838
        %v1862 = vsub.f32 %v1780, %v1838
        %v1863 = vsub.f32 %v1783, %v1838
        %v1864 = vsub.f32 %v1785, %v1838
        %v1865 = vsub.f32 %v1788, %v1838
        %v1866 = vsub.f32 %v1790, %v1838
        %v1867 = vsub.f32 %v1793, %v1838
        %v1868 = vsub.f32 %v1795, %v1838
        %v1869 = vsub.f32 %v1798, %v1838
        %v1870 = vsub.f32 %v1800, %v1838
        %v1871 = vmul.f32 %v1839, 1.442695
        %v1872 = vpow.pop %v1871
        %v1873 = vmul.f32 %v1840, 1.442695
        %v1874 = vpow.pop %v1873
        %v1875 = vmul.f32 %v1841, 1.442695
        %v1876 = vpow.pop %v1875
        %v1877 = vmul.f32 %v1842, 1.442695
        %v1878 = vpow.pop %v1877
        %v1879 = vmul.f32 %v1843, 1.442695
        %v1880 = vpow.pop %v1879
        %v1881 = vmul.f32 %v1844, 1.442695
        %v1882 = vpow.pop %v1881
        %v1883 = vmul.f32 %v1845, 1.442695
        %v1884 = vpow.pop %v1883
        %v1885 = vmul.f32 %v1846, 1.442695
        %v1886 = vpow.pop %v1885
        %v1887 = vmul.f32 %v1847, 1.442695
        %v1888 = vpow.pop %v1887
        %v1889 = vmul.f32 %v1848, 1.442695
        %v1890 = vpow.pop %v1889
        %v1891 = vmul.f32 %v1849, 1.442695
        %v1892 = vpow.pop %v1891
        %v1893 = vmul.f32 %v1850, 1.442695
        %v1894 = vpow.pop %v1893
        %v1895 = vmul.f32 %v1851, 1.442695
        %v1896 = vpow.pop %v1895
        %v1897 = vmul.f32 %v1852, 1.442695
        %v1898 = vpow.pop %v1897
        %v1899 = vmul.f32 %v1853, 1.442695
        %v1900 = vpow.pop %v1899
        %v1901 = vmul.f32 %v1854, 1.442695
        %v1902 = vpow.pop %v1901
        %v1903 = vmul.f32 %v1855, 1.442695
        %v1904 = vpow.pop %v1903
        %v1905 = vmul.f32 %v1856, 1.442695
        %v1906 = vpow.pop %v1905
        %v1907 = vmul.f32 %v1857, 1.442695
        %v1908 = vpow.pop %v1907
        %v1909 = vmul.f32 %v1858, 1.442695
        %v1910 = vpow.pop %v1909
        %v1911 = vmul.f32 %v1859, 1.442695
        %v1912 = vpow.pop %v1911
        %v1913 = vmul.f32 %v1860, 1.442695
        %v1914 = vpow.pop %v1913
        %v1915 = vmul.f32 %v1861, 1.442695
        %v1916 = vpow.pop %v1915
        %v1917 = vmul.f32 %v1862, 1.442695
        %v1918 = vpow.pop %v1917
        %v1919 = vmul.f32 %v1863, 1.442695
        %v1920 = vpow.pop %v1919
        %v1921 = vmul.f32 %v1864, 1.442695
        %v1922 = vpow.pop %v1921
        %v1923 = vmul.f32 %v1865, 1.442695
        %v1924 = vpow.pop %v1923
        %v1925 = vmul.f32 %v1866, 1.442695
        %v1926 = vpow.pop %v1925
        %v1927 = vmul.f32 %v1867, 1.442695
        %v1928 = vpow.pop %v1927
        %v1929 = vmul.f32 %v1868, 1.442695
        %v1930 = vpow.pop %v1929
        %v1931 = vmul.f32 %v1869, 1.442695
        %v1932 = vpow.pop %v1931
        %v1933 = vmul.f32 %v1870, 1.442695
        %v1934 = vpow.pop %v1933
        %v1935 = vadd.f32 %v1872, %v1874
        %v1936 = vadd.f32 %v1935, %v1876
        %v1937 = vadd.f32 %v1936, %v1878
        %v1938 = vadd.f32 %v1937, %v1880
        %v1939 = vadd.f32 %v1938, %v1882
        %v1940 = vadd.f32 %v1939, %v1884
        %v1941 = vadd.f32 %v1940, %v1886
        %v1942 = vadd.f32 %v1941, %v1888
        %v1943 = vadd.f32 %v1942, %v1890
        %v1944 = vadd.f32 %v1943, %v1892
        %v1945 = vadd.f32 %v1944, %v1894
        %v1946 = vadd.f32 %v1945, %v1896
        %v1947 = vadd.f32 %v1946, %v1898
        %v1948 = vadd.f32 %v1947, %v1900
        %v1949 = vadd.f32 %v1948, %v1902
        %v1950 = vadd.f32 %v1949, %v1904
        %v1951 = vadd.f32 %v1950, %v1906
        %v1952 = vadd.f32 %v1951, %v1908
        %v1953 = vadd.f32 %v1952, %v1910
        %v1954 = vadd.f32 %v1953, %v1912
        %v1955 = vadd.f32 %v1954, %v1914
        %v1956 = vadd.f32 %v1955, %v1916
        %v1957 = vadd.f32 %v1956, %v1918
        %v1958 = vadd.f32 %v1957, %v1920
        %v1959 = vadd.f32 %v1958, %v1922
        %v1960 = vadd.f32 %v1959, %v1924
        %v1961 = vadd.f32 %v1960, %v1926
        %v1962 = vadd.f32 %v1961, %v1928
        %v1963 = vadd.f32 %v1962, %v1930
        %v1964 = vadd.f32 %v1963, %v1932
        %v1965 = vadd.f32 %v1964, %v1934
        %v1966 = vrot.slane %v1965, 4
        %v1967 = vadd.f32 %v1965, %v1966
        %v1968 = vrot.slane %v1967, 2
        %v1969 = vadd.f32 %v1967, %v1968
        %v1970 = vrot.slane %v1969, 1
        %v1971 = vadd.f32 %v1969, %v1970
        %v1972 = vrcp.pop %v1971
        %v1973 = vmul.f32 %v1872, %v1972
        %v1974 = vmul.f32 %v1874, %v1972
        %v1975 = vmul.f32 %v1876, %v1972
        %v1976 = vmul.f32 %v1878, %v1972
        %v1977 = vmul.f32 %v1880, %v1972
        %v1978 = vmul.f32 %v1882, %v1972
        %v1979 = vmul.f32 %v1884, %v1972
        %v1980 = vmul.f32 %v1886, %v1972
        %v1981 = vmul.f32 %v1888, %v1972
        %v1982 = vmul.f32 %v1890, %v1972
        %v1983 = vmul.f32 %v1892, %v1972
        %v1984 = vmul.f32 %v1894, %v1972
        %v1985 = vmul.f32 %v1896, %v1972
        %v1986 = vmul.f32 %v1898, %v1972
        %v1987 = vmul.f32 %v1900, %v1972
        %v1988 = vmul.f32 %v1902, %v1972
        %v1989 = vmul.f32 %v1904, %v1972
        %v1990 = vmul.f32 %v1906, %v1972
        %v1991 = vmul.f32 %v1908, %v1972
        %v1992 = vmul.f32 %v1910, %v1972
        %v1993 = vmul.f32 %v1912, %v1972
        %v1994 = vmul.f32 %v1914, %v1972
        %v1995 = vmul.f32 %v1916, %v1972
        %v1996 = vmul.f32 %v1918, %v1972
        %v1997 = vmul.f32 %v1920, %v1972
        %v1998 = vmul.f32 %v1922, %v1972
        %v1999 = vmul.f32 %v1924, %v1972
        %v2000 = vmul.f32 %v1926, %v1972
        %v2001 = vmul.f32 %v1928, %v1972
        %v2002 = vmul.f32 %v1930, %v1972
        %v2003 = vmul.f32 %v1932, %v1972
        %v2004 = vmul.f32 %v1934, %v1972
        %v2005 = vpack.c.bf16 %v1974, %v1973
        %v2006 = vpack.c.bf16 %v1976, %v1975
        %v2007 = vpack.c.bf16 %v1978, %v1977
        %v2008 = vpack.c.bf16 %v1980, %v1979
        %v2009 = vpack.c.bf16 %v1982, %v1981
        %v2010 = vpack.c.bf16 %v1984, %v1983
        %v2011 = vpack.c.bf16 %v1986, %v1985
        %v2012 = vpack.c.bf16 %v1988, %v1987
        %v2013 = vpack.c.bf16 %v1990, %v1989
        %v2014 = vpack.c.bf16 %v1992, %v1991
        %v2015 = vpack.c.bf16 %v1994, %v1993
        %v2016 = vpack.c.bf16 %v1996, %v1995
        %v2017 = vpack.c.bf16 %v1998, %v1997
        %v2018 = vpack.c.bf16 %v2000, %v1999
        %v2019 = vpack.c.bf16 %v2002, %v2001
        %v2020 = vpack.c.bf16 %v2004, %v2003
        %2021 = vmatpush.bf16.msra.mxu0 %v2012
        %2022 = vmatpush.bf16.msra.mxu0 %v2011
        %2023 = vmatpush.bf16.msra.mxu0 %v2010
        %2024 = vmatpush.bf16.msra.mxu0 %v2009
        %2025 = vmatpush.bf16.msra.mxu0 %v2008
        %2026 = vmatpush.bf16.msra.mxu0 %v2007
        %2027 = vmatpush.bf16.msra.mxu0 %v2006
        %2028 = vmatpush.bf16.msra.mxu0 %v2005
        %2029 = vmatmul.bf16.gmra.mxu0 %v1636
        %v2030 = vpop.f32.mrf.mxu0
        %v2031 = vadd.f32 0.0, %v2030
        %v2032 = vpop.f32.mrf.mxu0
        %2033 = vdwg.mxu0
        %2034 = vmatpush.bf16.msra.mxu0 %v2020
        %2035 = vmatpush.bf16.msra.mxu0 %v2019
        %2036 = vmatpush.bf16.msra.mxu0 %v2018
        %2037 = vmatpush.bf16.msra.mxu0 %v2017
        %2038 = vmatpush.bf16.msra.mxu0 %v2016
        %2039 = vmatpush.bf16.msra.mxu0 %v2015
        %2040 = vmatpush.bf16.msra.mxu0 %v2014
        %2041 = vmatpush.bf16.msra.mxu0 %v2013
        %2042 = vmatmul.bf16.gmra.mxu0 %v1637
        %v2043 = vpop.f32.mrf.mxu0
        %v2044 = vadd.f32 %v2031, %v2043
        %v2045 = vpop.f32.mrf.mxu0
        %2046 = vdwg.mxu0
        %v2047 = vpack.c.bf16 %v1620, %v1620
        %v2048 = vpack.c.bf16 %v1625, %v1625
        %v2049 = vpack.c.bf16 %v1626, %v1626
        %v2050 = vpack.c.bf16 %v1631, %v1631
        %v2051 = vpack.c.bf16 %v1632, %v1632
        %2052 = vxpose.binary.xlu0.c.b16.start [1/16] %v2049, %v2048, 128
        %2053 = vxpose.binary.xlu0.c.b16.cont [2/16] 0, 0, 128
        %2054 = vxpose.binary.xlu0.c.b16.cont [3/16] 0, 0, 128
        %2055 = vxpose.binary.xlu0.c.b16.cont [4/16] 0, 0, 128
        %2056 = vxpose.binary.xlu0.c.b16.cont [5/16] 0, 0, 128
        %2057 = vxpose.binary.xlu0.c.b16.cont [6/16] 0, 0, 128
        %2058 = vxpose.binary.xlu0.c.b16.cont [7/16] 0, 0, 128
        %2059 = vxpose.binary.xlu0.c.b16.end [8/16] 0, 0, 128
        %v2060 = vpop.trf.xlu0
        %v2061 = vpop.trf.xlu0
        %v2062 = vpop.trf.xlu0
        %v2063 = vpop.trf.xlu0
        %v2064 = vpop.trf.xlu0
        %v2065 = vpop.trf.xlu0
        %v2066 = vpop.trf.xlu0
        %v2067 = vpop.trf.xlu0
        %v2068 = vpop.trf.xlu0
        %v2069 = vpop.trf.xlu0
        %v2070 = vpop.trf.xlu0
        %v2071 = vpop.trf.xlu0
        %v2072 = vpop.trf.xlu0
        %v2073 = vpop.trf.xlu0
        %v2074 = vpop.trf.xlu0
        %v2075 = vpop.trf.xlu0
        %v2077 = vsel %vm812, %v2060, 0
        %v2080 = vsel %vm812, %v2062, 0
        %v2083 = vsel %vm812, %v2064, 0
        %v2086 = vsel %vm812, %v2066, 0
        %v2089 = vsel %vm812, %v2068, 0
        %v2092 = vsel %vm812, %v2070, 0
        %v2095 = vsel %vm812, %v2072, 0
        %v2098 = vsel %vm812, %v2074, 0
        %v2101 = vsel %vm812, %v2061, 0
        %v2104 = vsel %vm812, %v2063, 0
        %v2107 = vsel %vm812, %v2065, 0
        %v2110 = vsel %vm812, %v2067, 0
        %v2113 = vsel %vm812, %v2069, 0
        %v2116 = vsel %vm812, %v2071, 0
        %v2119 = vsel %vm812, %v2073, 0
        %v2122 = vsel %vm812, %v2075, 0
        %v2125 = vsel %vm861, %v2047, 0
        %2127 = vmatpush.bf16.msra.mxu0 0
        %2128 = vmatpush.bf16.msra.mxu0 0
        %2129 = vmatpush.bf16.msra.mxu0 0
        %2130 = vmatpush.bf16.msra.mxu0 0
        %2131 = vmatpush.bf16.msra.mxu0 0
        %2132 = vmatpush.bf16.msra.mxu0 0
        %2133 = vmatpush.bf16.msra.mxu0 0
        %2134 = vmatpush.bf16.msra.mxu0 %v2125
        %2135 = vmatmul.bf16.gmra.mxu0 %v2077
        %v2136 = vpop.f32.mrf.mxu0
        %v2137 = vadd.f32 0.0, %v2136
        %v2138 = vpop.f32.mrf.mxu0
        %v2139 = vadd.f32 0.0, %v2138
        %2140 = vmatmul.bf16.gmra.mxu0 %v2080
        %v2141 = vpop.f32.mrf.mxu0
        %v2142 = vadd.f32 0.0, %v2141
        %v2143 = vpop.f32.mrf.mxu0
        %v2144 = vadd.f32 0.0, %v2143
        %2145 = vmatmul.bf16.gmra.mxu0 %v2083
        %v2146 = vpop.f32.mrf.mxu0
        %v2147 = vadd.f32 0.0, %v2146
        %v2148 = vpop.f32.mrf.mxu0
        %v2149 = vadd.f32 0.0, %v2148
        %2150 = vmatmul.bf16.gmra.mxu0 %v2086
        %v2151 = vpop.f32.mrf.mxu0
        %v2152 = vadd.f32 0.0, %v2151
        %v2153 = vpop.f32.mrf.mxu0
        %v2154 = vadd.f32 0.0, %v2153
        %2155 = vmatmul.bf16.gmra.mxu0 %v2089
        %v2156 = vpop.f32.mrf.mxu0
        %v2157 = vadd.f32 0.0, %v2156
        %v2158 = vpop.f32.mrf.mxu0
        %v2159 = vadd.f32 0.0, %v2158
        %2160 = vmatmul.bf16.gmra.mxu0 %v2092
        %v2161 = vpop.f32.mrf.mxu0
        %v2162 = vadd.f32 0.0, %v2161
        %v2163 = vpop.f32.mrf.mxu0
        %v2164 = vadd.f32 0.0, %v2163
        %2165 = vmatmul.bf16.gmra.mxu0 %v2095
        %v2166 = vpop.f32.mrf.mxu0
        %v2167 = vadd.f32 0.0, %v2166
        %v2168 = vpop.f32.mrf.mxu0
        %v2169 = vadd.f32 0.0, %v2168
        %2170 = vmatmul.bf16.gmra.mxu0 %v2098
        %v2171 = vpop.f32.mrf.mxu0
        %v2172 = vadd.f32 0.0, %v2171
        %v2173 = vpop.f32.mrf.mxu0
        %v2174 = vadd.f32 0.0, %v2173
        %2175 = vmatmul.bf16.gmra.mxu0 %v2101
        %v2176 = vpop.f32.mrf.mxu0
        %v2177 = vadd.f32 0.0, %v2176
        %v2178 = vpop.f32.mrf.mxu0
        %v2179 = vadd.f32 0.0, %v2178
        %2180 = vmatmul.bf16.gmra.mxu0 %v2104
        %v2181 = vpop.f32.mrf.mxu0
        %v2182 = vadd.f32 0.0, %v2181
        %v2183 = vpop.f32.mrf.mxu0
        %v2184 = vadd.f32 0.0, %v2183
        %2185 = vmatmul.bf16.gmra.mxu0 %v2107
        %v2186 = vpop.f32.mrf.mxu0
        %v2187 = vadd.f32 0.0, %v2186
        %v2188 = vpop.f32.mrf.mxu0
        %v2189 = vadd.f32 0.0, %v2188
        %2190 = vmatmul.bf16.gmra.mxu0 %v2110
        %v2191 = vpop.f32.mrf.mxu0
        %v2192 = vadd.f32 0.0, %v2191
        %v2193 = vpop.f32.mrf.mxu0
        %v2194 = vadd.f32 0.0, %v2193
        %2195 = vmatmul.bf16.gmra.mxu0 %v2113
        %v2196 = vpop.f32.mrf.mxu0
        %v2197 = vadd.f32 0.0, %v2196
        %v2198 = vpop.f32.mrf.mxu0
        %v2199 = vadd.f32 0.0, %v2198
        %2200 = vmatmul.bf16.gmra.mxu0 %v2116
        %v2201 = vpop.f32.mrf.mxu0
        %v2202 = vadd.f32 0.0, %v2201
        %v2203 = vpop.f32.mrf.mxu0
        %v2204 = vadd.f32 0.0, %v2203
        %2205 = vmatmul.bf16.gmra.mxu0 %v2119
        %v2206 = vpop.f32.mrf.mxu0
        %v2207 = vadd.f32 0.0, %v2206
        %v2208 = vpop.f32.mrf.mxu0
        %v2209 = vadd.f32 0.0, %v2208
        %2210 = vmatmul.bf16.gmra.mxu0 %v2122
        %v2211 = vpop.f32.mrf.mxu0
        %v2212 = vadd.f32 0.0, %v2211
        %v2213 = vpop.f32.mrf.mxu0
        %v2214 = vadd.f32 0.0, %v2213
        %2215 = vdwg.mxu0
        %v2216 = vmax.f32 %v2137, %v2147
        %v2217 = vmax.f32 %v2139, %v2149
        %v2218 = vmax.f32 %v2142, %v2152
        %v2219 = vmax.f32 %v2144, %v2154
        %v2220 = vmax.f32 %v2216, %v2157
        %v2221 = vmax.f32 %v2217, %v2159
        %v2222 = vmax.f32 %v2218, %v2162
        %v2223 = vmax.f32 %v2219, %v2164
        %v2224 = vmax.f32 %v2220, %v2167
        %v2225 = vmax.f32 %v2221, %v2169
        %v2226 = vmax.f32 %v2222, %v2172
        %v2227 = vmax.f32 %v2223, %v2174
        %v2228 = vmax.f32 %v2224, %v2177
        %v2229 = vmax.f32 %v2225, %v2179
        %v2230 = vmax.f32 %v2226, %v2182
        %v2231 = vmax.f32 %v2227, %v2184
        %v2232 = vmax.f32 %v2228, %v2187
        %v2233 = vmax.f32 %v2229, %v2189
        %v2234 = vmax.f32 %v2230, %v2192
        %v2235 = vmax.f32 %v2231, %v2194
        %v2236 = vmax.f32 %v2232, %v2197
        %v2237 = vmax.f32 %v2233, %v2199
        %v2238 = vmax.f32 %v2234, %v2202
        %v2239 = vmax.f32 %v2235, %v2204
        %v2240 = vmax.f32 %v2236, %v2207
        %v2241 = vmax.f32 %v2237, %v2209
        %v2242 = vmax.f32 %v2238, %v2212
        %v2243 = vmax.f32 %v2239, %v2214
        %v2244 = vmax.f32 %v2240, %v2241
        %v2245 = vmax.f32 %v2242, %v2243
        %v2246 = vmax.f32 %v2244, %v2245
        %v2247 = vrot.slane %v2246, 4
        %v2248 = vmax.f32 %v2246, %v2247
        %v2249 = vrot.slane %v2248, 2
        %v2250 = vmax.f32 %v2248, %v2249
        %v2251 = vrot.slane %v2250, 1
        %v2252 = vmax.f32 %v2250, %v2251
        %v2253 = vsub.f32 %v2137, %v2252
        %v2254 = vsub.f32 %v2139, %v2252
        %v2255 = vsub.f32 %v2142, %v2252
        %v2256 = vsub.f32 %v2144, %v2252
        %v2257 = vsub.f32 %v2147, %v2252
        %v2258 = vsub.f32 %v2149, %v2252
        %v2259 = vsub.f32 %v2152, %v2252
        %v2260 = vsub.f32 %v2154, %v2252
        %v2261 = vsub.f32 %v2157, %v2252
        %v2262 = vsub.f32 %v2159, %v2252
        %v2263 = vsub.f32 %v2162, %v2252
        %v2264 = vsub.f32 %v2164, %v2252
        %v2265 = vsub.f32 %v2167, %v2252
        %v2266 = vsub.f32 %v2169, %v2252
        %v2267 = vsub.f32 %v2172, %v2252
        %v2268 = vsub.f32 %v2174, %v2252
        %v2269 = vsub.f32 %v2177, %v2252
        %v2270 = vsub.f32 %v2179, %v2252
        %v2271 = vsub.f32 %v2182, %v2252
        %v2272 = vsub.f32 %v2184, %v2252
        %v2273 = vsub.f32 %v2187, %v2252
        %v2274 = vsub.f32 %v2189, %v2252
        %v2275 = vsub.f32 %v2192, %v2252
        %v2276 = vsub.f32 %v2194, %v2252
        %v2277 = vsub.f32 %v2197, %v2252
        %v2278 = vsub.f32 %v2199, %v2252
        %v2279 = vsub.f32 %v2202, %v2252
        %v2280 = vsub.f32 %v2204, %v2252
        %v2281 = vsub.f32 %v2207, %v2252
        %v2282 = vsub.f32 %v2209, %v2252
        %v2283 = vsub.f32 %v2212, %v2252
        %v2284 = vsub.f32 %v2214, %v2252
        %v2285 = vmul.f32 %v2253, 1.442695
        %v2286 = vpow.pop %v2285
        %v2287 = vmul.f32 %v2254, 1.442695
        %v2288 = vpow.pop %v2287
        %v2289 = vmul.f32 %v2255, 1.442695
        %v2290 = vpow.pop %v2289
        %v2291 = vmul.f32 %v2256, 1.442695
        %v2292 = vpow.pop %v2291
        %v2293 = vmul.f32 %v2257, 1.442695
        %v2294 = vpow.pop %v2293
        %v2295 = vmul.f32 %v2258, 1.442695
        %v2296 = vpow.pop %v2295
        %v2297 = vmul.f32 %v2259, 1.442695
        %v2298 = vpow.pop %v2297
        %v2299 = vmul.f32 %v2260, 1.442695
        %v2300 = vpow.pop %v2299
        %v2301 = vmul.f32 %v2261, 1.442695
        %v2302 = vpow.pop %v2301
        %v2303 = vmul.f32 %v2262, 1.442695
        %v2304 = vpow.pop %v2303
        %v2305 = vmul.f32 %v2263, 1.442695
        %v2306 = vpow.pop %v2305
        %v2307 = vmul.f32 %v2264, 1.442695
        %v2308 = vpow.pop %v2307
        %v2309 = vmul.f32 %v2265, 1.442695
        %v2310 = vpow.pop %v2309
        %v2311 = vmul.f32 %v2266, 1.442695
        %v2312 = vpow.pop %v2311
        %v2313 = vmul.f32 %v2267, 1.442695
        %v2314 = vpow.pop %v2313
        %v2315 = vmul.f32 %v2268, 1.442695
        %v2316 = vpow.pop %v2315
        %v2317 = vmul.f32 %v2269, 1.442695
        %v2318 = vpow.pop %v2317
        %v2319 = vmul.f32 %v2270, 1.442695
        %v2320 = vpow.pop %v2319
        %v2321 = vmul.f32 %v2271, 1.442695
        %v2322 = vpow.pop %v2321
        %v2323 = vmul.f32 %v2272, 1.442695
        %v2324 = vpow.pop %v2323
        %v2325 = vmul.f32 %v2273, 1.442695
        %v2326 = vpow.pop %v2325
        %v2327 = vmul.f32 %v2274, 1.442695
        %v2328 = vpow.pop %v2327
        %v2329 = vmul.f32 %v2275, 1.442695
        %v2330 = vpow.pop %v2329
        %v2331 = vmul.f32 %v2276, 1.442695
        %v2332 = vpow.pop %v2331
        %v2333 = vmul.f32 %v2277, 1.442695
        %v2334 = vpow.pop %v2333
        %v2335 = vmul.f32 %v2278, 1.442695
        %v2336 = vpow.pop %v2335
        %v2337 = vmul.f32 %v2279, 1.442695
        %v2338 = vpow.pop %v2337
        %v2339 = vmul.f32 %v2280, 1.442695
        %v2340 = vpow.pop %v2339
        %v2341 = vmul.f32 %v2281, 1.442695
        %v2342 = vpow.pop %v2341
        %v2343 = vmul.f32 %v2282, 1.442695
        %v2344 = vpow.pop %v2343
        %v2345 = vmul.f32 %v2283, 1.442695
        %v2346 = vpow.pop %v2345
        %v2347 = vmul.f32 %v2284, 1.442695
        %v2348 = vpow.pop %v2347
        %v2349 = vadd.f32 %v2286, %v2288
        %v2350 = vadd.f32 %v2349, %v2290
        %v2351 = vadd.f32 %v2350, %v2292
        %v2352 = vadd.f32 %v2351, %v2294
        %v2353 = vadd.f32 %v2352, %v2296
        %v2354 = vadd.f32 %v2353, %v2298
        %v2355 = vadd.f32 %v2354, %v2300
        %v2356 = vadd.f32 %v2355, %v2302
        %v2357 = vadd.f32 %v2356, %v2304
        %v2358 = vadd.f32 %v2357, %v2306
        %v2359 = vadd.f32 %v2358, %v2308
        %v2360 = vadd.f32 %v2359, %v2310
        %v2361 = vadd.f32 %v2360, %v2312
        %v2362 = vadd.f32 %v2361, %v2314
        %v2363 = vadd.f32 %v2362, %v2316
        %v2364 = vadd.f32 %v2363, %v2318
        %v2365 = vadd.f32 %v2364, %v2320
        %v2366 = vadd.f32 %v2365, %v2322
        %v2367 = vadd.f32 %v2366, %v2324
        %v2368 = vadd.f32 %v2367, %v2326
        %v2369 = vadd.f32 %v2368, %v2328
        %v2370 = vadd.f32 %v2369, %v2330
        %v2371 = vadd.f32 %v2370, %v2332
        %v2372 = vadd.f32 %v2371, %v2334
        %v2373 = vadd.f32 %v2372, %v2336
        %v2374 = vadd.f32 %v2373, %v2338
        %v2375 = vadd.f32 %v2374, %v2340
        %v2376 = vadd.f32 %v2375, %v2342
        %v2377 = vadd.f32 %v2376, %v2344
        %v2378 = vadd.f32 %v2377, %v2346
        %v2379 = vadd.f32 %v2378, %v2348
        %v2380 = vrot.slane %v2379, 4
        %v2381 = vadd.f32 %v2379, %v2380
        %v2382 = vrot.slane %v2381, 2
        %v2383 = vadd.f32 %v2381, %v2382
        %v2384 = vrot.slane %v2383, 1
        %v2385 = vadd.f32 %v2383, %v2384
        %v2386 = vrcp.pop %v2385
        %v2387 = vmul.f32 %v2286, %v2386
        %v2388 = vmul.f32 %v2288, %v2386
        %v2389 = vmul.f32 %v2290, %v2386
        %v2390 = vmul.f32 %v2292, %v2386
        %v2391 = vmul.f32 %v2294, %v2386
        %v2392 = vmul.f32 %v2296, %v2386
        %v2393 = vmul.f32 %v2298, %v2386
        %v2394 = vmul.f32 %v2300, %v2386
        %v2395 = vmul.f32 %v2302, %v2386
        %v2396 = vmul.f32 %v2304, %v2386
        %v2397 = vmul.f32 %v2306, %v2386
        %v2398 = vmul.f32 %v2308, %v2386
        %v2399 = vmul.f32 %v2310, %v2386
        %v2400 = vmul.f32 %v2312, %v2386
        %v2401 = vmul.f32 %v2314, %v2386
        %v2402 = vmul.f32 %v2316, %v2386
        %v2403 = vmul.f32 %v2318, %v2386
        %v2404 = vmul.f32 %v2320, %v2386
        %v2405 = vmul.f32 %v2322, %v2386
        %v2406 = vmul.f32 %v2324, %v2386
        %v2407 = vmul.f32 %v2326, %v2386
        %v2408 = vmul.f32 %v2328, %v2386
        %v2409 = vmul.f32 %v2330, %v2386
        %v2410 = vmul.f32 %v2332, %v2386
        %v2411 = vmul.f32 %v2334, %v2386
        %v2412 = vmul.f32 %v2336, %v2386
        %v2413 = vmul.f32 %v2338, %v2386
        %v2414 = vmul.f32 %v2340, %v2386
        %v2415 = vmul.f32 %v2342, %v2386
        %v2416 = vmul.f32 %v2344, %v2386
        %v2417 = vmul.f32 %v2346, %v2386
        %v2418 = vmul.f32 %v2348, %v2386
        %v2419 = vpack.c.bf16 %v2388, %v2387
        %v2420 = vpack.c.bf16 %v2390, %v2389
        %v2421 = vpack.c.bf16 %v2392, %v2391
        %v2422 = vpack.c.bf16 %v2394, %v2393
        %v2423 = vpack.c.bf16 %v2396, %v2395
        %v2424 = vpack.c.bf16 %v2398, %v2397
        %v2425 = vpack.c.bf16 %v2400, %v2399
        %v2426 = vpack.c.bf16 %v2402, %v2401
        %v2427 = vpack.c.bf16 %v2404, %v2403
        %v2428 = vpack.c.bf16 %v2406, %v2405
        %v2429 = vpack.c.bf16 %v2408, %v2407
        %v2430 = vpack.c.bf16 %v2410, %v2409
        %v2431 = vpack.c.bf16 %v2412, %v2411
        %v2432 = vpack.c.bf16 %v2414, %v2413
        %v2433 = vpack.c.bf16 %v2416, %v2415
        %v2434 = vpack.c.bf16 %v2418, %v2417
        %2435 = vmatpush.bf16.msra.mxu0 %v2426
        %2436 = vmatpush.bf16.msra.mxu0 %v2425
        %2437 = vmatpush.bf16.msra.mxu0 %v2424
        %2438 = vmatpush.bf16.msra.mxu0 %v2423
        %2439 = vmatpush.bf16.msra.mxu0 %v2422
        %2440 = vmatpush.bf16.msra.mxu0 %v2421
        %2441 = vmatpush.bf16.msra.mxu0 %v2420
        %2442 = vmatpush.bf16.msra.mxu0 %v2419
        %2443 = vmatmul.bf16.gmra.mxu0 %v2050
        %v2444 = vpop.f32.mrf.mxu0
        %v2445 = vadd.f32 0.0, %v2444
        %v2446 = vpop.f32.mrf.mxu0
        %2447 = vdwg.mxu0
        %2448 = vmatpush.bf16.msra.mxu0 %v2434
        %2449 = vmatpush.bf16.msra.mxu0 %v2433
        %2450 = vmatpush.bf16.msra.mxu0 %v2432
        %2451 = vmatpush.bf16.msra.mxu0 %v2431
        %2452 = vmatpush.bf16.msra.mxu0 %v2430
        %2453 = vmatpush.bf16.msra.mxu0 %v2429
        %2454 = vmatpush.bf16.msra.mxu0 %v2428
        %2455 = vmatpush.bf16.msra.mxu0 %v2427
        %2456 = vmatmul.bf16.gmra.mxu0 %v2051
        %v2457 = vpop.f32.mrf.mxu0
        %v2458 = vadd.f32 %v2445, %v2457
        %v2459 = vpop.f32.mrf.mxu0
        %2460 = vdwg.mxu0
        %v2461 = vpack.c.bf16 %v2044, %v2044
        %v2462 = vpack.c.bf16 %v2458, %v2458
        %2463 = vst [vmem:[#allocation3 + $0x8] sm:$0xf] %v2461
        %2464 = vst [vmem:[#allocation3 + $0xc] sm:$0xf] %v2462
        %v2465 = vld [vmem:[%s766 + $0x20] sm:$0xf]
        %v2466 = vld [vmem:[%s766 + $0x28] sm:$0xf]
        %v2467 = vunpack.c.l.bf16 %v2465
        %v2468 = vunpack.c.l.bf16 %v2466
        %v2469 = vld [vmem:[#allocation2 + $0x60] sm:$0xff]
        %v2470 = vld [vmem:[#allocation2 + $0x68] sm:$0xff]
        %v2471 = vunpack.c.l.bf16 %v2469
        %v2472 = vunpack.c.h.bf16 %v2469
        %v2473 = vunpack.c.l.bf16 %v2470
        %v2474 = vunpack.c.h.bf16 %v2470
        %v2475 = vld [vmem:[#allocation2 + $0xa0] sm:$0xff]
        %v2476 = vld [vmem:[#allocation2 + $0xa8] sm:$0xff]
        %v2477 = vunpack.c.l.bf16 %v2475
        %v2478 = vunpack.c.h.bf16 %v2475
        %v2479 = vunpack.c.l.bf16 %v2476
        %v2480 = vunpack.c.h.bf16 %v2476
        %v2481 = vpack.c.bf16 %v2467, %v2467
        %v2482 = vpack.c.bf16 %v2471, %v2471
        %v2483 = vpack.c.bf16 %v2472, %v2472
        %v2484 = vpack.c.bf16 %v2477, %v2477
        %v2485 = vpack.c.bf16 %v2478, %v2478
        %2486 = vxpose.binary.xlu0.c.b16.start [1/16] %v2483, %v2482, 128
        %2487 = vxpose.binary.xlu0.c.b16.cont [2/16] 0, 0, 128
        %2488 = vxpose.binary.xlu0.c.b16.cont [3/16] 0, 0, 128
        %2489 = vxpose.binary.xlu0.c.b16.cont [4/16] 0, 0, 128
        %2490 = vxpose.binary.xlu0.c.b16.cont [5/16] 0, 0, 128
        %2491 = vxpose.binary.xlu0.c.b16.cont [6/16] 0, 0, 128
        %2492 = vxpose.binary.xlu0.c.b16.cont [7/16] 0, 0, 128
        %2493 = vxpose.binary.xlu0.c.b16.end [8/16] 0, 0, 128
        %v2494 = vpop.trf.xlu0
        %v2495 = vpop.trf.xlu0
        %v2496 = vpop.trf.xlu0
        %v2497 = vpop.trf.xlu0
        %v2498 = vpop.trf.xlu0
        %v2499 = vpop.trf.xlu0
        %v2500 = vpop.trf.xlu0
        %v2501 = vpop.trf.xlu0
        %v2502 = vpop.trf.xlu0
        %v2503 = vpop.trf.xlu0
        %v2504 = vpop.trf.xlu0
        %v2505 = vpop.trf.xlu0
        %v2506 = vpop.trf.xlu0
        %v2507 = vpop.trf.xlu0
        %v2508 = vpop.trf.xlu0
        %v2509 = vpop.trf.xlu0
        %v2511 = vsel %vm812, %v2494, 0
        %v2514 = vsel %vm812, %v2496, 0
        %v2517 = vsel %vm812, %v2498, 0
        %v2520 = vsel %vm812, %v2500, 0
        %v2523 = vsel %vm812, %v2502, 0
        %v2526 = vsel %vm812, %v2504, 0
        %v2529 = vsel %vm812, %v2506, 0
        %v2532 = vsel %vm812, %v2508, 0
        %v2535 = vsel %vm812, %v2495, 0
        %v2538 = vsel %vm812, %v2497, 0
        %v2541 = vsel %vm812, %v2499, 0
        %v2544 = vsel %vm812, %v2501, 0
        %v2547 = vsel %vm812, %v2503, 0
        %v2550 = vsel %vm812, %v2505, 0
        %v2553 = vsel %vm812, %v2507, 0
        %v2556 = vsel %vm812, %v2509, 0
        %v2559 = vsel %vm861, %v2481, 0
        %2561 = vmatpush.bf16.msra.mxu0 0
        %2562 = vmatpush.bf16.msra.mxu0 0
        %2563 = vmatpush.bf16.msra.mxu0 0
        %2564 = vmatpush.bf16.msra.mxu0 0
        %2565 = vmatpush.bf16.msra.mxu0 0
        %2566 = vmatpush.bf16.msra.mxu0 0
        %2567 = vmatpush.bf16.msra.mxu0 0
        %2568 = vmatpush.bf16.msra.mxu0 %v2559
        %2569 = vmatmul.bf16.gmra.mxu0 %v2511
        %v2570 = vpop.f32.mrf.mxu0
        %v2571 = vadd.f32 0.0, %v2570
        %v2572 = vpop.f32.mrf.mxu0
        %v2573 = vadd.f32 0.0, %v2572
        %2574 = vmatmul.bf16.gmra.mxu0 %v2514
        %v2575 = vpop.f32.mrf.mxu0
        %v2576 = vadd.f32 0.0, %v2575
        %v2577 = vpop.f32.mrf.mxu0
        %v2578 = vadd.f32 0.0, %v2577
        %2579 = vmatmul.bf16.gmra.mxu0 %v2517
        %v2580 = vpop.f32.mrf.mxu0
        %v2581 = vadd.f32 0.0, %v2580
        %v2582 = vpop.f32.mrf.mxu0
        %v2583 = vadd.f32 0.0, %v2582
        %2584 = vmatmul.bf16.gmra.mxu0 %v2520
        %v2585 = vpop.f32.mrf.mxu0
        %v2586 = vadd.f32 0.0, %v2585
        %v2587 = vpop.f32.mrf.mxu0
        %v2588 = vadd.f32 0.0, %v2587
        %2589 = vmatmul.bf16.gmra.mxu0 %v2523
        %v2590 = vpop.f32.mrf.mxu0
        %v2591 = vadd.f32 0.0, %v2590
        %v2592 = vpop.f32.mrf.mxu0
        %v2593 = vadd.f32 0.0, %v2592
        %2594 = vmatmul.bf16.gmra.mxu0 %v2526
        %v2595 = vpop.f32.mrf.mxu0
        %v2596 = vadd.f32 0.0, %v2595
        %v2597 = vpop.f32.mrf.mxu0
        %v2598 = vadd.f32 0.0, %v2597
        %2599 = vmatmul.bf16.gmra.mxu0 %v2529
        %v2600 = vpop.f32.mrf.mxu0
        %v2601 = vadd.f32 0.0, %v2600
        %v2602 = vpop.f32.mrf.mxu0
        %v2603 = vadd.f32 0.0, %v2602
        %2604 = vmatmul.bf16.gmra.mxu0 %v2532
        %v2605 = vpop.f32.mrf.mxu0
        %v2606 = vadd.f32 0.0, %v2605
        %v2607 = vpop.f32.mrf.mxu0
        %v2608 = vadd.f32 0.0, %v2607
        %2609 = vmatmul.bf16.gmra.mxu0 %v2535
        %v2610 = vpop.f32.mrf.mxu0
        %v2611 = vadd.f32 0.0, %v2610
        %v2612 = vpop.f32.mrf.mxu0
        %v2613 = vadd.f32 0.0, %v2612
        %2614 = vmatmul.bf16.gmra.mxu0 %v2538
        %v2615 = vpop.f32.mrf.mxu0
        %v2616 = vadd.f32 0.0, %v2615
        %v2617 = vpop.f32.mrf.mxu0
        %v2618 = vadd.f32 0.0, %v2617
        %2619 = vmatmul.bf16.gmra.mxu0 %v2541
        %v2620 = vpop.f32.mrf.mxu0
        %v2621 = vadd.f32 0.0, %v2620
        %v2622 = vpop.f32.mrf.mxu0
        %v2623 = vadd.f32 0.0, %v2622
        %2624 = vmatmul.bf16.gmra.mxu0 %v2544
        %v2625 = vpop.f32.mrf.mxu0
        %v2626 = vadd.f32 0.0, %v2625
        %v2627 = vpop.f32.mrf.mxu0
        %v2628 = vadd.f32 0.0, %v2627
        %2629 = vmatmul.bf16.gmra.mxu0 %v2547
        %v2630 = vpop.f32.mrf.mxu0
        %v2631 = vadd.f32 0.0, %v2630
        %v2632 = vpop.f32.mrf.mxu0
        %v2633 = vadd.f32 0.0, %v2632
        %2634 = vmatmul.bf16.gmra.mxu0 %v2550
        %v2635 = vpop.f32.mrf.mxu0
        %v2636 = vadd.f32 0.0, %v2635
        %v2637 = vpop.f32.mrf.mxu0
        %v2638 = vadd.f32 0.0, %v2637
        %2639 = vmatmul.bf16.gmra.mxu0 %v2553
        %v2640 = vpop.f32.mrf.mxu0
        %v2641 = vadd.f32 0.0, %v2640
        %v2642 = vpop.f32.mrf.mxu0
        %v2643 = vadd.f32 0.0, %v2642
        %2644 = vmatmul.bf16.gmra.mxu0 %v2556
        %v2645 = vpop.f32.mrf.mxu0
        %v2646 = vadd.f32 0.0, %v2645
        %v2647 = vpop.f32.mrf.mxu0
        %v2648 = vadd.f32 0.0, %v2647
        %2649 = vdwg.mxu0
        %v2650 = vmax.f32 %v2571, %v2581
        %v2651 = vmax.f32 %v2573, %v2583
        %v2652 = vmax.f32 %v2576, %v2586
        %v2653 = vmax.f32 %v2578, %v2588
        %v2654 = vmax.f32 %v2650, %v2591
        %v2655 = vmax.f32 %v2651, %v2593
        %v2656 = vmax.f32 %v2652, %v2596
        %v2657 = vmax.f32 %v2653, %v2598
        %v2658 = vmax.f32 %v2654, %v2601
        %v2659 = vmax.f32 %v2655, %v2603
        %v2660 = vmax.f32 %v2656, %v2606
        %v2661 = vmax.f32 %v2657, %v2608
        %v2662 = vmax.f32 %v2658, %v2611
        %v2663 = vmax.f32 %v2659, %v2613
        %v2664 = vmax.f32 %v2660, %v2616
        %v2665 = vmax.f32 %v2661, %v2618
        %v2666 = vmax.f32 %v2662, %v2621
        %v2667 = vmax.f32 %v2663, %v2623
        %v2668 = vmax.f32 %v2664, %v2626
        %v2669 = vmax.f32 %v2665, %v2628
        %v2670 = vmax.f32 %v2666, %v2631
        %v2671 = vmax.f32 %v2667, %v2633
        %v2672 = vmax.f32 %v2668, %v2636
        %v2673 = vmax.f32 %v2669, %v2638
        %v2674 = vmax.f32 %v2670, %v2641
        %v2675 = vmax.f32 %v2671, %v2643
        %v2676 = vmax.f32 %v2672, %v2646
        %v2677 = vmax.f32 %v2673, %v2648
        %v2678 = vmax.f32 %v2674, %v2675
        %v2679 = vmax.f32 %v2676, %v2677
        %v2680 = vmax.f32 %v2678, %v2679
        %v2681 = vrot.slane %v2680, 4
        %v2682 = vmax.f32 %v2680, %v2681
        %v2683 = vrot.slane %v2682, 2
        %v2684 = vmax.f32 %v2682, %v2683
        %v2685 = vrot.slane %v2684, 1
        %v2686 = vmax.f32 %v2684, %v2685
        %v2687 = vsub.f32 %v2571, %v2686
        %v2688 = vsub.f32 %v2573, %v2686
        %v2689 = vsub.f32 %v2576, %v2686
        %v2690 = vsub.f32 %v2578, %v2686
        %v2691 = vsub.f32 %v2581, %v2686
        %v2692 = vsub.f32 %v2583, %v2686
        %v2693 = vsub.f32 %v2586, %v2686
        %v2694 = vsub.f32 %v2588, %v2686
        %v2695 = vsub.f32 %v2591, %v2686
        %v2696 = vsub.f32 %v2593, %v2686
        %v2697 = vsub.f32 %v2596, %v2686
        %v2698 = vsub.f32 %v2598, %v2686
        %v2699 = vsub.f32 %v2601, %v2686
        %v2700 = vsub.f32 %v2603, %v2686
        %v2701 = vsub.f32 %v2606, %v2686
        %v2702 = vsub.f32 %v2608, %v2686
        %v2703 = vsub.f32 %v2611, %v2686
        %v2704 = vsub.f32 %v2613, %v2686
        %v2705 = vsub.f32 %v2616, %v2686
        %v2706 = vsub.f32 %v2618, %v2686
        %v2707 = vsub.f32 %v2621, %v2686
        %v2708 = vsub.f32 %v2623, %v2686
        %v2709 = vsub.f32 %v2626, %v2686
        %v2710 = vsub.f32 %v2628, %v2686
        %v2711 = vsub.f32 %v2631, %v2686
        %v2712 = vsub.f32 %v2633, %v2686
        %v2713 = vsub.f32 %v2636, %v2686
        %v2714 = vsub.f32 %v2638, %v2686
        %v2715 = vsub.f32 %v2641, %v2686
        %v2716 = vsub.f32 %v2643, %v2686
        %v2717 = vsub.f32 %v2646, %v2686
        %v2718 = vsub.f32 %v2648, %v2686
        %v2719 = vmul.f32 %v2687, 1.442695
        %v2720 = vpow.pop %v2719
        %v2721 = vmul.f32 %v2688, 1.442695
        %v2722 = vpow.pop %v2721
        %v2723 = vmul.f32 %v2689, 1.442695
        %v2724 = vpow.pop %v2723
        %v2725 = vmul.f32 %v2690, 1.442695
        %v2726 = vpow.pop %v2725
        %v2727 = vmul.f32 %v2691, 1.442695
        %v2728 = vpow.pop %v2727
        %v2729 = vmul.f32 %v2692, 1.442695
        %v2730 = vpow.pop %v2729
        %v2731 = vmul.f32 %v2693, 1.442695
        %v2732 = vpow.pop %v2731
        %v2733 = vmul.f32 %v2694, 1.442695
        %v2734 = vpow.pop %v2733
        %v2735 = vmul.f32 %v2695, 1.442695
        %v2736 = vpow.pop %v2735
        %v2737 = vmul.f32 %v2696, 1.442695
        %v2738 = vpow.pop %v2737
        %v2739 = vmul.f32 %v2697, 1.442695
        %v2740 = vpow.pop %v2739
        %v2741 = vmul.f32 %v2698, 1.442695
        %v2742 = vpow.pop %v2741
        %v2743 = vmul.f32 %v2699, 1.442695
        %v2744 = vpow.pop %v2743
        %v2745 = vmul.f32 %v2700, 1.442695
        %v2746 = vpow.pop %v2745
        %v2747 = vmul.f32 %v2701, 1.442695
        %v2748 = vpow.pop %v2747
        %v2749 = vmul.f32 %v2702, 1.442695
        %v2750 = vpow.pop %v2749
        %v2751 = vmul.f32 %v2703, 1.442695
        %v2752 = vpow.pop %v2751
        %v2753 = vmul.f32 %v2704, 1.442695
        %v2754 = vpow.pop %v2753
        %v2755 = vmul.f32 %v2705, 1.442695
        %v2756 = vpow.pop %v2755
        %v2757 = vmul.f32 %v2706, 1.442695
        %v2758 = vpow.pop %v2757
        %v2759 = vmul.f32 %v2707, 1.442695
        %v2760 = vpow.pop %v2759
        %v2761 = vmul.f32 %v2708, 1.442695
        %v2762 = vpow.pop %v2761
        %v2763 = vmul.f32 %v2709, 1.442695
        %v2764 = vpow.pop %v2763
        %v2765 = vmul.f32 %v2710, 1.442695
        %v2766 = vpow.pop %v2765
        %v2767 = vmul.f32 %v2711, 1.442695
        %v2768 = vpow.pop %v2767
        %v2769 = vmul.f32 %v2712, 1.442695
        %v2770 = vpow.pop %v2769
        %v2771 = vmul.f32 %v2713, 1.442695
        %v2772 = vpow.pop %v2771
        %v2773 = vmul.f32 %v2714, 1.442695
        %v2774 = vpow.pop %v2773
        %v2775 = vmul.f32 %v2715, 1.442695
        %v2776 = vpow.pop %v2775
        %v2777 = vmul.f32 %v2716, 1.442695
        %v2778 = vpow.pop %v2777
        %v2779 = vmul.f32 %v2717, 1.442695
        %v2780 = vpow.pop %v2779
        %v2781 = vmul.f32 %v2718, 1.442695
        %v2782 = vpow.pop %v2781
        %v2783 = vadd.f32 %v2720, %v2722
        %v2784 = vadd.f32 %v2783, %v2724
        %v2785 = vadd.f32 %v2784, %v2726
        %v2786 = vadd.f32 %v2785, %v2728
        %v2787 = vadd.f32 %v2786, %v2730
        %v2788 = vadd.f32 %v2787, %v2732
        %v2789 = vadd.f32 %v2788, %v2734
        %v2790 = vadd.f32 %v2789, %v2736
        %v2791 = vadd.f32 %v2790, %v2738
        %v2792 = vadd.f32 %v2791, %v2740
        %v2793 = vadd.f32 %v2792, %v2742
        %v2794 = vadd.f32 %v2793, %v2744
        %v2795 = vadd.f32 %v2794, %v2746
        %v2796 = vadd.f32 %v2795, %v2748
        %v2797 = vadd.f32 %v2796, %v2750
        %v2798 = vadd.f32 %v2797, %v2752
        %v2799 = vadd.f32 %v2798, %v2754
        %v2800 = vadd.f32 %v2799, %v2756
        %v2801 = vadd.f32 %v2800, %v2758
        %v2802 = vadd.f32 %v2801, %v2760
        %v2803 = vadd.f32 %v2802, %v2762
        %v2804 = vadd.f32 %v2803, %v2764
        %v2805 = vadd.f32 %v2804, %v2766
        %v2806 = vadd.f32 %v2805, %v2768
        %v2807 = vadd.f32 %v2806, %v2770
        %v2808 = vadd.f32 %v2807, %v2772
        %v2809 = vadd.f32 %v2808, %v2774
        %v2810 = vadd.f32 %v2809, %v2776
        %v2811 = vadd.f32 %v2810, %v2778
        %v2812 = vadd.f32 %v2811, %v2780
        %v2813 = vadd.f32 %v2812, %v2782
        %v2814 = vrot.slane %v2813, 4
        %v2815 = vadd.f32 %v2813, %v2814
        %v2816 = vrot.slane %v2815, 2
        %v2817 = vadd.f32 %v2815, %v2816
        %v2818 = vrot.slane %v2817, 1
        %v2819 = vadd.f32 %v2817, %v2818
        %v2820 = vrcp.pop %v2819
        %v2821 = vmul.f32 %v2720, %v2820
        %v2822 = vmul.f32 %v2722, %v2820
        %v2823 = vmul.f32 %v2724, %v2820
        %v2824 = vmul.f32 %v2726, %v2820
        %v2825 = vmul.f32 %v2728, %v2820
        %v2826 = vmul.f32 %v2730, %v2820
        %v2827 = vmul.f32 %v2732, %v2820
        %v2828 = vmul.f32 %v2734, %v2820
        %v2829 = vmul.f32 %v2736, %v2820
        %v2830 = vmul.f32 %v2738, %v2820
        %v2831 = vmul.f32 %v2740, %v2820
        %v2832 = vmul.f32 %v2742, %v2820
        %v2833 = vmul.f32 %v2744, %v2820
        %v2834 = vmul.f32 %v2746, %v2820
        %v2835 = vmul.f32 %v2748, %v2820
        %v2836 = vmul.f32 %v2750, %v2820
        %v2837 = vmul.f32 %v2752, %v2820
        %v2838 = vmul.f32 %v2754, %v2820
        %v2839 = vmul.f32 %v2756, %v2820
        %v2840 = vmul.f32 %v2758, %v2820
        %v2841 = vmul.f32 %v2760, %v2820
        %v2842 = vmul.f32 %v2762, %v2820
        %v2843 = vmul.f32 %v2764, %v2820
        %v2844 = vmul.f32 %v2766, %v2820
        %v2845 = vmul.f32 %v2768, %v2820
        %v2846 = vmul.f32 %v2770, %v2820
        %v2847 = vmul.f32 %v2772, %v2820
        %v2848 = vmul.f32 %v2774, %v2820
        %v2849 = vmul.f32 %v2776, %v2820
        %v2850 = vmul.f32 %v2778, %v2820
        %v2851 = vmul.f32 %v2780, %v2820
        %v2852 = vmul.f32 %v2782, %v2820
        %v2853 = vpack.c.bf16 %v2822, %v2821
        %v2854 = vpack.c.bf16 %v2824, %v2823
        %v2855 = vpack.c.bf16 %v2826, %v2825
        %v2856 = vpack.c.bf16 %v2828, %v2827
        %v2857 = vpack.c.bf16 %v2830, %v2829
        %v2858 = vpack.c.bf16 %v2832, %v2831
        %v2859 = vpack.c.bf16 %v2834, %v2833
        %v2860 = vpack.c.bf16 %v2836, %v2835
        %v2861 = vpack.c.bf16 %v2838, %v2837
        %v2862 = vpack.c.bf16 %v2840, %v2839
        %v2863 = vpack.c.bf16 %v2842, %v2841
        %v2864 = vpack.c.bf16 %v2844, %v2843
        %v2865 = vpack.c.bf16 %v2846, %v2845
        %v2866 = vpack.c.bf16 %v2848, %v2847
        %v2867 = vpack.c.bf16 %v2850, %v2849
        %v2868 = vpack.c.bf16 %v2852, %v2851
        %2869 = vmatpush.bf16.msra.mxu0 %v2860
        %2870 = vmatpush.bf16.msra.mxu0 %v2859
        %2871 = vmatpush.bf16.msra.mxu0 %v2858
        %2872 = vmatpush.bf16.msra.mxu0 %v2857
        %2873 = vmatpush.bf16.msra.mxu0 %v2856
        %2874 = vmatpush.bf16.msra.mxu0 %v2855
        %2875 = vmatpush.bf16.msra.mxu0 %v2854
        %2876 = vmatpush.bf16.msra.mxu0 %v2853
        %2877 = vmatmul.bf16.gmra.mxu0 %v2484
        %v2878 = vpop.f32.mrf.mxu0
        %v2879 = vadd.f32 0.0, %v2878
        %v2880 = vpop.f32.mrf.mxu0
        %2881 = vdwg.mxu0
        %2882 = vmatpush.bf16.msra.mxu0 %v2868
        %2883 = vmatpush.bf16.msra.mxu0 %v2867
        %2884 = vmatpush.bf16.msra.mxu0 %v2866
        %2885 = vmatpush.bf16.msra.mxu0 %v2865
        %2886 = vmatpush.bf16.msra.mxu0 %v2864
        %2887 = vmatpush.bf16.msra.mxu0 %v2863
        %2888 = vmatpush.bf16.msra.mxu0 %v2862
        %2889 = vmatpush.bf16.msra.mxu0 %v2861
        %2890 = vmatmul.bf16.gmra.mxu0 %v2485
        %v2891 = vpop.f32.mrf.mxu0
        %v2892 = vadd.f32 %v2879, %v2891
        %v2893 = vpop.f32.mrf.mxu0
        %2894 = vdwg.mxu0
        %v2895 = vpack.c.bf16 %v2468, %v2468
        %v2896 = vpack.c.bf16 %v2473, %v2473
        %v2897 = vpack.c.bf16 %v2474, %v2474
        %v2898 = vpack.c.bf16 %v2479, %v2479
        %v2899 = vpack.c.bf16 %v2480, %v2480
        %2900 = vxpose.binary.xlu0.c.b16.start [1/16] %v2897, %v2896, 128
        %2901 = vxpose.binary.xlu0.c.b16.cont [2/16] 0, 0, 128
        %2902 = vxpose.binary.xlu0.c.b16.cont [3/16] 0, 0, 128
        %2903 = vxpose.binary.xlu0.c.b16.cont [4/16] 0, 0, 128
        %2904 = vxpose.binary.xlu0.c.b16.cont [5/16] 0, 0, 128
        %2905 = vxpose.binary.xlu0.c.b16.cont [6/16] 0, 0, 128
        %2906 = vxpose.binary.xlu0.c.b16.cont [7/16] 0, 0, 128
        %2907 = vxpose.binary.xlu0.c.b16.end [8/16] 0, 0, 128
        %v2908 = vpop.trf.xlu0
        %v2909 = vpop.trf.xlu0
        %v2910 = vpop.trf.xlu0
        %v2911 = vpop.trf.xlu0
        %v2912 = vpop.trf.xlu0
        %v2913 = vpop.trf.xlu0
        %v2914 = vpop.trf.xlu0
        %v2915 = vpop.trf.xlu0
        %v2916 = vpop.trf.xlu0
        %v2917 = vpop.trf.xlu0
        %v2918 = vpop.trf.xlu0
        %v2919 = vpop.trf.xlu0
        %v2920 = vpop.trf.xlu0
        %v2921 = vpop.trf.xlu0
        %v2922 = vpop.trf.xlu0
        %v2923 = vpop.trf.xlu0
        %v2925 = vsel %vm812, %v2908, 0
        %v2928 = vsel %vm812, %v2910, 0
        %v2931 = vsel %vm812, %v2912, 0
        %v2934 = vsel %vm812, %v2914, 0
        %v2937 = vsel %vm812, %v2916, 0
        %v2940 = vsel %vm812, %v2918, 0
        %v2943 = vsel %vm812, %v2920, 0
        %v2946 = vsel %vm812, %v2922, 0
        %v2949 = vsel %vm812, %v2909, 0
        %v2952 = vsel %vm812, %v2911, 0
        %v2955 = vsel %vm812, %v2913, 0
        %v2958 = vsel %vm812, %v2915, 0
        %v2961 = vsel %vm812, %v2917, 0
        %v2964 = vsel %vm812, %v2919, 0
        %v2967 = vsel %vm812, %v2921, 0
        %v2970 = vsel %vm812, %v2923, 0
        %v2973 = vsel %vm861, %v2895, 0
        %2975 = vmatpush.bf16.msra.mxu0 0
        %2976 = vmatpush.bf16.msra.mxu0 0
        %2977 = vmatpush.bf16.msra.mxu0 0
        %2978 = vmatpush.bf16.msra.mxu0 0
        %2979 = vmatpush.bf16.msra.mxu0 0
        %2980 = vmatpush.bf16.msra.mxu0 0
        %2981 = vmatpush.bf16.msra.mxu0 0
        %2982 = vmatpush.bf16.msra.mxu0 %v2973
        %2983 = vmatmul.bf16.gmra.mxu0 %v2925
        %v2984 = vpop.f32.mrf.mxu0
        %v2985 = vadd.f32 0.0, %v2984
        %v2986 = vpop.f32.mrf.mxu0
        %v2987 = vadd.f32 0.0, %v2986
        %2988 = vmatmul.bf16.gmra.mxu0 %v2928
        %v2989 = vpop.f32.mrf.mxu0
        %v2990 = vadd.f32 0.0, %v2989
        %v2991 = vpop.f32.mrf.mxu0
        %v2992 = vadd.f32 0.0, %v2991
        %2993 = vmatmul.bf16.gmra.mxu0 %v2931
        %v2994 = vpop.f32.mrf.mxu0
        %v2995 = vadd.f32 0.0, %v2994
        %v2996 = vpop.f32.mrf.mxu0
        %v2997 = vadd.f32 0.0, %v2996
        %2998 = vmatmul.bf16.gmra.mxu0 %v2934
        %v2999 = vpop.f32.mrf.mxu0
        %v3000 = vadd.f32 0.0, %v2999
        %v3001 = vpop.f32.mrf.mxu0
        %v3002 = vadd.f32 0.0, %v3001
        %3003 = vmatmul.bf16.gmra.mxu0 %v2937
        %v3004 = vpop.f32.mrf.mxu0
        %v3005 = vadd.f32 0.0, %v3004
        %v3006 = vpop.f32.mrf.mxu0
        %v3007 = vadd.f32 0.0, %v3006
        %3008 = vmatmul.bf16.gmra.mxu0 %v2940
        %v3009 = vpop.f32.mrf.mxu0
        %v3010 = vadd.f32 0.0, %v3009
        %v3011 = vpop.f32.mrf.mxu0
        %v3012 = vadd.f32 0.0, %v3011
        %3013 = vmatmul.bf16.gmra.mxu0 %v2943
        %v3014 = vpop.f32.mrf.mxu0
        %v3015 = vadd.f32 0.0, %v3014
        %v3016 = vpop.f32.mrf.mxu0
        %v3017 = vadd.f32 0.0, %v3016
        %3018 = vmatmul.bf16.gmra.mxu0 %v2946
        %v3019 = vpop.f32.mrf.mxu0
        %v3020 = vadd.f32 0.0, %v3019
        %v3021 = vpop.f32.mrf.mxu0
        %v3022 = vadd.f32 0.0, %v3021
        %3023 = vmatmul.bf16.gmra.mxu0 %v2949
        %v3024 = vpop.f32.mrf.mxu0
        %v3025 = vadd.f32 0.0, %v3024
        %v3026 = vpop.f32.mrf.mxu0
        %v3027 = vadd.f32 0.0, %v3026
        %3028 = vmatmul.bf16.gmra.mxu0 %v2952
        %v3029 = vpop.f32.mrf.mxu0
        %v3030 = vadd.f32 0.0, %v3029
        %v3031 = vpop.f32.mrf.mxu0
        %v3032 = vadd.f32 0.0, %v3031
        %3033 = vmatmul.bf16.gmra.mxu0 %v2955
        %v3034 = vpop.f32.mrf.mxu0
        %v3035 = vadd.f32 0.0, %v3034
        %v3036 = vpop.f32.mrf.mxu0
        %v3037 = vadd.f32 0.0, %v3036
        %3038 = vmatmul.bf16.gmra.mxu0 %v2958
        %v3039 = vpop.f32.mrf.mxu0
        %v3040 = vadd.f32 0.0, %v3039
        %v3041 = vpop.f32.mrf.mxu0
        %v3042 = vadd.f32 0.0, %v3041
        %3043 = vmatmul.bf16.gmra.mxu0 %v2961
        %v3044 = vpop.f32.mrf.mxu0
        %v3045 = vadd.f32 0.0, %v3044
        %v3046 = vpop.f32.mrf.mxu0
        %v3047 = vadd.f32 0.0, %v3046
        %3048 = vmatmul.bf16.gmra.mxu0 %v2964
        %v3049 = vpop.f32.mrf.mxu0
        %v3050 = vadd.f32 0.0, %v3049
        %v3051 = vpop.f32.mrf.mxu0
        %v3052 = vadd.f32 0.0, %v3051
        %3053 = vmatmul.bf16.gmra.mxu0 %v2967
        %v3054 = vpop.f32.mrf.mxu0
        %v3055 = vadd.f32 0.0, %v3054
        %v3056 = vpop.f32.mrf.mxu0
        %v3057 = vadd.f32 0.0, %v3056
        %3058 = vmatmul.bf16.gmra.mxu0 %v2970
        %v3059 = vpop.f32.mrf.mxu0
        %v3060 = vadd.f32 0.0, %v3059
        %v3061 = vpop.f32.mrf.mxu0
        %v3062 = vadd.f32 0.0, %v3061
        %3063 = vdwg.mxu0
        %v3064 = vmax.f32 %v2985, %v2995
        %v3065 = vmax.f32 %v2987, %v2997
        %v3066 = vmax.f32 %v2990, %v3000
        %v3067 = vmax.f32 %v2992, %v3002
        %v3068 = vmax.f32 %v3064, %v3005
        %v3069 = vmax.f32 %v3065, %v3007
        %v3070 = vmax.f32 %v3066, %v3010
        %v3071 = vmax.f32 %v3067, %v3012
        %v3072 = vmax.f32 %v3068, %v3015
        %v3073 = vmax.f32 %v3069, %v3017
        %v3074 = vmax.f32 %v3070, %v3020
        %v3075 = vmax.f32 %v3071, %v3022
        %v3076 = vmax.f32 %v3072, %v3025
        %v3077 = vmax.f32 %v3073, %v3027
        %v3078 = vmax.f32 %v3074, %v3030
        %v3079 = vmax.f32 %v3075, %v3032
        %v3080 = vmax.f32 %v3076, %v3035
        %v3081 = vmax.f32 %v3077, %v3037
        %v3082 = vmax.f32 %v3078, %v3040
        %v3083 = vmax.f32 %v3079, %v3042
        %v3084 = vmax.f32 %v3080, %v3045
        %v3085 = vmax.f32 %v3081, %v3047
        %v3086 = vmax.f32 %v3082, %v3050
        %v3087 = vmax.f32 %v3083, %v3052
        %v3088 = vmax.f32 %v3084, %v3055
        %v3089 = vmax.f32 %v3085, %v3057
        %v3090 = vmax.f32 %v3086, %v3060
        %v3091 = vmax.f32 %v3087, %v3062
        %v3092 = vmax.f32 %v3088, %v3089
        %v3093 = vmax.f32 %v3090, %v3091
        %v3094 = vmax.f32 %v3092, %v3093
        %v3095 = vrot.slane %v3094, 4
        %v3096 = vmax.f32 %v3094, %v3095
        %v3097 = vrot.slane %v3096, 2
        %v3098 = vmax.f32 %v3096, %v3097
        %v3099 = vrot.slane %v3098, 1
        %v3100 = vmax.f32 %v3098, %v3099
        %v3101 = vsub.f32 %v2985, %v3100
        %v3102 = vsub.f32 %v2987, %v3100
        %v3103 = vsub.f32 %v2990, %v3100
        %v3104 = vsub.f32 %v2992, %v3100
        %v3105 = vsub.f32 %v2995, %v3100
        %v3106 = vsub.f32 %v2997, %v3100
        %v3107 = vsub.f32 %v3000, %v3100
        %v3108 = vsub.f32 %v3002, %v3100
        %v3109 = vsub.f32 %v3005, %v3100
        %v3110 = vsub.f32 %v3007, %v3100
        %v3111 = vsub.f32 %v3010, %v3100
        %v3112 = vsub.f32 %v3012, %v3100
        %v3113 = vsub.f32 %v3015, %v3100
        %v3114 = vsub.f32 %v3017, %v3100
        %v3115 = vsub.f32 %v3020, %v3100
        %v3116 = vsub.f32 %v3022, %v3100
        %v3117 = vsub.f32 %v3025, %v3100
        %v3118 = vsub.f32 %v3027, %v3100
        %v3119 = vsub.f32 %v3030, %v3100
        %v3120 = vsub.f32 %v3032, %v3100
        %v3121 = vsub.f32 %v3035, %v3100
        %v3122 = vsub.f32 %v3037, %v3100
        %v3123 = vsub.f32 %v3040, %v3100
        %v3124 = vsub.f32 %v3042, %v3100
        %v3125 = vsub.f32 %v3045, %v3100
        %v3126 = vsub.f32 %v3047, %v3100
        %v3127 = vsub.f32 %v3050, %v3100
        %v3128 = vsub.f32 %v3052, %v3100
        %v3129 = vsub.f32 %v3055, %v3100
        %v3130 = vsub.f32 %v3057, %v3100
        %v3131 = vsub.f32 %v3060, %v3100
        %v3132 = vsub.f32 %v3062, %v3100
        %v3133 = vmul.f32 %v3101, 1.442695
        %v3134 = vpow.pop %v3133
        %v3135 = vmul.f32 %v3102, 1.442695
        %v3136 = vpow.pop %v3135
        %v3137 = vmul.f32 %v3103, 1.442695
        %v3138 = vpow.pop %v3137
        %v3139 = vmul.f32 %v3104, 1.442695
        %v3140 = vpow.pop %v3139
        %v3141 = vmul.f32 %v3105, 1.442695
        %v3142 = vpow.pop %v3141
        %v3143 = vmul.f32 %v3106, 1.442695
        %v3144 = vpow.pop %v3143
        %v3145 = vmul.f32 %v3107, 1.442695
        %v3146 = vpow.pop %v3145
        %v3147 = vmul.f32 %v3108, 1.442695
        %v3148 = vpow.pop %v3147
        %v3149 = vmul.f32 %v3109, 1.442695
        %v3150 = vpow.pop %v3149
        %v3151 = vmul.f32 %v3110, 1.442695
        %v3152 = vpow.pop %v3151
        %v3153 = vmul.f32 %v3111, 1.442695
        %v3154 = vpow.pop %v3153
        %v3155 = vmul.f32 %v3112, 1.442695
        %v3156 = vpow.pop %v3155
        %v3157 = vmul.f32 %v3113, 1.442695
        %v3158 = vpow.pop %v3157
        %v3159 = vmul.f32 %v3114, 1.442695
        %v3160 = vpow.pop %v3159
        %v3161 = vmul.f32 %v3115, 1.442695
        %v3162 = vpow.pop %v3161
        %v3163 = vmul.f32 %v3116, 1.442695
        %v3164 = vpow.pop %v3163
        %v3165 = vmul.f32 %v3117, 1.442695
        %v3166 = vpow.pop %v3165
        %v3167 = vmul.f32 %v3118, 1.442695
        %v3168 = vpow.pop %v3167
        %v3169 = vmul.f32 %v3119, 1.442695
        %v3170 = vpow.pop %v3169
        %v3171 = vmul.f32 %v3120, 1.442695
        %v3172 = vpow.pop %v3171
        %v3173 = vmul.f32 %v3121, 1.442695
        %v3174 = vpow.pop %v3173
        %v3175 = vmul.f32 %v3122, 1.442695
        %v3176 = vpow.pop %v3175
        %v3177 = vmul.f32 %v3123, 1.442695
        %v3178 = vpow.pop %v3177
        %v3179 = vmul.f32 %v3124, 1.442695
        %v3180 = vpow.pop %v3179
        %v3181 = vmul.f32 %v3125, 1.442695
        %v3182 = vpow.pop %v3181
        %v3183 = vmul.f32 %v3126, 1.442695
        %v3184 = vpow.pop %v3183
        %v3185 = vmul.f32 %v3127, 1.442695
        %v3186 = vpow.pop %v3185
        %v3187 = vmul.f32 %v3128, 1.442695
        %v3188 = vpow.pop %v3187
        %v3189 = vmul.f32 %v3129, 1.442695
        %v3190 = vpow.pop %v3189
        %v3191 = vmul.f32 %v3130, 1.442695
        %v3192 = vpow.pop %v3191
        %v3193 = vmul.f32 %v3131, 1.442695
        %v3194 = vpow.pop %v3193
        %v3195 = vmul.f32 %v3132, 1.442695
        %v3196 = vpow.pop %v3195
        %v3197 = vadd.f32 %v3134, %v3136
        %v3198 = vadd.f32 %v3197, %v3138
        %v3199 = vadd.f32 %v3198, %v3140
        %v3200 = vadd.f32 %v3199, %v3142
        %v3201 = vadd.f32 %v3200, %v3144
        %v3202 = vadd.f32 %v3201, %v3146
        %v3203 = vadd.f32 %v3202, %v3148
        %v3204 = vadd.f32 %v3203, %v3150
        %v3205 = vadd.f32 %v3204, %v3152
        %v3206 = vadd.f32 %v3205, %v3154
        %v3207 = vadd.f32 %v3206, %v3156
        %v3208 = vadd.f32 %v3207, %v3158
        %v3209 = vadd.f32 %v3208, %v3160
        %v3210 = vadd.f32 %v3209, %v3162
        %v3211 = vadd.f32 %v3210, %v3164
        %v3212 = vadd.f32 %v3211, %v3166
        %v3213 = vadd.f32 %v3212, %v3168
        %v3214 = vadd.f32 %v3213, %v3170
        %v3215 = vadd.f32 %v3214, %v3172
        %v3216 = vadd.f32 %v3215, %v3174
        %v3217 = vadd.f32 %v3216, %v3176
        %v3218 = vadd.f32 %v3217, %v3178
        %v3219 = vadd.f32 %v3218, %v3180
        %v3220 = vadd.f32 %v3219, %v3182
        %v3221 = vadd.f32 %v3220, %v3184
        %v3222 = vadd.f32 %v3221, %v3186
        %v3223 = vadd.f32 %v3222, %v3188
        %v3224 = vadd.f32 %v3223, %v3190
        %v3225 = vadd.f32 %v3224, %v3192
        %v3226 = vadd.f32 %v3225, %v3194
        %v3227 = vadd.f32 %v3226, %v3196
        %v3228 = vrot.slane %v3227, 4
        %v3229 = vadd.f32 %v3227, %v3228
        %v3230 = vrot.slane %v3229, 2
        %v3231 = vadd.f32 %v3229, %v3230
        %v3232 = vrot.slane %v3231, 1
        %v3233 = vadd.f32 %v3231, %v3232
        %v3234 = vrcp.pop %v3233
        %v3235 = vmul.f32 %v3134, %v3234
        %v3236 = vmul.f32 %v3136, %v3234
        %v3237 = vmul.f32 %v3138, %v3234
        %v3238 = vmul.f32 %v3140, %v3234
        %v3239 = vmul.f32 %v3142, %v3234
        %v3240 = vmul.f32 %v3144, %v3234
        %v3241 = vmul.f32 %v3146, %v3234
        %v3242 = vmul.f32 %v3148, %v3234
        %v3243 = vmul.f32 %v3150, %v3234
        %v3244 = vmul.f32 %v3152, %v3234
        %v3245 = vmul.f32 %v3154, %v3234
        %v3246 = vmul.f32 %v3156, %v3234
        %v3247 = vmul.f32 %v3158, %v3234
        %v3248 = vmul.f32 %v3160, %v3234
        %v3249 = vmul.f32 %v3162, %v3234
        %v3250 = vmul.f32 %v3164, %v3234
        %v3251 = vmul.f32 %v3166, %v3234
        %v3252 = vmul.f32 %v3168, %v3234
        %v3253 = vmul.f32 %v3170, %v3234
        %v3254 = vmul.f32 %v3172, %v3234
        %v3255 = vmul.f32 %v3174, %v3234
        %v3256 = vmul.f32 %v3176, %v3234
        %v3257 = vmul.f32 %v3178, %v3234
        %v3258 = vmul.f32 %v3180, %v3234
        %v3259 = vmul.f32 %v3182, %v3234
        %v3260 = vmul.f32 %v3184, %v3234
        %v3261 = vmul.f32 %v3186, %v3234
        %v3262 = vmul.f32 %v3188, %v3234
        %v3263 = vmul.f32 %v3190, %v3234
        %v3264 = vmul.f32 %v3192, %v3234
        %v3265 = vmul.f32 %v3194, %v3234
        %v3266 = vmul.f32 %v3196, %v3234
        %v3267 = vpack.c.bf16 %v3236, %v3235
        %v3268 = vpack.c.bf16 %v3238, %v3237
        %v3269 = vpack.c.bf16 %v3240, %v3239
        %v3270 = vpack.c.bf16 %v3242, %v3241
        %v3271 = vpack.c.bf16 %v3244, %v3243
        %v3272 = vpack.c.bf16 %v3246, %v3245
        %v3273 = vpack.c.bf16 %v3248, %v3247
        %v3274 = vpack.c.bf16 %v3250, %v3249
        %v3275 = vpack.c.bf16 %v3252, %v3251
        %v3276 = vpack.c.bf16 %v3254, %v3253
        %v3277 = vpack.c.bf16 %v3256, %v3255
        %v3278 = vpack.c.bf16 %v3258, %v3257
        %v3279 = vpack.c.bf16 %v3260, %v3259
        %v3280 = vpack.c.bf16 %v3262, %v3261
        %v3281 = vpack.c.bf16 %v3264, %v3263
        %v3282 = vpack.c.bf16 %v3266, %v3265
        %3283 = vmatpush.bf16.msra.mxu0 %v3274
        %3284 = vmatpush.bf16.msra.mxu0 %v3273
        %3285 = vmatpush.bf16.msra.mxu0 %v3272
        %3286 = vmatpush.bf16.msra.mxu0 %v3271
        %3287 = vmatpush.bf16.msra.mxu0 %v3270
        %3288 = vmatpush.bf16.msra.mxu0 %v3269
        %3289 = vmatpush.bf16.msra.mxu0 %v3268
        %3290 = vmatpush.bf16.msra.mxu0 %v3267
        %3291 = vmatmul.bf16.gmra.mxu0 %v2898
        %v3292 = vpop.f32.mrf.mxu0
        %v3293 = vadd.f32 0.0, %v3292
        %v3294 = vpop.f32.mrf.mxu0
        %3295 = vdwg.mxu0
        %3296 = vmatpush.bf16.msra.mxu0 %v3282
        %3297 = vmatpush.bf16.msra.mxu0 %v3281
        %3298 = vmatpush.bf16.msra.mxu0 %v3280
        %3299 = vmatpush.bf16.msra.mxu0 %v3279
        %3300 = vmatpush.bf16.msra.mxu0 %v3278
        %3301 = vmatpush.bf16.msra.mxu0 %v3277
        %3302 = vmatpush.bf16.msra.mxu0 %v3276
        %3303 = vmatpush.bf16.msra.mxu0 %v3275
        %3304 = vmatmul.bf16.gmra.mxu0 %v2899
        %v3305 = vpop.f32.mrf.mxu0
        %v3306 = vadd.f32 %v3293, %v3305
        %v3307 = vpop.f32.mrf.mxu0
        %3308 = vdwg.mxu0
        %v3309 = vpack.c.bf16 %v2892, %v2892
        %v3310 = vpack.c.bf16 %v3306, %v3306
        %3311 = vst [vmem:[#allocation3 + $0x10] sm:$0xf] %v3309
        %3312 = vst [vmem:[#allocation3 + $0x14] sm:$0xf] %v3310
        %v3313 = vld [vmem:[%s766 + $0x30] sm:$0xf]
        %v3314 = vld [vmem:[%s766 + $0x38] sm:$0xf]
        %v3315 = vunpack.c.l.bf16 %v3313
        %v3316 = vunpack.c.l.bf16 %v3314
        %v3317 = vld [vmem:[#allocation2 + $0x70] sm:$0xff]
        %v3318 = vld [vmem:[#allocation2 + $0x78] sm:$0xff]
        %v3319 = vunpack.c.l.bf16 %v3317
        %v3320 = vunpack.c.h.bf16 %v3317
        %v3321 = vunpack.c.l.bf16 %v3318
        %v3322 = vunpack.c.h.bf16 %v3318
        %v3323 = vld [vmem:[#allocation2 + $0xb0] sm:$0xff]
        %v3324 = vld [vmem:[#allocation2 + $0xb8] sm:$0xff]
        %v3325 = vunpack.c.l.bf16 %v3323
        %v3326 = vunpack.c.h.bf16 %v3323
        %v3327 = vunpack.c.l.bf16 %v3324
        %v3328 = vunpack.c.h.bf16 %v3324
        %v3329 = vpack.c.bf16 %v3315, %v3315
        %v3330 = vpack.c.bf16 %v3319, %v3319
        %v3331 = vpack.c.bf16 %v3320, %v3320
        %v3332 = vpack.c.bf16 %v3325, %v3325
        %v3333 = vpack.c.bf16 %v3326, %v3326
        %3334 = vxpose.binary.xlu0.c.b16.start [1/16] %v3331, %v3330, 128
        %3335 = vxpose.binary.xlu0.c.b16.cont [2/16] 0, 0, 128
        %3336 = vxpose.binary.xlu0.c.b16.cont [3/16] 0, 0, 128
        %3337 = vxpose.binary.xlu0.c.b16.cont [4/16] 0, 0, 128
        %3338 = vxpose.binary.xlu0.c.b16.cont [5/16] 0, 0, 128
        %3339 = vxpose.binary.xlu0.c.b16.cont [6/16] 0, 0, 128
        %3340 = vxpose.binary.xlu0.c.b16.cont [7/16] 0, 0, 128
        %3341 = vxpose.binary.xlu0.c.b16.end [8/16] 0, 0, 128
        %v3342 = vpop.trf.xlu0
        %v3343 = vpop.trf.xlu0
        %v3344 = vpop.trf.xlu0
        %v3345 = vpop.trf.xlu0
        %v3346 = vpop.trf.xlu0
        %v3347 = vpop.trf.xlu0
        %v3348 = vpop.trf.xlu0
        %v3349 = vpop.trf.xlu0
        %v3350 = vpop.trf.xlu0
        %v3351 = vpop.trf.xlu0
        %v3352 = vpop.trf.xlu0
        %v3353 = vpop.trf.xlu0
        %v3354 = vpop.trf.xlu0
        %v3355 = vpop.trf.xlu0
        %v3356 = vpop.trf.xlu0
        %v3357 = vpop.trf.xlu0
        %v3359 = vsel %vm812, %v3342, 0
        %v3362 = vsel %vm812, %v3344, 0
        %v3365 = vsel %vm812, %v3346, 0
        %v3368 = vsel %vm812, %v3348, 0
        %v3371 = vsel %vm812, %v3350, 0
        %v3374 = vsel %vm812, %v3352, 0
        %v3377 = vsel %vm812, %v3354, 0
        %v3380 = vsel %vm812, %v3356, 0
        %v3383 = vsel %vm812, %v3343, 0
        %v3386 = vsel %vm812, %v3345, 0
        %v3389 = vsel %vm812, %v3347, 0
        %v3392 = vsel %vm812, %v3349, 0
        %v3395 = vsel %vm812, %v3351, 0
        %v3398 = vsel %vm812, %v3353, 0
        %v3401 = vsel %vm812, %v3355, 0
        %v3404 = vsel %vm812, %v3357, 0
        %v3407 = vsel %vm861, %v3329, 0
        %3409 = vmatpush.bf16.msra.mxu0 0
        %3410 = vmatpush.bf16.msra.mxu0 0
        %3411 = vmatpush.bf16.msra.mxu0 0
        %3412 = vmatpush.bf16.msra.mxu0 0
        %3413 = vmatpush.bf16.msra.mxu0 0
        %3414 = vmatpush.bf16.msra.mxu0 0
        %3415 = vmatpush.bf16.msra.mxu0 0
        %3416 = vmatpush.bf16.msra.mxu0 %v3407
        %3417 = vmatmul.bf16.gmra.mxu0 %v3359
        %v3418 = vpop.f32.mrf.mxu0
        %v3419 = vadd.f32 0.0, %v3418
        %v3420 = vpop.f32.mrf.mxu0
        %v3421 = vadd.f32 0.0, %v3420
        %3422 = vmatmul.bf16.gmra.mxu0 %v3362
        %v3423 = vpop.f32.mrf.mxu0
        %v3424 = vadd.f32 0.0, %v3423
        %v3425 = vpop.f32.mrf.mxu0
        %v3426 = vadd.f32 0.0, %v3425
        %3427 = vmatmul.bf16.gmra.mxu0 %v3365
        %v3428 = vpop.f32.mrf.mxu0
        %v3429 = vadd.f32 0.0, %v3428
        %v3430 = vpop.f32.mrf.mxu0
        %v3431 = vadd.f32 0.0, %v3430
        %3432 = vmatmul.bf16.gmra.mxu0 %v3368
        %v3433 = vpop.f32.mrf.mxu0
        %v3434 = vadd.f32 0.0, %v3433
        %v3435 = vpop.f32.mrf.mxu0
        %v3436 = vadd.f32 0.0, %v3435
        %3437 = vmatmul.bf16.gmra.mxu0 %v3371
        %v3438 = vpop.f32.mrf.mxu0
        %v3439 = vadd.f32 0.0, %v3438
        %v3440 = vpop.f32.mrf.mxu0
        %v3441 = vadd.f32 0.0, %v3440
        %3442 = vmatmul.bf16.gmra.mxu0 %v3374
        %v3443 = vpop.f32.mrf.mxu0
        %v3444 = vadd.f32 0.0, %v3443
        %v3445 = vpop.f32.mrf.mxu0
        %v3446 = vadd.f32 0.0, %v3445
        %3447 = vmatmul.bf16.gmra.mxu0 %v3377
        %v3448 = vpop.f32.mrf.mxu0
        %v3449 = vadd.f32 0.0, %v3448
        %v3450 = vpop.f32.mrf.mxu0
        %v3451 = vadd.f32 0.0, %v3450
        %3452 = vmatmul.bf16.gmra.mxu0 %v3380
        %v3453 = vpop.f32.mrf.mxu0
        %v3454 = vadd.f32 0.0, %v3453
        %v3455 = vpop.f32.mrf.mxu0
        %v3456 = vadd.f32 0.0, %v3455
        %3457 = vmatmul.bf16.gmra.mxu0 %v3383
        %v3458 = vpop.f32.mrf.mxu0
        %v3459 = vadd.f32 0.0, %v3458
        %v3460 = vpop.f32.mrf.mxu0
        %v3461 = vadd.f32 0.0, %v3460
        %3462 = vmatmul.bf16.gmra.mxu0 %v3386
        %v3463 = vpop.f32.mrf.mxu0
        %v3464 = vadd.f32 0.0, %v3463
        %v3465 = vpop.f32.mrf.mxu0
        %v3466 = vadd.f32 0.0, %v3465
        %3467 = vmatmul.bf16.gmra.mxu0 %v3389
        %v3468 = vpop.f32.mrf.mxu0
        %v3469 = vadd.f32 0.0, %v3468
        %v3470 = vpop.f32.mrf.mxu0
        %v3471 = vadd.f32 0.0, %v3470
        %3472 = vmatmul.bf16.gmra.mxu0 %v3392
        %v3473 = vpop.f32.mrf.mxu0
        %v3474 = vadd.f32 0.0, %v3473
        %v3475 = vpop.f32.mrf.mxu0
        %v3476 = vadd.f32 0.0, %v3475
        %3477 = vmatmul.bf16.gmra.mxu0 %v3395
        %v3478 = vpop.f32.mrf.mxu0
        %v3479 = vadd.f32 0.0, %v3478
        %v3480 = vpop.f32.mrf.mxu0
        %v3481 = vadd.f32 0.0, %v3480
        %3482 = vmatmul.bf16.gmra.mxu0 %v3398
        %v3483 = vpop.f32.mrf.mxu0
        %v3484 = vadd.f32 0.0, %v3483
        %v3485 = vpop.f32.mrf.mxu0
        %v3486 = vadd.f32 0.0, %v3485
        %3487 = vmatmul.bf16.gmra.mxu0 %v3401
        %v3488 = vpop.f32.mrf.mxu0
        %v3489 = vadd.f32 0.0, %v3488
        %v3490 = vpop.f32.mrf.mxu0
        %v3491 = vadd.f32 0.0, %v3490
        %3492 = vmatmul.bf16.gmra.mxu0 %v3404
        %v3493 = vpop.f32.mrf.mxu0
        %v3494 = vadd.f32 0.0, %v3493
        %v3495 = vpop.f32.mrf.mxu0
        %v3496 = vadd.f32 0.0, %v3495
        %3497 = vdwg.mxu0
        %v3498 = vmax.f32 %v3419, %v3429
        %v3499 = vmax.f32 %v3421, %v3431
        %v3500 = vmax.f32 %v3424, %v3434
        %v3501 = vmax.f32 %v3426, %v3436
        %v3502 = vmax.f32 %v3498, %v3439
        %v3503 = vmax.f32 %v3499, %v3441
        %v3504 = vmax.f32 %v3500, %v3444
        %v3505 = vmax.f32 %v3501, %v3446
        %v3506 = vmax.f32 %v3502, %v3449
        %v3507 = vmax.f32 %v3503, %v3451
        %v3508 = vmax.f32 %v3504, %v3454
        %v3509 = vmax.f32 %v3505, %v3456
        %v3510 = vmax.f32 %v3506, %v3459
        %v3511 = vmax.f32 %v3507, %v3461
        %v3512 = vmax.f32 %v3508, %v3464
        %v3513 = vmax.f32 %v3509, %v3466
        %v3514 = vmax.f32 %v3510, %v3469
        %v3515 = vmax.f32 %v3511, %v3471
        %v3516 = vmax.f32 %v3512, %v3474
        %v3517 = vmax.f32 %v3513, %v3476
        %v3518 = vmax.f32 %v3514, %v3479
        %v3519 = vmax.f32 %v3515, %v3481
        %v3520 = vmax.f32 %v3516, %v3484
        %v3521 = vmax.f32 %v3517, %v3486
        %v3522 = vmax.f32 %v3518, %v3489
        %v3523 = vmax.f32 %v3519, %v3491
        %v3524 = vmax.f32 %v3520, %v3494
        %v3525 = vmax.f32 %v3521, %v3496
        %v3526 = vmax.f32 %v3522, %v3523
        %v3527 = vmax.f32 %v3524, %v3525
        %v3528 = vmax.f32 %v3526, %v3527
        %v3529 = vrot.slane %v3528, 4
        %v3530 = vmax.f32 %v3528, %v3529
        %v3531 = vrot.slane %v3530, 2
        %v3532 = vmax.f32 %v3530, %v3531
        %v3533 = vrot.slane %v3532, 1
        %v3534 = vmax.f32 %v3532, %v3533
        %v3535 = vsub.f32 %v3419, %v3534
        %v3536 = vsub.f32 %v3421, %v3534
        %v3537 = vsub.f32 %v3424, %v3534
        %v3538 = vsub.f32 %v3426, %v3534
        %v3539 = vsub.f32 %v3429, %v3534
        %v3540 = vsub.f32 %v3431, %v3534
        %v3541 = vsub.f32 %v3434, %v3534
        %v3542 = vsub.f32 %v3436, %v3534
        %v3543 = vsub.f32 %v3439, %v3534
        %v3544 = vsub.f32 %v3441, %v3534
        %v3545 = vsub.f32 %v3444, %v3534
        %v3546 = vsub.f32 %v3446, %v3534
        %v3547 = vsub.f32 %v3449, %v3534
        %v3548 = vsub.f32 %v3451, %v3534
        %v3549 = vsub.f32 %v3454, %v3534
        %v3550 = vsub.f32 %v3456, %v3534
        %v3551 = vsub.f32 %v3459, %v3534
        %v3552 = vsub.f32 %v3461, %v3534
        %v3553 = vsub.f32 %v3464, %v3534
        %v3554 = vsub.f32 %v3466, %v3534
        %v3555 = vsub.f32 %v3469, %v3534
        %v3556 = vsub.f32 %v3471, %v3534
        %v3557 = vsub.f32 %v3474, %v3534
        %v3558 = vsub.f32 %v3476, %v3534
        %v3559 = vsub.f32 %v3479, %v3534
        %v3560 = vsub.f32 %v3481, %v3534
        %v3561 = vsub.f32 %v3484, %v3534
        %v3562 = vsub.f32 %v3486, %v3534
        %v3563 = vsub.f32 %v3489, %v3534
        %v3564 = vsub.f32 %v3491, %v3534
        %v3565 = vsub.f32 %v3494, %v3534
        %v3566 = vsub.f32 %v3496, %v3534
        %v3567 = vmul.f32 %v3535, 1.442695
        %v3568 = vpow.pop %v3567
        %v3569 = vmul.f32 %v3536, 1.442695
        %v3570 = vpow.pop %v3569
        %v3571 = vmul.f32 %v3537, 1.442695
        %v3572 = vpow.pop %v3571
        %v3573 = vmul.f32 %v3538, 1.442695
        %v3574 = vpow.pop %v3573
        %v3575 = vmul.f32 %v3539, 1.442695
        %v3576 = vpow.pop %v3575
        %v3577 = vmul.f32 %v3540, 1.442695
        %v3578 = vpow.pop %v3577
        %v3579 = vmul.f32 %v3541, 1.442695
        %v3580 = vpow.pop %v3579
        %v3581 = vmul.f32 %v3542, 1.442695
        %v3582 = vpow.pop %v3581
        %v3583 = vmul.f32 %v3543, 1.442695
        %v3584 = vpow.pop %v3583
        %v3585 = vmul.f32 %v3544, 1.442695
        %v3586 = vpow.pop %v3585
        %v3587 = vmul.f32 %v3545, 1.442695
        %v3588 = vpow.pop %v3587
        %v3589 = vmul.f32 %v3546, 1.442695
        %v3590 = vpow.pop %v3589
        %v3591 = vmul.f32 %v3547, 1.442695
        %v3592 = vpow.pop %v3591
        %v3593 = vmul.f32 %v3548, 1.442695
        %v3594 = vpow.pop %v3593
        %v3595 = vmul.f32 %v3549, 1.442695
        %v3596 = vpow.pop %v3595
        %v3597 = vmul.f32 %v3550, 1.442695
        %v3598 = vpow.pop %v3597
        %v3599 = vmul.f32 %v3551, 1.442695
        %v3600 = vpow.pop %v3599
        %v3601 = vmul.f32 %v3552, 1.442695
        %v3602 = vpow.pop %v3601
        %v3603 = vmul.f32 %v3553, 1.442695
        %v3604 = vpow.pop %v3603
        %v3605 = vmul.f32 %v3554, 1.442695
        %v3606 = vpow.pop %v3605
        %v3607 = vmul.f32 %v3555, 1.442695
        %v3608 = vpow.pop %v3607
        %v3609 = vmul.f32 %v3556, 1.442695
        %v3610 = vpow.pop %v3609
        %v3611 = vmul.f32 %v3557, 1.442695
        %v3612 = vpow.pop %v3611
        %v3613 = vmul.f32 %v3558, 1.442695
        %v3614 = vpow.pop %v3613
        %v3615 = vmul.f32 %v3559, 1.442695
        %v3616 = vpow.pop %v3615
        %v3617 = vmul.f32 %v3560, 1.442695
        %v3618 = vpow.pop %v3617
        %v3619 = vmul.f32 %v3561, 1.442695
        %v3620 = vpow.pop %v3619
        %v3621 = vmul.f32 %v3562, 1.442695
        %v3622 = vpow.pop %v3621
        %v3623 = vmul.f32 %v3563, 1.442695
        %v3624 = vpow.pop %v3623
        %v3625 = vmul.f32 %v3564, 1.442695
        %v3626 = vpow.pop %v3625
        %v3627 = vmul.f32 %v3565, 1.442695
        %v3628 = vpow.pop %v3627
        %v3629 = vmul.f32 %v3566, 1.442695
        %v3630 = vpow.pop %v3629
        %v3631 = vadd.f32 %v3568, %v3570
        %v3632 = vadd.f32 %v3631, %v3572
        %v3633 = vadd.f32 %v3632, %v3574
        %v3634 = vadd.f32 %v3633, %v3576
        %v3635 = vadd.f32 %v3634, %v3578
        %v3636 = vadd.f32 %v3635, %v3580
        %v3637 = vadd.f32 %v3636, %v3582
        %v3638 = vadd.f32 %v3637, %v3584
        %v3639 = vadd.f32 %v3638, %v3586
        %v3640 = vadd.f32 %v3639, %v3588
        %v3641 = vadd.f32 %v3640, %v3590
        %v3642 = vadd.f32 %v3641, %v3592
        %v3643 = vadd.f32 %v3642, %v3594
        %v3644 = vadd.f32 %v3643, %v3596
        %v3645 = vadd.f32 %v3644, %v3598
        %v3646 = vadd.f32 %v3645, %v3600
        %v3647 = vadd.f32 %v3646, %v3602
        %v3648 = vadd.f32 %v3647, %v3604
        %v3649 = vadd.f32 %v3648, %v3606
        %v3650 = vadd.f32 %v3649, %v3608
        %v3651 = vadd.f32 %v3650, %v3610
        %v3652 = vadd.f32 %v3651, %v3612
        %v3653 = vadd.f32 %v3652, %v3614
        %v3654 = vadd.f32 %v3653, %v3616
        %v3655 = vadd.f32 %v3654, %v3618
        %v3656 = vadd.f32 %v3655, %v3620
        %v3657 = vadd.f32 %v3656, %v3622
        %v3658 = vadd.f32 %v3657, %v3624
        %v3659 = vadd.f32 %v3658, %v3626
        %v3660 = vadd.f32 %v3659, %v3628
        %v3661 = vadd.f32 %v3660, %v3630
        %v3662 = vrot.slane %v3661, 4
        %v3663 = vadd.f32 %v3661, %v3662
        %v3664 = vrot.slane %v3663, 2
        %v3665 = vadd.f32 %v3663, %v3664
        %v3666 = vrot.slane %v3665, 1
        %v3667 = vadd.f32 %v3665, %v3666
        %v3668 = vrcp.pop %v3667
        %v3669 = vmul.f32 %v3568, %v3668
        %v3670 = vmul.f32 %v3570, %v3668
        %v3671 = vmul.f32 %v3572, %v3668
        %v3672 = vmul.f32 %v3574, %v3668
        %v3673 = vmul.f32 %v3576, %v3668
        %v3674 = vmul.f32 %v3578, %v3668
        %v3675 = vmul.f32 %v3580, %v3668
        %v3676 = vmul.f32 %v3582, %v3668
        %v3677 = vmul.f32 %v3584, %v3668
        %v3678 = vmul.f32 %v3586, %v3668
        %v3679 = vmul.f32 %v3588, %v3668
        %v3680 = vmul.f32 %v3590, %v3668
        %v3681 = vmul.f32 %v3592, %v3668
        %v3682 = vmul.f32 %v3594, %v3668
        %v3683 = vmul.f32 %v3596, %v3668
        %v3684 = vmul.f32 %v3598, %v3668
        %v3685 = vmul.f32 %v3600, %v3668
        %v3686 = vmul.f32 %v3602, %v3668
        %v3687 = vmul.f32 %v3604, %v3668
        %v3688 = vmul.f32 %v3606, %v3668
        %v3689 = vmul.f32 %v3608, %v3668
        %v3690 = vmul.f32 %v3610, %v3668
        %v3691 = vmul.f32 %v3612, %v3668
        %v3692 = vmul.f32 %v3614, %v3668
        %v3693 = vmul.f32 %v3616, %v3668
        %v3694 = vmul.f32 %v3618, %v3668
        %v3695 = vmul.f32 %v3620, %v3668
        %v3696 = vmul.f32 %v3622, %v3668
        %v3697 = vmul.f32 %v3624, %v3668
        %v3698 = vmul.f32 %v3626, %v3668
        %v3699 = vmul.f32 %v3628, %v3668
        %v3700 = vmul.f32 %v3630, %v3668
        %v3701 = vpack.c.bf16 %v3670, %v3669
        %v3702 = vpack.c.bf16 %v3672, %v3671
        %v3703 = vpack.c.bf16 %v3674, %v3673
        %v3704 = vpack.c.bf16 %v3676, %v3675
        %v3705 = vpack.c.bf16 %v3678, %v3677
        %v3706 = vpack.c.bf16 %v3680, %v3679
        %v3707 = vpack.c.bf16 %v3682, %v3681
        %v3708 = vpack.c.bf16 %v3684, %v3683
        %v3709 = vpack.c.bf16 %v3686, %v3685
        %v3710 = vpack.c.bf16 %v3688, %v3687
        %v3711 = vpack.c.bf16 %v3690, %v3689
        %v3712 = vpack.c.bf16 %v3692, %v3691
        %v3713 = vpack.c.bf16 %v3694, %v3693
        %v3714 = vpack.c.bf16 %v3696, %v3695
        %v3715 = vpack.c.bf16 %v3698, %v3697
        %v3716 = vpack.c.bf16 %v3700, %v3699
        %3717 = vmatpush.bf16.msra.mxu0 %v3708
        %3718 = vmatpush.bf16.msra.mxu0 %v3707
        %3719 = vmatpush.bf16.msra.mxu0 %v3706
        %3720 = vmatpush.bf16.msra.mxu0 %v3705
        %3721 = vmatpush.bf16.msra.mxu0 %v3704
        %3722 = vmatpush.bf16.msra.mxu0 %v3703
        %3723 = vmatpush.bf16.msra.mxu0 %v3702
        %3724 = vmatpush.bf16.msra.mxu0 %v3701
        %3725 = vmatmul.bf16.gmra.mxu0 %v3332
        %v3726 = vpop.f32.mrf.mxu0
        %v3727 = vadd.f32 0.0, %v3726
        %v3728 = vpop.f32.mrf.mxu0
        %3729 = vdwg.mxu0
        %3730 = vmatpush.bf16.msra.mxu0 %v3716
        %3731 = vmatpush.bf16.msra.mxu0 %v3715
        %3732 = vmatpush.bf16.msra.mxu0 %v3714
        %3733 = vmatpush.bf16.msra.mxu0 %v3713
        %3734 = vmatpush.bf16.msra.mxu0 %v3712
        %3735 = vmatpush.bf16.msra.mxu0 %v3711
        %3736 = vmatpush.bf16.msra.mxu0 %v3710
        %3737 = vmatpush.bf16.msra.mxu0 %v3709
        %3738 = vmatmul.bf16.gmra.mxu0 %v3333
        %v3739 = vpop.f32.mrf.mxu0
        %v3740 = vadd.f32 %v3727, %v3739
        %v3741 = vpop.f32.mrf.mxu0
        %3742 = vdwg.mxu0
        %v3743 = vpack.c.bf16 %v3316, %v3316
        %v3744 = vpack.c.bf16 %v3321, %v3321
        %v3745 = vpack.c.bf16 %v3322, %v3322
        %v3746 = vpack.c.bf16 %v3327, %v3327
        %v3747 = vpack.c.bf16 %v3328, %v3328
        %3748 = vxpose.binary.xlu0.c.b16.start [1/16] %v3745, %v3744, 128
        %3749 = vxpose.binary.xlu0.c.b16.cont [2/16] 0, 0, 128
        %3750 = vxpose.binary.xlu0.c.b16.cont [3/16] 0, 0, 128
        %3751 = vxpose.binary.xlu0.c.b16.cont [4/16] 0, 0, 128
        %3752 = vxpose.binary.xlu0.c.b16.cont [5/16] 0, 0, 128
        %3753 = vxpose.binary.xlu0.c.b16.cont [6/16] 0, 0, 128
        %3754 = vxpose.binary.xlu0.c.b16.cont [7/16] 0, 0, 128
        %3755 = vxpose.binary.xlu0.c.b16.end [8/16] 0, 0, 128
        %v3756 = vpop.trf.xlu0
        %v3757 = vpop.trf.xlu0
        %v3758 = vpop.trf.xlu0
        %v3759 = vpop.trf.xlu0
        %v3760 = vpop.trf.xlu0
        %v3761 = vpop.trf.xlu0
        %v3762 = vpop.trf.xlu0
        %v3763 = vpop.trf.xlu0
        %v3764 = vpop.trf.xlu0
        %v3765 = vpop.trf.xlu0
        %v3766 = vpop.trf.xlu0
        %v3767 = vpop.trf.xlu0
        %v3768 = vpop.trf.xlu0
        %v3769 = vpop.trf.xlu0
        %v3770 = vpop.trf.xlu0
        %v3771 = vpop.trf.xlu0
        %v3773 = vsel %vm812, %v3756, 0
        %v3776 = vsel %vm812, %v3758, 0
        %v3779 = vsel %vm812, %v3760, 0
        %v3782 = vsel %vm812, %v3762, 0
        %v3785 = vsel %vm812, %v3764, 0
        %v3788 = vsel %vm812, %v3766, 0
        %v3791 = vsel %vm812, %v3768, 0
        %v3794 = vsel %vm812, %v3770, 0
        %v3797 = vsel %vm812, %v3757, 0
        %v3800 = vsel %vm812, %v3759, 0
        %v3803 = vsel %vm812, %v3761, 0
        %v3806 = vsel %vm812, %v3763, 0
        %v3809 = vsel %vm812, %v3765, 0
        %v3812 = vsel %vm812, %v3767, 0
        %v3815 = vsel %vm812, %v3769, 0
        %v3818 = vsel %vm812, %v3771, 0
        %v3821 = vsel %vm861, %v3743, 0
        %3823 = vmatpush.bf16.msra.mxu0 0
        %3824 = vmatpush.bf16.msra.mxu0 0
        %3825 = vmatpush.bf16.msra.mxu0 0
        %3826 = vmatpush.bf16.msra.mxu0 0
        %3827 = vmatpush.bf16.msra.mxu0 0
        %3828 = vmatpush.bf16.msra.mxu0 0
        %3829 = vmatpush.bf16.msra.mxu0 0
        %3830 = vmatpush.bf16.msra.mxu0 %v3821
        %3831 = vmatmul.bf16.gmra.mxu0 %v3773
        %v3832 = vpop.f32.mrf.mxu0
        %v3833 = vadd.f32 0.0, %v3832
        %v3834 = vpop.f32.mrf.mxu0
        %v3835 = vadd.f32 0.0, %v3834
        %3836 = vmatmul.bf16.gmra.mxu0 %v3776
        %v3837 = vpop.f32.mrf.mxu0
        %v3838 = vadd.f32 0.0, %v3837
        %v3839 = vpop.f32.mrf.mxu0
        %v3840 = vadd.f32 0.0, %v3839
        %3841 = vmatmul.bf16.gmra.mxu0 %v3779
        %v3842 = vpop.f32.mrf.mxu0
        %v3843 = vadd.f32 0.0, %v3842
        %v3844 = vpop.f32.mrf.mxu0
        %v3845 = vadd.f32 0.0, %v3844
        %3846 = vmatmul.bf16.gmra.mxu0 %v3782
        %v3847 = vpop.f32.mrf.mxu0
        %v3848 = vadd.f32 0.0, %v3847
        %v3849 = vpop.f32.mrf.mxu0
        %v3850 = vadd.f32 0.0, %v3849
        %3851 = vmatmul.bf16.gmra.mxu0 %v3785
        %v3852 = vpop.f32.mrf.mxu0
        %v3853 = vadd.f32 0.0, %v3852
        %v3854 = vpop.f32.mrf.mxu0
        %v3855 = vadd.f32 0.0, %v3854
        %3856 = vmatmul.bf16.gmra.mxu0 %v3788
        %v3857 = vpop.f32.mrf.mxu0
        %v3858 = vadd.f32 0.0, %v3857
        %v3859 = vpop.f32.mrf.mxu0
        %v3860 = vadd.f32 0.0, %v3859
        %3861 = vmatmul.bf16.gmra.mxu0 %v3791
        %v3862 = vpop.f32.mrf.mxu0
        %v3863 = vadd.f32 0.0, %v3862
        %v3864 = vpop.f32.mrf.mxu0
        %v3865 = vadd.f32 0.0, %v3864
        %3866 = vmatmul.bf16.gmra.mxu0 %v3794
        %v3867 = vpop.f32.mrf.mxu0
        %v3868 = vadd.f32 0.0, %v3867
        %v3869 = vpop.f32.mrf.mxu0
        %v3870 = vadd.f32 0.0, %v3869
        %3871 = vmatmul.bf16.gmra.mxu0 %v3797
        %v3872 = vpop.f32.mrf.mxu0
        %v3873 = vadd.f32 0.0, %v3872
        %v3874 = vpop.f32.mrf.mxu0
        %v3875 = vadd.f32 0.0, %v3874
        %3876 = vmatmul.bf16.gmra.mxu0 %v3800
        %v3877 = vpop.f32.mrf.mxu0
        %v3878 = vadd.f32 0.0, %v3877
        %v3879 = vpop.f32.mrf.mxu0
        %v3880 = vadd.f32 0.0, %v3879
        %3881 = vmatmul.bf16.gmra.mxu0 %v3803
        %v3882 = vpop.f32.mrf.mxu0
        %v3883 = vadd.f32 0.0, %v3882
        %v3884 = vpop.f32.mrf.mxu0
        %v3885 = vadd.f32 0.0, %v3884
        %3886 = vmatmul.bf16.gmra.mxu0 %v3806
        %v3887 = vpop.f32.mrf.mxu0
        %v3888 = vadd.f32 0.0, %v3887
        %v3889 = vpop.f32.mrf.mxu0
        %v3890 = vadd.f32 0.0, %v3889
        %3891 = vmatmul.bf16.gmra.mxu0 %v3809
        %v3892 = vpop.f32.mrf.mxu0
        %v3893 = vadd.f32 0.0, %v3892
        %v3894 = vpop.f32.mrf.mxu0
        %v3895 = vadd.f32 0.0, %v3894
        %3896 = vmatmul.bf16.gmra.mxu0 %v3812
        %v3897 = vpop.f32.mrf.mxu0
        %v3898 = vadd.f32 0.0, %v3897
        %v3899 = vpop.f32.mrf.mxu0
        %v3900 = vadd.f32 0.0, %v3899
        %3901 = vmatmul.bf16.gmra.mxu0 %v3815
        %v3902 = vpop.f32.mrf.mxu0
        %v3903 = vadd.f32 0.0, %v3902
        %v3904 = vpop.f32.mrf.mxu0
        %v3905 = vadd.f32 0.0, %v3904
        %3906 = vmatmul.bf16.gmra.mxu0 %v3818
        %v3907 = vpop.f32.mrf.mxu0
        %v3908 = vadd.f32 0.0, %v3907
        %v3909 = vpop.f32.mrf.mxu0
        %v3910 = vadd.f32 0.0, %v3909
        %3911 = vdwg.mxu0
        %v3912 = vmax.f32 %v3833, %v3843
        %v3913 = vmax.f32 %v3835, %v3845
        %v3914 = vmax.f32 %v3838, %v3848
        %v3915 = vmax.f32 %v3840, %v3850
        %v3916 = vmax.f32 %v3912, %v3853
        %v3917 = vmax.f32 %v3913, %v3855
        %v3918 = vmax.f32 %v3914, %v3858
        %v3919 = vmax.f32 %v3915, %v3860
        %v3920 = vmax.f32 %v3916, %v3863
        %v3921 = vmax.f32 %v3917, %v3865
        %v3922 = vmax.f32 %v3918, %v3868
        %v3923 = vmax.f32 %v3919, %v3870
        %v3924 = vmax.f32 %v3920, %v3873
        %v3925 = vmax.f32 %v3921, %v3875
        %v3926 = vmax.f32 %v3922, %v3878
        %v3927 = vmax.f32 %v3923, %v3880
        %v3928 = vmax.f32 %v3924, %v3883
        %v3929 = vmax.f32 %v3925, %v3885
        %v3930 = vmax.f32 %v3926, %v3888
        %v3931 = vmax.f32 %v3927, %v3890
        %v3932 = vmax.f32 %v3928, %v3893
        %v3933 = vmax.f32 %v3929, %v3895
        %v3934 = vmax.f32 %v3930, %v3898
        %v3935 = vmax.f32 %v3931, %v3900
        %v3936 = vmax.f32 %v3932, %v3903
        %v3937 = vmax.f32 %v3933, %v3905
        %v3938 = vmax.f32 %v3934, %v3908
        %v3939 = vmax.f32 %v3935, %v3910
        %v3940 = vmax.f32 %v3936, %v3937
        %v3941 = vmax.f32 %v3938, %v3939
        %v3942 = vmax.f32 %v3940, %v3941
        %v3943 = vrot.slane %v3942, 4
        %v3944 = vmax.f32 %v3942, %v3943
        %v3945 = vrot.slane %v3944, 2
        %v3946 = vmax.f32 %v3944, %v3945
        %v3947 = vrot.slane %v3946, 1
        %v3948 = vmax.f32 %v3946, %v3947
        %v3949 = vsub.f32 %v3833, %v3948
        %v3950 = vsub.f32 %v3835, %v3948
        %v3951 = vsub.f32 %v3838, %v3948
        %v3952 = vsub.f32 %v3840, %v3948
        %v3953 = vsub.f32 %v3843, %v3948
        %v3954 = vsub.f32 %v3845, %v3948
        %v3955 = vsub.f32 %v3848, %v3948
        %v3956 = vsub.f32 %v3850, %v3948
        %v3957 = vsub.f32 %v3853, %v3948
        %v3958 = vsub.f32 %v3855, %v3948
        %v3959 = vsub.f32 %v3858, %v3948
        %v3960 = vsub.f32 %v3860, %v3948
        %v3961 = vsub.f32 %v3863, %v3948
        %v3962 = vsub.f32 %v3865, %v3948
        %v3963 = vsub.f32 %v3868, %v3948
        %v3964 = vsub.f32 %v3870, %v3948
        %v3965 = vsub.f32 %v3873, %v3948
        %v3966 = vsub.f32 %v3875, %v3948
        %v3967 = vsub.f32 %v3878, %v3948
        %v3968 = vsub.f32 %v3880, %v3948
        %v3969 = vsub.f32 %v3883, %v3948
        %v3970 = vsub.f32 %v3885, %v3948
        %v3971 = vsub.f32 %v3888, %v3948
        %v3972 = vsub.f32 %v3890, %v3948
        %v3973 = vsub.f32 %v3893, %v3948
        %v3974 = vsub.f32 %v3895, %v3948
        %v3975 = vsub.f32 %v3898, %v3948
        %v3976 = vsub.f32 %v3900, %v3948
        %v3977 = vsub.f32 %v3903, %v3948
        %v3978 = vsub.f32 %v3905, %v3948
        %v3979 = vsub.f32 %v3908, %v3948
        %v3980 = vsub.f32 %v3910, %v3948
        %v3981 = vmul.f32 %v3949, 1.442695
        %v3982 = vpow.pop %v3981
        %v3983 = vmul.f32 %v3950, 1.442695
        %v3984 = vpow.pop %v3983
        %v3985 = vmul.f32 %v3951, 1.442695
        %v3986 = vpow.pop %v3985
        %v3987 = vmul.f32 %v3952, 1.442695
        %v3988 = vpow.pop %v3987
        %v3989 = vmul.f32 %v3953, 1.442695
        %v3990 = vpow.pop %v3989
        %v3991 = vmul.f32 %v3954, 1.442695
        %v3992 = vpow.pop %v3991
        %v3993 = vmul.f32 %v3955, 1.442695
        %v3994 = vpow.pop %v3993
        %v3995 = vmul.f32 %v3956, 1.442695
        %v3996 = vpow.pop %v3995
        %v3997 = vmul.f32 %v3957, 1.442695
        %v3998 = vpow.pop %v3997
        %v3999 = vmul.f32 %v3958, 1.442695
        %v4000 = vpow.pop %v3999
        %v4001 = vmul.f32 %v3959, 1.442695
        %v4002 = vpow.pop %v4001
        %v4003 = vmul.f32 %v3960, 1.442695
        %v4004 = vpow.pop %v4003
        %v4005 = vmul.f32 %v3961, 1.442695
        %v4006 = vpow.pop %v4005
        %v4007 = vmul.f32 %v3962, 1.442695
        %v4008 = vpow.pop %v4007
        %v4009 = vmul.f32 %v3963, 1.442695
        %v4010 = vpow.pop %v4009
        %v4011 = vmul.f32 %v3964, 1.442695
        %v4012 = vpow.pop %v4011
        %v4013 = vmul.f32 %v3965, 1.442695
        %v4014 = vpow.pop %v4013
        %v4015 = vmul.f32 %v3966, 1.442695
        %v4016 = vpow.pop %v4015
        %v4017 = vmul.f32 %v3967, 1.442695
        %v4018 = vpow.pop %v4017
        %v4019 = vmul.f32 %v3968, 1.442695
        %v4020 = vpow.pop %v4019
        %v4021 = vmul.f32 %v3969, 1.442695
        %v4022 = vpow.pop %v4021
        %v4023 = vmul.f32 %v3970, 1.442695
        %v4024 = vpow.pop %v4023
        %v4025 = vmul.f32 %v3971, 1.442695
        %v4026 = vpow.pop %v4025
        %v4027 = vmul.f32 %v3972, 1.442695
        %v4028 = vpow.pop %v4027
        %v4029 = vmul.f32 %v3973, 1.442695
        %v4030 = vpow.pop %v4029
        %v4031 = vmul.f32 %v3974, 1.442695
        %v4032 = vpow.pop %v4031
        %v4033 = vmul.f32 %v3975, 1.442695
        %v4034 = vpow.pop %v4033
        %v4035 = vmul.f32 %v3976, 1.442695
        %v4036 = vpow.pop %v4035
        %v4037 = vmul.f32 %v3977, 1.442695
        %v4038 = vpow.pop %v4037
        %v4039 = vmul.f32 %v3978, 1.442695
        %v4040 = vpow.pop %v4039
        %v4041 = vmul.f32 %v3979, 1.442695
        %v4042 = vpow.pop %v4041
        %v4043 = vmul.f32 %v3980, 1.442695
        %v4044 = vpow.pop %v4043
        %v4045 = vadd.f32 %v3982, %v3984
        %v4046 = vadd.f32 %v4045, %v3986
        %v4047 = vadd.f32 %v4046, %v3988
        %v4048 = vadd.f32 %v4047, %v3990
        %v4049 = vadd.f32 %v4048, %v3992
        %v4050 = vadd.f32 %v4049, %v3994
        %v4051 = vadd.f32 %v4050, %v3996
        %v4052 = vadd.f32 %v4051, %v3998
        %v4053 = vadd.f32 %v4052, %v4000
        %v4054 = vadd.f32 %v4053, %v4002
        %v4055 = vadd.f32 %v4054, %v4004
        %v4056 = vadd.f32 %v4055, %v4006
        %v4057 = vadd.f32 %v4056, %v4008
        %v4058 = vadd.f32 %v4057, %v4010
        %v4059 = vadd.f32 %v4058, %v4012
        %v4060 = vadd.f32 %v4059, %v4014
        %v4061 = vadd.f32 %v4060, %v4016
        %v4062 = vadd.f32 %v4061, %v4018
        %v4063 = vadd.f32 %v4062, %v4020
        %v4064 = vadd.f32 %v4063, %v4022
        %v4065 = vadd.f32 %v4064, %v4024
        %v4066 = vadd.f32 %v4065, %v4026
        %v4067 = vadd.f32 %v4066, %v4028
        %v4068 = vadd.f32 %v4067, %v4030
        %v4069 = vadd.f32 %v4068, %v4032
        %v4070 = vadd.f32 %v4069, %v4034
        %v4071 = vadd.f32 %v4070, %v4036
        %v4072 = vadd.f32 %v4071, %v4038
        %v4073 = vadd.f32 %v4072, %v4040
        %v4074 = vadd.f32 %v4073, %v4042
        %v4075 = vadd.f32 %v4074, %v4044
        %v4076 = vrot.slane %v4075, 4
        %v4077 = vadd.f32 %v4075, %v4076
        %v4078 = vrot.slane %v4077, 2
        %v4079 = vadd.f32 %v4077, %v4078
        %v4080 = vrot.slane %v4079, 1
        %v4081 = vadd.f32 %v4079, %v4080
        %v4082 = vrcp.pop %v4081
        %v4083 = vmul.f32 %v3982, %v4082
        %v4084 = vmul.f32 %v3984, %v4082
        %v4085 = vmul.f32 %v3986, %v4082
        %v4086 = vmul.f32 %v3988, %v4082
        %v4087 = vmul.f32 %v3990, %v4082
        %v4088 = vmul.f32 %v3992, %v4082
        %v4089 = vmul.f32 %v3994, %v4082
        %v4090 = vmul.f32 %v3996, %v4082
        %v4091 = vmul.f32 %v3998, %v4082
        %v4092 = vmul.f32 %v4000, %v4082
        %v4093 = vmul.f32 %v4002, %v4082
        %v4094 = vmul.f32 %v4004, %v4082
        %v4095 = vmul.f32 %v4006, %v4082
        %v4096 = vmul.f32 %v4008, %v4082
        %v4097 = vmul.f32 %v4010, %v4082
        %v4098 = vmul.f32 %v4012, %v4082
        %v4099 = vmul.f32 %v4014, %v4082
        %v4100 = vmul.f32 %v4016, %v4082
        %v4101 = vmul.f32 %v4018, %v4082
        %v4102 = vmul.f32 %v4020, %v4082
        %v4103 = vmul.f32 %v4022, %v4082
        %v4104 = vmul.f32 %v4024, %v4082
        %v4105 = vmul.f32 %v4026, %v4082
        %v4106 = vmul.f32 %v4028, %v4082
        %v4107 = vmul.f32 %v4030, %v4082
        %v4108 = vmul.f32 %v4032, %v4082
        %v4109 = vmul.f32 %v4034, %v4082
        %v4110 = vmul.f32 %v4036, %v4082
        %v4111 = vmul.f32 %v4038, %v4082
        %v4112 = vmul.f32 %v4040, %v4082
        %v4113 = vmul.f32 %v4042, %v4082
        %v4114 = vmul.f32 %v4044, %v4082
        %v4115 = vpack.c.bf16 %v4084, %v4083
        %v4116 = vpack.c.bf16 %v4086, %v4085
        %v4117 = vpack.c.bf16 %v4088, %v4087
        %v4118 = vpack.c.bf16 %v4090, %v4089
        %v4119 = vpack.c.bf16 %v4092, %v4091
        %v4120 = vpack.c.bf16 %v4094, %v4093
        %v4121 = vpack.c.bf16 %v4096, %v4095
        %v4122 = vpack.c.bf16 %v4098, %v4097
        %v4123 = vpack.c.bf16 %v4100, %v4099
        %v4124 = vpack.c.bf16 %v4102, %v4101
        %v4125 = vpack.c.bf16 %v4104, %v4103
        %v4126 = vpack.c.bf16 %v4106, %v4105
        %v4127 = vpack.c.bf16 %v4108, %v4107
        %v4128 = vpack.c.bf16 %v4110, %v4109
        %v4129 = vpack.c.bf16 %v4112, %v4111
        %v4130 = vpack.c.bf16 %v4114, %v4113
        %4131 = vmatpush.bf16.msra.mxu0 %v4122
        %4132 = vmatpush.bf16.msra.mxu0 %v4121
        %4133 = vmatpush.bf16.msra.mxu0 %v4120
        %4134 = vmatpush.bf16.msra.mxu0 %v4119
        %4135 = vmatpush.bf16.msra.mxu0 %v4118
        %4136 = vmatpush.bf16.msra.mxu0 %v4117
        %4137 = vmatpush.bf16.msra.mxu0 %v4116
        %4138 = vmatpush.bf16.msra.mxu0 %v4115
        %4139 = vmatmul.bf16.gmra.mxu0 %v3746
        %v4140 = vpop.f32.mrf.mxu0
        %v4141 = vadd.f32 0.0, %v4140
        %v4142 = vpop.f32.mrf.mxu0
        %4143 = vdwg.mxu0
        %4144 = vmatpush.bf16.msra.mxu0 %v4130
        %4145 = vmatpush.bf16.msra.mxu0 %v4129
        %4146 = vmatpush.bf16.msra.mxu0 %v4128
        %4147 = vmatpush.bf16.msra.mxu0 %v4127
        %4148 = vmatpush.bf16.msra.mxu0 %v4126
        %4149 = vmatpush.bf16.msra.mxu0 %v4125
        %4150 = vmatpush.bf16.msra.mxu0 %v4124
        %4151 = vmatpush.bf16.msra.mxu0 %v4123
        %4152 = vmatmul.bf16.gmra.mxu0 %v3747
        %v4153 = vpop.f32.mrf.mxu0
        %v4154 = vadd.f32 %v4141, %v4153
        %v4155 = vpop.f32.mrf.mxu0
        %4156 = vdwg.mxu0
        %v4157 = vpack.c.bf16 %v3740, %v3740
        %v4158 = vpack.c.bf16 %v4154, %v4154
        %4159 = vst [vmem:[#allocation3 + $0x18] sm:$0xf] %v4157
        %4160 = vst [vmem:[#allocation3 + $0x1c] sm:$0xf] %v4158
        %v4161 = vld [vmem:[%s3] sm:$0xf]
        %v4162 = vld [vmem:[%s3 + $0x4] sm:$0xf]
        %v4163 = vld [vmem:[%s3 + $0x8] sm:$0xf]
        %v4164 = vld [vmem:[%s3 + $0xc] sm:$0xf]
        %v4165 = vld [vmem:[%s3 + $0x10] sm:$0xf]
        %v4166 = vld [vmem:[%s3 + $0x14] sm:$0xf]
        %v4167 = vld [vmem:[%s3 + $0x18] sm:$0xf]
        %v4168 = vld [vmem:[%s3 + $0x1c] sm:$0xf]
        %v4169 = vld [vmem:[#allocation3] sm:$0xf]
        %v4170 = vld [vmem:[#allocation3 + $0x4] sm:$0xf]
        %v4171 = vld [vmem:[#allocation3 + $0x8] sm:$0xf]
        %v4172 = vld [vmem:[#allocation3 + $0xc] sm:$0xf]
        %v4173 = vld [vmem:[#allocation3 + $0x10] sm:$0xf]
        %v4174 = vld [vmem:[#allocation3 + $0x14] sm:$0xf]
        %v4175 = vld [vmem:[#allocation3 + $0x18] sm:$0xf]
        %v4176 = vld [vmem:[#allocation3 + $0x1c] sm:$0xf]
        %v4185 = vunpack.c.l.b16 %v4161
        %v4186 = vunpack.c.l.b16 %v4162
        %v4187 = vunpack.c.l.b16 %v4163
        %v4188 = vunpack.c.l.b16 %v4164
        %v4189 = vunpack.c.l.b16 %v4165
        %v4190 = vunpack.c.l.b16 %v4166
        %v4191 = vunpack.c.l.b16 %v4167
        %v4192 = vunpack.c.l.b16 %v4168
        %v4193 = vpack.c.b16 %v4186, %v4185
        %v4194 = vpack.c.b16 %v4188, %v4187
        %v4195 = vpack.c.b16 %v4190, %v4189
        %v4196 = vpack.c.b16 %v4192, %v4191
        %v4205 = vunpack.c.l.b16 %v4169
        %v4206 = vunpack.c.l.b16 %v4170
        %v4207 = vunpack.c.l.b16 %v4171
        %v4208 = vunpack.c.l.b16 %v4172
        %v4209 = vunpack.c.l.b16 %v4173
        %v4210 = vunpack.c.l.b16 %v4174
        %v4211 = vunpack.c.l.b16 %v4175
        %v4212 = vunpack.c.l.b16 %v4176
        %v4213 = vpack.c.b16 %v4206, %v4205
        %v4214 = vpack.c.b16 %v4208, %v4207
        %v4215 = vpack.c.b16 %v4210, %v4209
        %v4216 = vpack.c.b16 %v4212, %v4211
        %vm4221 = vcmask 523264
        %v4223 = vsel %vm4221, %v4193, 0
        %v4226 = vsel %vm4221, %v4194, 0
        %v4229 = vsel %vm4221, %v4195, 0
        %v4232 = vsel %vm4221, %v4196, 0
        %4234 = vmatpush.bf16.msra.mxu0 0
        %4235 = vmatpush.bf16.msra.mxu0 0
        %4236 = vmatpush.bf16.msra.mxu0 0
        %4237 = vmatpush.bf16.msra.mxu0 0
        %4238 = vmatpush.bf16.msra.mxu0 %v4216
        %4239 = vmatpush.bf16.msra.mxu0 %v4215
        %4240 = vmatpush.bf16.msra.mxu0 %v4214
        %4241 = vmatpush.bf16.msra.mxu0 %v4213
        %4242 = vmatmul.bf16.gmra.mxu0 %v4223
        %v4243 = vpop.f32.mrf.mxu0
        %v4244 = vadd.f32 0.0, %v4243
        %v4245 = vpop.f32.mrf.mxu0
        %v4246 = vadd.f32 0.0, %v4245
        %4247 = vmatmul.bf16.gmra.mxu0 %v4226
        %v4248 = vpop.f32.mrf.mxu0
        %v4249 = vadd.f32 0.0, %v4248
        %v4250 = vpop.f32.mrf.mxu0
        %v4251 = vadd.f32 0.0, %v4250
        %4252 = vmatmul.bf16.gmra.mxu0 %v4229
        %v4253 = vpop.f32.mrf.mxu0
        %v4254 = vadd.f32 0.0, %v4253
        %v4255 = vpop.f32.mrf.mxu0
        %v4256 = vadd.f32 0.0, %v4255
        %4257 = vmatmul.bf16.gmra.mxu0 %v4232
        %v4258 = vpop.f32.mrf.mxu0
        %v4259 = vadd.f32 0.0, %v4258
        %v4260 = vpop.f32.mrf.mxu0
        %v4261 = vadd.f32 0.0, %v4260
        %4262 = vdwg.mxu0
        %s4263 = smul.addr %s763, 8
        %s4264 = scalar_lea.vmem %s311, %s4263 [#allocation4]
        %v4265 = vld [vmem:[%s4264] sm:$0xff]
        %v4266 = vld [vmem:[%s4264 + $0x10] sm:$0xff]
        %v4267 = vld [vmem:[%s4264 + $0x20] sm:$0xff]
        %v4268 = vld [vmem:[%s4264 + $0x30] sm:$0xff]
        %v4269 = vld [vmem:[%s4264 + $0x40] sm:$0xff]
        %v4270 = vld [vmem:[%s4264 + $0x50] sm:$0xff]
        %v4271 = vld [vmem:[%s4264 + $0x60] sm:$0xff]
        %v4272 = vld [vmem:[%s4264 + $0x70] sm:$0xff]
        %v4273 = vadd.f32 %v4265, %v4244
        %v4274 = vadd.f32 %v4266, %v4246
        %v4275 = vadd.f32 %v4267, %v4249
        %v4276 = vadd.f32 %v4268, %v4251
        %v4277 = vadd.f32 %v4269, %v4254
        %v4278 = vadd.f32 %v4270, %v4256
        %v4279 = vadd.f32 %v4271, %v4259
        %v4280 = vadd.f32 %v4272, %v4261
        %v4281 = vld [vmem:[%s4] sm:$0xff]
        %v4282 = vld [vmem:[%s4 + $0x8] sm:$0xff]
        %v4283 = vld [vmem:[%s4 + $0x10] sm:$0xff]
        %v4284 = vld [vmem:[%s4 + $0x18] sm:$0xff]
        %v4285 = vld [vmem:[%s4 + $0x20] sm:$0xff]
        %v4286 = vld [vmem:[%s4 + $0x28] sm:$0xff]
        %v4287 = vld [vmem:[%s4 + $0x30] sm:$0xff]
        %v4288 = vld [vmem:[%s4 + $0x38] sm:$0xff]
        %v4289 = vld [vmem:[%s4 + $0x40] sm:$0xff]
        %v4290 = vld [vmem:[%s4 + $0x48] sm:$0xff]
        %v4291 = vld [vmem:[%s4 + $0x50] sm:$0xff]
        %v4292 = vld [vmem:[%s4 + $0x58] sm:$0xff]
        %v4293 = vld [vmem:[%s4 + $0x60] sm:$0xff]
        %v4294 = vld [vmem:[%s4 + $0x68] sm:$0xff]
        %v4295 = vld [vmem:[%s4 + $0x70] sm:$0xff]
        %v4296 = vld [vmem:[%s4 + $0x78] sm:$0xff]
        %v4297 = vpack.c.bf16 %v4273, %v4273
        %v4298 = vpack.c.bf16 %v4274, %v4274
        %v4299 = vpack.c.bf16 %v4275, %v4275
        %v4300 = vpack.c.bf16 %v4276, %v4276
        %v4301 = vpack.c.bf16 %v4277, %v4277
        %v4302 = vpack.c.bf16 %v4278, %v4278
        %v4303 = vpack.c.bf16 %v4279, %v4279
        %v4304 = vpack.c.bf16 %v4280, %v4280
        %v4305 = vunpack.c.l.bf16 %v4297
        %v4306 = vunpack.c.l.bf16 %v4298
        %v4307 = vunpack.c.l.bf16 %v4299
        %v4308 = vunpack.c.l.bf16 %v4300
        %v4309 = vunpack.c.l.bf16 %v4301
        %v4310 = vunpack.c.l.bf16 %v4302
        %v4311 = vunpack.c.l.bf16 %v4303
        %v4312 = vunpack.c.l.bf16 %v4304
        %v4313 = vsub.f32 %v4273, %v4305
        %v4314 = vsub.f32 %v4274, %v4306
        %v4315 = vsub.f32 %v4275, %v4307
        %v4316 = vsub.f32 %v4276, %v4308
        %v4317 = vsub.f32 %v4277, %v4309
        %v4318 = vsub.f32 %v4278, %v4310
        %v4319 = vsub.f32 %v4279, %v4311
        %v4320 = vsub.f32 %v4280, %v4312
        %4321 = vmatpush.msra.mxu0 %v4296
        %4322 = vmatpush.msra.mxu0 %v4295
        %4323 = vmatpush.msra.mxu0 %v4294
        %4324 = vmatpush.msra.mxu0 %v4293
        %4325 = vmatpush.msra.mxu0 %v4292
        %4326 = vmatpush.msra.mxu0 %v4291
        %4327 = vmatpush.msra.mxu0 %v4290
        %4328 = vmatpush.msra.mxu0 %v4289
        %4329 = vmatpush.msra.mxu0 %v4288
        %4330 = vmatpush.msra.mxu0 %v4287
        %4331 = vmatpush.msra.mxu0 %v4286
        %4332 = vmatpush.msra.mxu0 %v4285
        %4333 = vmatpush.msra.mxu0 %v4284
        %4334 = vmatpush.msra.mxu0 %v4283
        %4335 = vmatpush.msra.mxu0 %v4282
        %4336 = vmatpush.msra.mxu0 %v4281
        %4337 = vmatmul.f32.gmra.mxu0 %v4313
        %v4338 = vpop.f32.mrf.mxu0
        %v4339 = vadd.f32 0.0, %v4338
        %4340 = vmatmul.f32.gmra.mxu0 %v4314
        %v4341 = vpop.f32.mrf.mxu0
        %v4342 = vadd.f32 0.0, %v4341
        %4343 = vmatmul.f32.gmra.mxu0 %v4315
        %v4344 = vpop.f32.mrf.mxu0
        %v4345 = vadd.f32 0.0, %v4344
        %4346 = vmatmul.f32.gmra.mxu0 %v4316
        %v4347 = vpop.f32.mrf.mxu0
        %v4348 = vadd.f32 0.0, %v4347
        %4349 = vmatmul.f32.gmra.mxu0 %v4317
        %v4350 = vpop.f32.mrf.mxu0
        %v4351 = vadd.f32 0.0, %v4350
        %4352 = vmatmul.f32.gmra.mxu0 %v4318
        %v4353 = vpop.f32.mrf.mxu0
        %v4354 = vadd.f32 0.0, %v4353
        %4355 = vmatmul.f32.gmra.mxu0 %v4319
        %v4356 = vpop.f32.mrf.mxu0
        %v4357 = vadd.f32 0.0, %v4356
        %4358 = vmatmul.f32.gmra.mxu0 %v4320
        %v4359 = vpop.f32.mrf.mxu0
        %v4360 = vadd.f32 0.0, %v4359
        %4361 = vdwg.mxu0
        %4362 = vmatpush.msra.mxu0 %v4296
        %4363 = vmatpush.msra.mxu0 %v4295
        %4364 = vmatpush.msra.mxu0 %v4294
        %4365 = vmatpush.msra.mxu0 %v4293
        %4366 = vmatpush.msra.mxu0 %v4292
        %4367 = vmatpush.msra.mxu0 %v4291
        %4368 = vmatpush.msra.mxu0 %v4290
        %4369 = vmatpush.msra.mxu0 %v4289
        %4370 = vmatpush.msra.mxu0 %v4288
        %4371 = vmatpush.msra.mxu0 %v4287
        %4372 = vmatpush.msra.mxu0 %v4286
        %4373 = vmatpush.msra.mxu0 %v4285
        %4374 = vmatpush.msra.mxu0 %v4284
        %4375 = vmatpush.msra.mxu0 %v4283
        %4376 = vmatpush.msra.mxu0 %v4282
        %4377 = vmatpush.msra.mxu0 %v4281
        %4378 = vmatmul.f32.gmra.mxu0 %v4305
        %v4379 = vpop.f32.mrf.mxu0
        %v4380 = vadd.f32 %v4339, %v4379
        %4381 = vmatmul.f32.gmra.mxu0 %v4306
        %v4382 = vpop.f32.mrf.mxu0
        %v4383 = vadd.f32 %v4342, %v4382
        %4384 = vmatmul.f32.gmra.mxu0 %v4307
        %v4385 = vpop.f32.mrf.mxu0
        %v4386 = vadd.f32 %v4345, %v4385
        %4387 = vmatmul.f32.gmra.mxu0 %v4308
        %v4388 = vpop.f32.mrf.mxu0
        %v4389 = vadd.f32 %v4348, %v4388
        %4390 = vmatmul.f32.gmra.mxu0 %v4309
        %v4391 = vpop.f32.mrf.mxu0
        %v4392 = vadd.f32 %v4351, %v4391
        %4393 = vmatmul.f32.gmra.mxu0 %v4310
        %v4394 = vpop.f32.mrf.mxu0
        %v4395 = vadd.f32 %v4354, %v4394
        %4396 = vmatmul.f32.gmra.mxu0 %v4311
        %v4397 = vpop.f32.mrf.mxu0
        %v4398 = vadd.f32 %v4357, %v4397
        %4399 = vmatmul.f32.gmra.mxu0 %v4312
        %v4400 = vpop.f32.mrf.mxu0
        %v4401 = vadd.f32 %v4360, %v4400
        %4402 = vdwg.mxu0
        %v4403 = vsub.f32 %v4273, %v4380
        %v4404 = vsub.f32 %v4274, %v4383
        %v4405 = vsub.f32 %v4275, %v4386
        %v4406 = vsub.f32 %v4276, %v4389
        %v4407 = vsub.f32 %v4277, %v4392
        %v4408 = vsub.f32 %v4278, %v4395
        %v4409 = vsub.f32 %v4279, %v4398
        %v4410 = vsub.f32 %v4280, %v4401
        %v4411 = vmul.f32 %v4403, %v4403
        %v4412 = vmul.f32 %v4404, %v4404
        %v4413 = vmul.f32 %v4405, %v4405
        %v4414 = vmul.f32 %v4406, %v4406
        %v4415 = vmul.f32 %v4407, %v4407
        %v4416 = vmul.f32 %v4408, %v4408
        %v4417 = vmul.f32 %v4409, %v4409
        %v4418 = vmul.f32 %v4410, %v4410
        %v4419 = vpack.c.bf16 %v4411, %v4411
        %v4420 = vpack.c.bf16 %v4412, %v4412
        %v4421 = vpack.c.bf16 %v4413, %v4413
        %v4422 = vpack.c.bf16 %v4414, %v4414
        %v4423 = vpack.c.bf16 %v4415, %v4415
        %v4424 = vpack.c.bf16 %v4416, %v4416
        %v4425 = vpack.c.bf16 %v4417, %v4417
        %v4426 = vpack.c.bf16 %v4418, %v4418
        %v4427 = vunpack.c.l.bf16 %v4419
        %v4428 = vunpack.c.l.bf16 %v4420
        %v4429 = vunpack.c.l.bf16 %v4421
        %v4430 = vunpack.c.l.bf16 %v4422
        %v4431 = vunpack.c.l.bf16 %v4423
        %v4432 = vunpack.c.l.bf16 %v4424
        %v4433 = vunpack.c.l.bf16 %v4425
        %v4434 = vunpack.c.l.bf16 %v4426
        %v4435 = vsub.f32 %v4411, %v4427
        %v4436 = vsub.f32 %v4412, %v4428
        %v4437 = vsub.f32 %v4413, %v4429
        %v4438 = vsub.f32 %v4414, %v4430
        %v4439 = vsub.f32 %v4415, %v4431
        %v4440 = vsub.f32 %v4416, %v4432
        %v4441 = vsub.f32 %v4417, %v4433
        %v4442 = vsub.f32 %v4418, %v4434
        %4443 = vmatpush.msra.mxu0 %v4296
        %4444 = vmatpush.msra.mxu0 %v4295
        %4445 = vmatpush.msra.mxu0 %v4294
        %4446 = vmatpush.msra.mxu0 %v4293
        %4447 = vmatpush.msra.mxu0 %v4292
        %4448 = vmatpush.msra.mxu0 %v4291
        %4449 = vmatpush.msra.mxu0 %v4290
        %4450 = vmatpush.msra.mxu0 %v4289
        %4451 = vmatpush.msra.mxu0 %v4288
        %4452 = vmatpush.msra.mxu0 %v4287
        %4453 = vmatpush.msra.mxu0 %v4286
        %4454 = vmatpush.msra.mxu0 %v4285
        %4455 = vmatpush.msra.mxu0 %v4284
        %4456 = vmatpush.msra.mxu0 %v4283
        %4457 = vmatpush.msra.mxu0 %v4282
        %4458 = vmatpush.msra.mxu0 %v4281
        %4459 = vmatmul.f32.gmra.mxu0 %v4435
        %v4460 = vpop.f32.mrf.mxu0
        %v4461 = vadd.f32 0.0, %v4460
        %4462 = vmatmul.f32.gmra.mxu0 %v4436
        %v4463 = vpop.f32.mrf.mxu0
        %v4464 = vadd.f32 0.0, %v4463
        %4465 = vmatmul.f32.gmra.mxu0 %v4437
        %v4466 = vpop.f32.mrf.mxu0
        %v4467 = vadd.f32 0.0, %v4466
        %4468 = vmatmul.f32.gmra.mxu0 %v4438
        %v4469 = vpop.f32.mrf.mxu0
        %v4470 = vadd.f32 0.0, %v4469
        %4471 = vmatmul.f32.gmra.mxu0 %v4439
        %v4472 = vpop.f32.mrf.mxu0
        %v4473 = vadd.f32 0.0, %v4472
        %4474 = vmatmul.f32.gmra.mxu0 %v4440
        %v4475 = vpop.f32.mrf.mxu0
        %v4476 = vadd.f32 0.0, %v4475
        %4477 = vmatmul.f32.gmra.mxu0 %v4441
        %v4478 = vpop.f32.mrf.mxu0
        %v4479 = vadd.f32 0.0, %v4478
        %4480 = vmatmul.f32.gmra.mxu0 %v4442
        %v4481 = vpop.f32.mrf.mxu0
        %v4482 = vadd.f32 0.0, %v4481
        %4483 = vdwg.mxu0
        %4484 = vmatpush.msra.mxu0 %v4296
        %4485 = vmatpush.msra.mxu0 %v4295
        %4486 = vmatpush.msra.mxu0 %v4294
        %4487 = vmatpush.msra.mxu0 %v4293
        %4488 = vmatpush.msra.mxu0 %v4292
        %4489 = vmatpush.msra.mxu0 %v4291
        %4490 = vmatpush.msra.mxu0 %v4290
        %4491 = vmatpush.msra.mxu0 %v4289
        %4492 = vmatpush.msra.mxu0 %v4288
        %4493 = vmatpush.msra.mxu0 %v4287
        %4494 = vmatpush.msra.mxu0 %v4286
        %4495 = vmatpush.msra.mxu0 %v4285
        %4496 = vmatpush.msra.mxu0 %v4284
        %4497 = vmatpush.msra.mxu0 %v4283
        %4498 = vmatpush.msra.mxu0 %v4282
        %4499 = vmatpush.msra.mxu0 %v4281
        %4500 = vmatmul.f32.gmra.mxu0 %v4427
        %v4501 = vpop.f32.mrf.mxu0
        %v4502 = vadd.f32 %v4461, %v4501
        %4503 = vmatmul.f32.gmra.mxu0 %v4428
        %v4504 = vpop.f32.mrf.mxu0
        %v4505 = vadd.f32 %v4464, %v4504
        %4506 = vmatmul.f32.gmra.mxu0 %v4429
        %v4507 = vpop.f32.mrf.mxu0
        %v4508 = vadd.f32 %v4467, %v4507
        %4509 = vmatmul.f32.gmra.mxu0 %v4430
        %v4510 = vpop.f32.mrf.mxu0
        %v4511 = vadd.f32 %v4470, %v4510
        %4512 = vmatmul.f32.gmra.mxu0 %v4431
        %v4513 = vpop.f32.mrf.mxu0
        %v4514 = vadd.f32 %v4473, %v4513
        %4515 = vmatmul.f32.gmra.mxu0 %v4432
        %v4516 = vpop.f32.mrf.mxu0
        %v4517 = vadd.f32 %v4476, %v4516
        %4518 = vmatmul.f32.gmra.mxu0 %v4433
        %v4519 = vpop.f32.mrf.mxu0
        %v4520 = vadd.f32 %v4479, %v4519
        %4521 = vmatmul.f32.gmra.mxu0 %v4434
        %v4522 = vpop.f32.mrf.mxu0
        %v4523 = vadd.f32 %v4482, %v4522
        %4524 = vdwg.mxu0
        %v4525 = vadd.f32 %v4502, 1e-05
        %v4526 = vadd.f32 %v4505, 1e-05
        %v4527 = vadd.f32 %v4508, 1e-05
        %v4528 = vadd.f32 %v4511, 1e-05
        %v4529 = vadd.f32 %v4514, 1e-05
        %v4530 = vadd.f32 %v4517, 1e-05
        %v4531 = vadd.f32 %v4520, 1e-05
        %v4532 = vadd.f32 %v4523, 1e-05
        %v4533 = vrsqrt.pop %v4525
        %v4534 = vmul.f32 %v4533, %v4525
        %v4535 = vmul.f32 %v4534, %v4533
        %v4536 = vmul.f32 0.5, %v4535
        %v4537 = vsub.f32 1.5, %v4536
        %v4538 = vmul.f32 %v4533, %v4537
        %vm4539 = vweird.f32 %v4525
        %vm4540 = vweird.f32 %v4533
        %vm4541 = vmor %vm4539, %vm4540
        %v4542 = vsel %vm4541, %v4533, %v4538
        %v4543 = vrsqrt.pop %v4526
        %v4544 = vmul.f32 %v4543, %v4526
        %v4545 = vmul.f32 %v4544, %v4543
        %v4546 = vmul.f32 0.5, %v4545
        %v4547 = vsub.f32 1.5, %v4546
        %v4548 = vmul.f32 %v4543, %v4547
        %vm4549 = vweird.f32 %v4526
        %vm4550 = vweird.f32 %v4543
        %vm4551 = vmor %vm4549, %vm4550
        %v4552 = vsel %vm4551, %v4543, %v4548
        %v4553 = vrsqrt.pop %v4527
        %v4554 = vmul.f32 %v4553, %v4527
        %v4555 = vmul.f32 %v4554, %v4553
        %v4556 = vmul.f32 0.5, %v4555
        %v4557 = vsub.f32 1.5, %v4556
        %v4558 = vmul.f32 %v4553, %v4557
        %vm4559 = vweird.f32 %v4527
        %vm4560 = vweird.f32 %v4553
        %vm4561 = vmor %vm4559, %vm4560
        %v4562 = vsel %vm4561, %v4553, %v4558
        %v4563 = vrsqrt.pop %v4528
        %v4564 = vmul.f32 %v4563, %v4528
        %v4565 = vmul.f32 %v4564, %v4563
        %v4566 = vmul.f32 0.5, %v4565
        %v4567 = vsub.f32 1.5, %v4566
        %v4568 = vmul.f32 %v4563, %v4567
        %vm4569 = vweird.f32 %v4528
        %vm4570 = vweird.f32 %v4563
        %vm4571 = vmor %vm4569, %vm4570
        %v4572 = vsel %vm4571, %v4563, %v4568
        %v4573 = vrsqrt.pop %v4529
        %v4574 = vmul.f32 %v4573, %v4529
        %v4575 = vmul.f32 %v4574, %v4573
        %v4576 = vmul.f32 0.5, %v4575
        %v4577 = vsub.f32 1.5, %v4576
        %v4578 = vmul.f32 %v4573, %v4577
        %vm4579 = vweird.f32 %v4529
        %vm4580 = vweird.f32 %v4573
        %vm4581 = vmor %vm4579, %vm4580
        %v4582 = vsel %vm4581, %v4573, %v4578
        %v4583 = vrsqrt.pop %v4530
        %v4584 = vmul.f32 %v4583, %v4530
        %v4585 = vmul.f32 %v4584, %v4583
        %v4586 = vmul.f32 0.5, %v4585
        %v4587 = vsub.f32 1.5, %v4586
        %v4588 = vmul.f32 %v4583, %v4587
        %vm4589 = vweird.f32 %v4530
        %vm4590 = vweird.f32 %v4583
        %vm4591 = vmor %vm4589, %vm4590
        %v4592 = vsel %vm4591, %v4583, %v4588
        %v4593 = vrsqrt.pop %v4531
        %v4594 = vmul.f32 %v4593, %v4531
        %v4595 = vmul.f32 %v4594, %v4593
        %v4596 = vmul.f32 0.5, %v4595
        %v4597 = vsub.f32 1.5, %v4596
        %v4598 = vmul.f32 %v4593, %v4597
        %vm4599 = vweird.f32 %v4531
        %vm4600 = vweird.f32 %v4593
        %vm4601 = vmor %vm4599, %vm4600
        %v4602 = vsel %vm4601, %v4593, %v4598
        %v4603 = vrsqrt.pop %v4532
        %v4604 = vmul.f32 %v4603, %v4532
        %v4605 = vmul.f32 %v4604, %v4603
        %v4606 = vmul.f32 0.5, %v4605
        %v4607 = vsub.f32 1.5, %v4606
        %v4608 = vmul.f32 %v4603, %v4607
        %vm4609 = vweird.f32 %v4532
        %vm4610 = vweird.f32 %v4603
        %vm4611 = vmor %vm4609, %vm4610
        %v4612 = vsel %vm4611, %v4603, %v4608
        %v4613 = vmul.f32 %v4403, %v4542
        %v4614 = vmul.f32 %v4404, %v4552
        %v4615 = vmul.f32 %v4405, %v4562
        %v4616 = vmul.f32 %v4406, %v4572
        %v4617 = vmul.f32 %v4407, %v4582
        %v4618 = vmul.f32 %v4408, %v4592
        %v4619 = vmul.f32 %v4409, %v4602
        %v4620 = vmul.f32 %v4410, %v4612
        %v4621 = vld [vmem:[%s320] sm:$0x1]
        %v4623 = vperm.slane %v4621, 0
        %v4625 = vmul.f32 %v4613, %v4623
        %v4626 = vmul.f32 %v4614, %v4623
        %v4627 = vmul.f32 %v4615, %v4623
        %v4628 = vmul.f32 %v4616, %v4623
        %v4629 = vmul.f32 %v4617, %v4623
        %v4630 = vmul.f32 %v4618, %v4623
        %v4631 = vmul.f32 %v4619, %v4623
        %v4632 = vmul.f32 %v4620, %v4623
        %v4633 = vld [vmem:[%s361] sm:$0x1]
        %v4635 = vperm.slane %v4633, 0
        %v4637 = vadd.f32 %v4625, %v4635
        %v4638 = vadd.f32 %v4626, %v4635
        %v4639 = vadd.f32 %v4627, %v4635
        %v4640 = vadd.f32 %v4628, %v4635
        %v4641 = vadd.f32 %v4629, %v4635
        %v4642 = vadd.f32 %v4630, %v4635
        %v4643 = vadd.f32 %v4631, %v4635
        %v4644 = vadd.f32 %v4632, %v4635
        %4645 = vst [vmem:[%s358] sm:$0xff] %v4637
        %4646 = vst [vmem:[%s358 + $0x8] sm:$0xff] %v4638
        %4647 = vst [vmem:[%s358 + $0x10] sm:$0xff] %v4639
        %4648 = vst [vmem:[%s358 + $0x18] sm:$0xff] %v4640
        %4649 = vst [vmem:[%s358 + $0x20] sm:$0xff] %v4641
        %4650 = vst [vmem:[%s358 + $0x28] sm:$0xff] %v4642
        %4651 = vst [vmem:[%s358 + $0x30] sm:$0xff] %v4643
        %4652 = vst [vmem:[%s358 + $0x38] sm:$0xff] %v4644
        %s4653 = sand.u32 %s211, 1
        %s4654 = scalar_lea.sflag [#allocation6], %s4653
        %s4655 = sand.u32 %s211, 1
        %s4656 = smul.addr %s4655, 64
        %s4657 = scalar_lea.vmem [#allocation9], %s4656
        // Predicated region
        $region61: #{tpu_custom_call.1} parent=47 // pred_check
          %p4658 = pneg %p221
        $region62: #{tpu_custom_call.1} parent=47 // pred_check_branch
          %4660 = sbr.rel (%p4658) target = $region64
        $region63: #{tpu_custom_call.1} parent=47 // pred_region
          %4662 = vsyncadd %s4654, 0
          %s4663 = smul.addr %s31, 16
          %s4664 = sadd.s32 %s32, %s4663
          %s4665 = smul.addr %s4664, 8
          %s4666 = scalar_lea.hbm %s7, %s4665
          %s4667 = sshll.u32 %s4657, 4
          %s4668 = int_to_ptr.vmem [resolvable:$true] %s4667
          %s4669 = sshll.u32 %s4666, 4
          %s4670 = int_to_ptr.hbm [resolvable:$true] %s4669
          %4675 = dma.vmem_to_hbm [thread:$0]  %s4668, 1024, %s4670, %s4654, 128, 256, 8
        $region64: #{tpu_custom_call.1} parent=47 // pred_fallthru
          _
      $region48: #{tpu_custom_call.1} parent=5 // pred_fallthru
        _
      %p4676 = scmp.le.s32.totalorder 2, %s22
      // Predicated region
      $region65: #{tpu_custom_call.1} parent=5 // pred_check
        %p4677 = pneg %p4676
      $region66: #{tpu_custom_call.1} parent=5 // pred_check_branch
        %4679 = sbr.rel (%p4677) target = $region68
      $region67: #{tpu_custom_call.1} parent=5 // pred_region
        %s4680 = ssub.s32 %s22, 2
        // Predicated region
        $region69: #{tpu_custom_call.1} parent=67 // pred_check
          %p4681 = pneg %p227
        $region70: #{tpu_custom_call.1} parent=67 // pred_check_branch
          %4683 = sbr.rel (%p4681) target = $region72
        $region71: #{tpu_custom_call.1} parent=67 // pred_region
          %s4684 = sand.u32 %s212, 1
          %s4685 = scalar_lea.sflag [#allocation6], %s4684
          %s4686 = sand.u32 %s212, 1
          %s4687 = smul.addr %s4686, 64
          %s4688 = scalar_lea.vmem [#allocation9], %s4687
          %4690 = dma.done %s4685, 1024
        $region72: #{tpu_custom_call.1} parent=67 // pred_fallthru
          _
      $region68: #{tpu_custom_call.1} parent=5 // pred_fallthru
        _
    $region6: #{tpu_custom_call.1} parent=1 // loop_footer
      %s26 = sadd.s32 1, %s22
    $region7: #{tpu_custom_call.1} parent=1 // loop_footer_branch
      %21 = sbr.rel target = $region3
    $region8: #{tpu_custom_call.1} parent=1 // loop_exit
      _
    %4691 = vsyncpa [#allocation5], 1
    %s4692 = scalar_lea.sflag [#allocation5], 1
    %4693 = vsyncpa %s4692, 1
    %4694 = vsyncpa [#allocation8], 1
    %s4695 = scalar_lea.sflag [#allocation8], 1
    %4696 = vsyncpa %s4695, 1
    %4697 = vsyncpa [#allocation6], 1
    %s4698 = scalar_lea.sflag [#allocation6], 1
    %4699 = vsyncpa %s4698, 1

</llo_original>
